<compile_context>
chip_gen: v7x
topology: tpu7x:2x2x1
jax: 0.10.0
libtpu: 0.0.40
codegen_flags: <defaults>
</compile_context>

<pallas_src>
import functools

import jax
import jax.numpy as jnp
from jax import lax
from jax.experimental import pallas as pl
from jax.experimental.pallas import tpu as pltpu


def _round_up(x, m):
    return (x + m - 1) // m * m


# --------------------------- fused forward kernel ----------------------------
def _hybrid_kernel(idx_ref, x_kmer_ref, w_kmer_ref, b_kmer_ref,
                   w_proj_ref, whh_ref,
                   w_c1k_ref, w_c1f_ref, w_c1b_ref, b_c1_ref,
                   w_c2_ref, b_c2_ref,
                   out_ref, *, batch, seq_len, hidden, vocab, rows_pad):
    B, T, H, V, RP = batch, seq_len, hidden, vocab, rows_pad

    # ---- kmer branch: relu(x @ Wk + bk) -------------------------------------
    kmer_out = jnp.dot(x_kmer_ref[...], w_kmer_ref[...],
                       preferred_element_type=jnp.float32) + b_kmer_ref[...]
    kmer_out = jnp.maximum(kmer_out, 0.0)                         # (B, 128)

    # ---- one-hot over 2V columns (fwd tokens in [0:V], bwd in [V:2V]) -------
    # dummy pad rows carry idx = -1 -> all-zero one-hot rows.
    iota_2v = lax.broadcasted_iota(jnp.int32, (T * RP, 2 * V), 1)
    onehot = (idx_ref[...] == iota_2v).astype(jnp.float32)        # (T*RP, 2V)

    # ---- hoisted input projection (embedding + LSTM biases folded in) -------
    # w_proj: (2V, 4H), gate order (i, f, o, g).
    gx = jnp.dot(onehot, w_proj_ref[...],
                 preferred_element_type=jnp.float32)              # (T*RP, 4H)

    # ---- loop-invariant row mask: rows [0:B] fwd, [B:2B] bwd ----------------
    row_ids = lax.broadcasted_iota(jnp.int32, (RP, 4 * H), 0)
    fwd_mask = row_ids < B                                        # (RP, 4H) bool

    # ---- recurrence: both directions packed along the sublane/batch dim -----
    h = jnp.zeros((RP, H), jnp.float32)
    c = jnp.zeros((RP, H), jnp.float32)
    for t in range(T):  # static unrolled; all slices static & (8,128)-aligned
        gh_full = jnp.dot(h, whh_ref[...],
                          preferred_element_type=jnp.float32)     # (RP, 8H)
        gh = jnp.where(fwd_mask, gh_full[:, :4 * H], gh_full[:, 4 * H:])
        gates = gx[t * RP:(t + 1) * RP, :] + gh                   # (RP, 4H)
        # gate order (i, f, o, g): one sigmoid on 3H lanes, one tanh on H lanes
        sig = jax.nn.sigmoid(gates[:, :3 * H])
        g_g = jnp.tanh(gates[:, 3 * H:])
        i_g = sig[:, 0 * H:1 * H]
        f_g = sig[:, 1 * H:2 * H]
        o_g = sig[:, 2 * H:3 * H]
        c = f_g * c + i_g * g_g
        h = o_g * jnp.tanh(c)

    hf = h[:B]           # forward final hidden  == h_n[0]
    hb = h[B:2 * B]      # backward final hidden == h_n[1]

    # ---- head: relu(kmer@W1k + hf@W1f + hb@W1b + b1) @ W2 + b2 --------------
    h1 = (jnp.dot(kmer_out, w_c1k_ref[...], preferred_element_type=jnp.float32)
          + jnp.dot(hf, w_c1f_ref[...], preferred_element_type=jnp.float32)
          + jnp.dot(hb, w_c1b_ref[...], preferred_element_type=jnp.float32)
          + b_c1_ref[...])
    h1 = jnp.maximum(h1, 0.0)                                     # (B, 128) lane-dense
    out = jnp.dot(h1, w_c2_ref[...],
                  preferred_element_type=jnp.float32) + b_c2_ref[...]
    out_ref[...] = out.astype(out_ref.dtype)                      # (B, n_pad)


# ------------------------------ python wrapper --------------------------------
def hybrid_lstm_forward(params, x_kmer, x_seq):
    B, T = x_seq.shape
    H = params["hidden"]
    V = params["vocab"]
    n_out = params["num_classes"]
    n_pad = params["w_c2_t"].shape[1]
    RP = _round_up(max(2 * B, 8), 8)   # padded rows per timestep (sublane tile)

    # Pure layout glue: direction-packed, row-padded token column.
    fwd = jnp.transpose(x_seq).astype(jnp.int32)                   # (T, B)
    bwd = jnp.transpose(x_seq[:, ::-1]).astype(jnp.int32) + V      # (T, B)
    blocks = [fwd, bwd]
    if RP > 2 * B:
        blocks.append(jnp.full((T, RP - 2 * B), -1, jnp.int32))
    idx = jnp.concatenate(blocks, axis=1).reshape(T * RP, 1)

    kernel = functools.partial(_hybrid_kernel, batch=B, seq_len=T,
                               hidden=H, vocab=V, rows_pad=RP)
    args = (idx, x_kmer, params["w_kmer_t"], params["b_kmer"],
            params["w_proj"], params["whh_cat"],
            params["w_c1k"], params["w_c1f"], params["w_c1b"], params["b_c1"],
            params["w_c2_t"], params["b_c2"])

    vmem = pl.BlockSpec(memory_space=pltpu.MemorySpace.VMEM)
    out = pl.pallas_call(
        kernel,
        out_shape=jax.ShapeDtypeStruct((B, n_pad), jnp.float32),
        in_specs=[vmem] * len(args),
        out_specs=vmem,
        compiler_params=pltpu.CompilerParams(vmem_limit_bytes=32 * 1024 * 1024),
    )(*args)
    return out[:, :n_out]


# --------------------------------- params -------------------------------------
def init_params(key, kmer_input_size, seq_vocab_size, seq_embed_size,
                seq_hidden_size, num_classes):
    ks = jax.random.split(key, 16)
    H = seq_hidden_size
    V = seq_vocab_size

    def unif(k, shape, bound):
        return jax.random.uniform(k, shape, jnp.float32, -bound, bound)

    # fc_kmer: Linear(kmer_input_size, 128)
    b1 = 1.0 / jnp.sqrt(kmer_input_size)
    w_kmer = unif(ks[0], (128, kmer_input_size), b1)   # torch layout (out, in)
    b_kmer = unif(ks[1], (128,), b1)

    # embedding (padding_idx=0 -> row 0 zero)
    emb = jax.random.normal(ks[2], (V, seq_embed_size), jnp.float32)
    emb = emb.at[0].set(0.0)

    # bidirectional LSTM params (PyTorch gate order i, f, g, o)
    bl = 1.0 / jnp.sqrt(H)
    wih_f = unif(ks[3], (4 * H, seq_embed_size), bl)
    wih_b = unif(ks[4], (4 * H, seq_embed_size), bl)
    whh_f = unif(ks[5], (4 * H, H), bl)
    whh_b = unif(ks[6], (4 * H, H), bl)
    b_ih_f = unif(ks[7], (4 * H,), bl)
    b_ih_b = unif(ks[8], (4 * H,), bl)
    b_hh_f = unif(ks[9], (4 * H,), bl)
    b_hh_b = unif(ks[10], (4 * H,), bl)

    # fc_combined: Linear(128 + 2H, 64) -> ReLU -> Linear(64, num_classes)
    in_c1 = 128 + 2 * H
    b2 = 1.0 / jnp.sqrt(in_c1)
    w_c1 = unif(ks[11], (64, in_c1), b2)
    b_c1 = unif(ks[12], (64,), b2)
    b3 = 1.0 / jnp.sqrt(64)
    w_c2 = unif(ks[13], (num_classes, 64), b3)
    b_c2 = unif(ks[14], (num_classes,), b3)

    # ---- pack for the kernel ------------------------------------------------
    def reorder(cols):  # columns (i, f, g, o) -> (i, f, o, g)
        return jnp.concatenate(
            [cols[..., :2 * H], cols[..., 3 * H:4 * H], cols[..., 2 * H:3 * H]],
            axis=-1)

    wih_f_t = reorder(jnp.transpose(wih_f))            # (E, 4H)
    wih_b_t = reorder(jnp.transpose(wih_b))
    whh_f_t = reorder(jnp.transpose(whh_f))            # (H, 4H)
    whh_b_t = reorder(jnp.transpose(whh_b))
    bias_f = reorder((b_ih_f + b_hh_f).reshape(1, 4 * H))
    bias_b = reorder((b_ih_b + b_hh_b).reshape(1, 4 * H))

    # Embedding + per-direction biases folded into the input projection.
    # Row v (< V): forward gates for token v; row V+v: backward gates.
    w_proj = jnp.concatenate([emb @ wih_f_t + bias_f,
                              emb @ wih_b_t + bias_b], axis=0)     # (2V, 4H)

    # Merged recurrent projection: one K=128 dot per step for both directions.
    whh_cat = jnp.concatenate([whh_f_t, whh_b_t], axis=1)          # (H, 8H)

    # Head: pad hidden layer to 128 lanes; split w_c1 into kmer/fwd/bwd chunks.
    w_c1_t = jnp.transpose(w_c1)                                   # (in_c1, 64)
    w_c1_p = jnp.zeros((in_c1, 128), jnp.float32).at[:, :64].set(w_c1_t)
    b_c1_p = jnp.zeros((1, 128), jnp.float32).at[:, :64].set(b_c1.reshape(1, -1))

    n_pad = _round_up(max(num_classes, 128), 128)                  # lane-dense out
    w_c2_p = jnp.zeros((128, n_pad), jnp.float32).at[:64, :num_classes].set(
        jnp.transpose(w_c2))
    b_c2_p = jnp.zeros((1, n_pad), jnp.float32).at[:, :num_classes].set(
        b_c2.reshape(1, -1))

    return dict(
        num_classes=num_classes, hidden=H, vocab=V,
        w_kmer_t=jnp.transpose(w_kmer), b_kmer=b_kmer.reshape(1, -1),
        w_proj=w_proj, whh_cat=whh_cat,
        w_c1k=w_c1_p[:128], w_c1f=w_c1_p[128:128 + H],
        w_c1b=w_c1_p[128 + H:128 + 2 * H], b_c1=b_c1_p,
        w_c2_t=w_c2_p, b_c2=b_c2_p,
    )


if __name__ == "__main__":
    B = 2
    kmer_input_size = 16
    seq_len = 8
    seq_vocab_size = 5       # {A, C, G, T} + padding
    seq_embed_size = 64
    seq_hidden_size = 128
    num_classes = 4

    key = jax.random.PRNGKey(0)
    k_params, k_kmer, k_seq = jax.random.split(key, 3)

    params = init_params(k_params, kmer_input_size, seq_vocab_size,
                         seq_embed_size, seq_hidden_size, num_classes)

    x_kmer = jax.random.normal(k_kmer, (B, kmer_input_size), jnp.float32)
    x_seq = jax.random.randint(k_seq, (B, seq_len), 0, seq_vocab_size, jnp.int32)

    out = hybrid_lstm_forward(params, x_kmer, x_seq)
    out = jax.block_until_ready(out)
    assert out.shape == (B, num_classes)
    print("KERNEL_OK")
</pallas_src>

<mosaic_0001>
module attributes {stable_mosaic.version = 11 : i64} {
  func.func @_hybrid_kernel(%arg0: memref<64x1xi32, #tpu.memory_space<vmem>>, %arg1: memref<2x16xf32, #tpu.memory_space<vmem>>, %arg2: memref<16x128xf32, #tpu.memory_space<vmem>>, %arg3: memref<1x128xf32, #tpu.memory_space<vmem>>, %arg4: memref<10x512xf32, #tpu.memory_space<vmem>>, %arg5: memref<128x1024xf32, #tpu.memory_space<vmem>>, %arg6: memref<128x128xf32, #tpu.memory_space<vmem>>, %arg7: memref<128x128xf32, #tpu.memory_space<vmem>>, %arg8: memref<128x128xf32, #tpu.memory_space<vmem>>, %arg9: memref<1x128xf32, #tpu.memory_space<vmem>>, %arg10: memref<128x128xf32, #tpu.memory_space<vmem>>, %arg11: memref<1x128xf32, #tpu.memory_space<vmem>>, %arg12: memref<2x128xf32, #tpu.memory_space<vmem>>) attributes {dimension_semantics = [], scalar_prefetch = 0 : i64, scratch_operands = 0 : i64, tpu.core_type = #tpu.core_type<tc>} {
    %c0 = arith.constant 0 : index
    %c0_0 = arith.constant 0 : index
    %0 = vector.load %arg1[%c0, %c0_0] : memref<2x16xf32, #tpu.memory_space<vmem>>, vector<2x16xf32>
    %c0_1 = arith.constant 0 : index
    %c0_2 = arith.constant 0 : index
    %1 = vector.load %arg2[%c0_1, %c0_2] : memref<16x128xf32, #tpu.memory_space<vmem>>, vector<16x128xf32>
    %cst = arith.constant dense<0.000000e+00> : vector<2x128xf32>
    %2 = tpu.matmul %0, %1, %cst {dimension_numbers = #tpu.dot_dimension_numbers<[1], [0], [0], [1], [0, 0, 1, 1], [], []>} : vector<2x16xf32>, vector<16x128xf32>, vector<2x128xf32> -> vector<2x128xf32>
    %c0_3 = arith.constant 0 : index
    %c0_4 = arith.constant 0 : index
    %3 = vector.load %arg3[%c0_3, %c0_4] : memref<1x128xf32, #tpu.memory_space<vmem>>, vector<1x128xf32>
    %4 = vector.broadcast %3 : vector<1x128xf32> to vector<2x128xf32>
    %5 = arith.addf %2, %4 : vector<2x128xf32>
    %cst_5 = arith.constant 0.000000e+00 : f32
    %6 = vector.broadcast %cst_5 : f32 to vector<2x128xf32>
    %7 = arith.maximumf %5, %6 : vector<2x128xf32>
    %8 = tpu.iota {dimensions = array<i32: 1>} : vector<64x10xi32>
    %c0_6 = arith.constant 0 : index
    %c0_7 = arith.constant 0 : index
    %9 = vector.load %arg0[%c0_6, %c0_7] : memref<64x1xi32, #tpu.memory_space<vmem>>, vector<64x1xi32>
    %10 = vector.broadcast %9 : vector<64x1xi32> to vector<64x10xi32>
    %11 = arith.cmpi eq, %10, %8 : vector<64x10xi32>
    %12 = arith.extui %11 : vector<64x10xi1> to vector<64x10xi32>
    %13 = arith.sitofp %12 : vector<64x10xi32> to vector<64x10xf32>
    %c0_8 = arith.constant 0 : index
    %c0_9 = arith.constant 0 : index
    %14 = vector.load %arg4[%c0_8, %c0_9] : memref<10x512xf32, #tpu.memory_space<vmem>>, vector<10x512xf32>
    %cst_10 = arith.constant dense<0.000000e+00> : vector<64x512xf32>
    %15 = tpu.matmul %13, %14, %cst_10 {dimension_numbers = #tpu.dot_dimension_numbers<[1], [0], [0], [1], [0, 0, 1, 1], [], []>} : vector<64x10xf32>, vector<10x512xf32>, vector<64x512xf32> -> vector<64x512xf32>
    %16 = tpu.iota {dimensions = array<i32: 0>} : vector<8x512xi32>
    %c2_i32 = arith.constant 2 : i32
    %17 = vector.broadcast %c2_i32 : i32 to vector<8x512xi32>
    %18 = arith.cmpi slt, %16, %17 : vector<8x512xi32>
    %cst_11 = arith.constant 0.000000e+00 : f32
    %19 = vector.broadcast %cst_11 : f32 to vector<8x128xf32>
    %cst_12 = arith.constant 0.000000e+00 : f32
    %20 = vector.broadcast %cst_12 : f32 to vector<8x128xf32>
    %c0_13 = arith.constant 0 : index
    %c0_14 = arith.constant 0 : index
    %21 = vector.load %arg5[%c0_13, %c0_14] : memref<128x1024xf32, #tpu.memory_space<vmem>>, vector<128x1024xf32>
    %cst_15 = arith.constant dense<0.000000e+00> : vector<8x1024xf32>
    %22 = tpu.matmul %19, %21, %cst_15 {dimension_numbers = #tpu.dot_dimension_numbers<[1], [0], [0], [1], [0, 0, 1, 1], [], []>} : vector<8x128xf32>, vector<128x1024xf32>, vector<8x1024xf32> -> vector<8x1024xf32>
    %23 = vector.extract_strided_slice %22 {offsets = [0, 0], sizes = [8, 512], strides = [1, 1]} : vector<8x1024xf32> to vector<8x512xf32>
    %24 = vector.extract_strided_slice %22 {offsets = [0, 512], sizes = [8, 512], strides = [1, 1]} : vector<8x1024xf32> to vector<8x512xf32>
    %25 = arith.select %18, %23, %24 : vector<8x512xi1>, vector<8x512xf32>
    %26 = vector.extract_strided_slice %15 {offsets = [0, 0], sizes = [8, 512], strides = [1, 1]} : vector<64x512xf32> to vector<8x512xf32>
    %27 = arith.addf %26, %25 : vector<8x512xf32>
    %28 = vector.extract_strided_slice %27 {offsets = [0, 0], sizes = [8, 384], strides = [1, 1]} : vector<8x512xf32> to vector<8x384xf32>
    %29 = arith.negf %28 : vector<8x384xf32>
    %30 = math.exp %29 : vector<8x384xf32>
    %cst_16 = arith.constant 1.000000e+00 : f32
    %31 = vector.broadcast %cst_16 : f32 to vector<8x384xf32>
    %32 = arith.addf %31, %30 : vector<8x384xf32>
    %33 = arith.divf %31, %32 : vector<8x384xf32>
    %34 = vector.extract_strided_slice %27 {offsets = [0, 384], sizes = [8, 128], strides = [1, 1]} : vector<8x512xf32> to vector<8x128xf32>
    %35 = math.tanh %34 : vector<8x128xf32>
    %36 = vector.extract_strided_slice %33 {offsets = [0, 0], sizes = [8, 128], strides = [1, 1]} : vector<8x384xf32> to vector<8x128xf32>
    %37 = vector.extract_strided_slice %33 {offsets = [0, 128], sizes = [8, 128], strides = [1, 1]} : vector<8x384xf32> to vector<8x128xf32>
    %38 = vector.extract_strided_slice %33 {offsets = [0, 256], sizes = [8, 128], strides = [1, 1]} : vector<8x384xf32> to vector<8x128xf32>
    %39 = arith.mulf %37, %20 : vector<8x128xf32>
    %40 = arith.mulf %36, %35 : vector<8x128xf32>
    %41 = arith.addf %39, %40 : vector<8x128xf32>
    %42 = math.tanh %41 : vector<8x128xf32>
    %43 = arith.mulf %38, %42 : vector<8x128xf32>
    %c0_17 = arith.constant 0 : index
    %c0_18 = arith.constant 0 : index
    %44 = vector.load %arg5[%c0_17, %c0_18] : memref<128x1024xf32, #tpu.memory_space<vmem>>, vector<128x1024xf32>
    %cst_19 = arith.constant dense<0.000000e+00> : vector<8x1024xf32>
    %45 = tpu.matmul %43, %44, %cst_19 {dimension_numbers = #tpu.dot_dimension_numbers<[1], [0], [0], [1], [0, 0, 1, 1], [], []>} : vector<8x128xf32>, vector<128x1024xf32>, vector<8x1024xf32> -> vector<8x1024xf32>
    %46 = vector.extract_strided_slice %45 {offsets = [0, 0], sizes = [8, 512], strides = [1, 1]} : vector<8x1024xf32> to vector<8x512xf32>
    %47 = vector.extract_strided_slice %45 {offsets = [0, 512], sizes = [8, 512], strides = [1, 1]} : vector<8x1024xf32> to vector<8x512xf32>
    %48 = arith.select %18, %46, %47 : vector<8x512xi1>, vector<8x512xf32>
    %49 = vector.extract_strided_slice %15 {offsets = [8, 0], sizes = [8, 512], strides = [1, 1]} : vector<64x512xf32> to vector<8x512xf32>
    %50 = arith.addf %49, %48 : vector<8x512xf32>
    %51 = vector.extract_strided_slice %50 {offsets = [0, 0], sizes = [8, 384], strides = [1, 1]} : vector<8x512xf32> to vector<8x384xf32>
    %52 = arith.negf %51 : vector<8x384xf32>
    %53 = math.exp %52 : vector<8x384xf32>
    %cst_20 = arith.constant 1.000000e+00 : f32
    %54 = vector.broadcast %cst_20 : f32 to vector<8x384xf32>
    %55 = arith.addf %54, %53 : vector<8x384xf32>
    %56 = arith.divf %54, %55 : vector<8x384xf32>
    %57 = vector.extract_strided_slice %50 {offsets = [0, 384], sizes = [8, 128], strides = [1, 1]} : vector<8x512xf32> to vector<8x128xf32>
    %58 = math.tanh %57 : vector<8x128xf32>
    %59 = vector.extract_strided_slice %56 {offsets = [0, 0], sizes = [8, 128], strides = [1, 1]} : vector<8x384xf32> to vector<8x128xf32>
    %60 = vector.extract_strided_slice %56 {offsets = [0, 128], sizes = [8, 128], strides = [1, 1]} : vector<8x384xf32> to vector<8x128xf32>
    %61 = vector.extract_strided_slice %56 {offsets = [0, 256], sizes = [8, 128], strides = [1, 1]} : vector<8x384xf32> to vector<8x128xf32>
    %62 = arith.mulf %60, %41 : vector<8x128xf32>
    %63 = arith.mulf %59, %58 : vector<8x128xf32>
    %64 = arith.addf %62, %63 : vector<8x128xf32>
    %65 = math.tanh %64 : vector<8x128xf32>
    %66 = arith.mulf %61, %65 : vector<8x128xf32>
    %c0_21 = arith.constant 0 : index
    %c0_22 = arith.constant 0 : index
    %67 = vector.load %arg5[%c0_21, %c0_22] : memref<128x1024xf32, #tpu.memory_space<vmem>>, vector<128x1024xf32>
    %cst_23 = arith.constant dense<0.000000e+00> : vector<8x1024xf32>
    %68 = tpu.matmul %66, %67, %cst_23 {dimension_numbers = #tpu.dot_dimension_numbers<[1], [0], [0], [1], [0, 0, 1, 1], [], []>} : vector<8x128xf32>, vector<128x1024xf32>, vector<8x1024xf32> -> vector<8x1024xf32>
    %69 = vector.extract_strided_slice %68 {offsets = [0, 0], sizes = [8, 512], strides = [1, 1]} : vector<8x1024xf32> to vector<8x512xf32>
    %70 = vector.extract_strided_slice %68 {offsets = [0, 512], sizes = [8, 512], strides = [1, 1]} : vector<8x1024xf32> to vector<8x512xf32>
    %71 = arith.select %18, %69, %70 : vector<8x512xi1>, vector<8x512xf32>
    %72 = vector.extract_strided_slice %15 {offsets = [16, 0], sizes = [8, 512], strides = [1, 1]} : vector<64x512xf32> to vector<8x512xf32>
    %73 = arith.addf %72, %71 : vector<8x512xf32>
    %74 = vector.extract_strided_slice %73 {offsets = [0, 0], sizes = [8, 384], strides = [1, 1]} : vector<8x512xf32> to vector<8x384xf32>
    %75 = arith.negf %74 : vector<8x384xf32>
    %76 = math.exp %75 : vector<8x384xf32>
    %cst_24 = arith.constant 1.000000e+00 : f32
    %77 = vector.broadcast %cst_24 : f32 to vector<8x384xf32>
    %78 = arith.addf %77, %76 : vector<8x384xf32>
    %79 = arith.divf %77, %78 : vector<8x384xf32>
    %80 = vector.extract_strided_slice %73 {offsets = [0, 384], sizes = [8, 128], strides = [1, 1]} : vector<8x512xf32> to vector<8x128xf32>
    %81 = math.tanh %80 : vector<8x128xf32>
    %82 = vector.extract_strided_slice %79 {offsets = [0, 0], sizes = [8, 128], strides = [1, 1]} : vector<8x384xf32> to vector<8x128xf32>
    %83 = vector.extract_strided_slice %79 {offsets = [0, 128], sizes = [8, 128], strides = [1, 1]} : vector<8x384xf32> to vector<8x128xf32>
    %84 = vector.extract_strided_slice %79 {offsets = [0, 256], sizes = [8, 128], strides = [1, 1]} : vector<8x384xf32> to vector<8x128xf32>
    %85 = arith.mulf %83, %64 : vector<8x128xf32>
    %86 = arith.mulf %82, %81 : vector<8x128xf32>
    %87 = arith.addf %85, %86 : vector<8x128xf32>
    %88 = math.tanh %87 : vector<8x128xf32>
    %89 = arith.mulf %84, %88 : vector<8x128xf32>
    %c0_25 = arith.constant 0 : index
    %c0_26 = arith.constant 0 : index
    %90 = vector.load %arg5[%c0_25, %c0_26] : memref<128x1024xf32, #tpu.memory_space<vmem>>, vector<128x1024xf32>
    %cst_27 = arith.constant dense<0.000000e+00> : vector<8x1024xf32>
    %91 = tpu.matmul %89, %90, %cst_27 {dimension_numbers = #tpu.dot_dimension_numbers<[1], [0], [0], [1], [0, 0, 1, 1], [], []>} : vector<8x128xf32>, vector<128x1024xf32>, vector<8x1024xf32> -> vector<8x1024xf32>
    %92 = vector.extract_strided_slice %91 {offsets = [0, 0], sizes = [8, 512], strides = [1, 1]} : vector<8x1024xf32> to vector<8x512xf32>
    %93 = vector.extract_strided_slice %91 {offsets = [0, 512], sizes = [8, 512], strides = [1, 1]} : vector<8x1024xf32> to vector<8x512xf32>
    %94 = arith.select %18, %92, %93 : vector<8x512xi1>, vector<8x512xf32>
    %95 = vector.extract_strided_slice %15 {offsets = [24, 0], sizes = [8, 512], strides = [1, 1]} : vector<64x512xf32> to vector<8x512xf32>
    %96 = arith.addf %95, %94 : vector<8x512xf32>
    %97 = vector.extract_strided_slice %96 {offsets = [0, 0], sizes = [8, 384], strides = [1, 1]} : vector<8x512xf32> to vector<8x384xf32>
    %98 = arith.negf %97 : vector<8x384xf32>
    %99 = math.exp %98 : vector<8x384xf32>
    %cst_28 = arith.constant 1.000000e+00 : f32
    %100 = vector.broadcast %cst_28 : f32 to vector<8x384xf32>
    %101 = arith.addf %100, %99 : vector<8x384xf32>
    %102 = arith.divf %100, %101 : vector<8x384xf32>
    %103 = vector.extract_strided_slice %96 {offsets = [0, 384], sizes = [8, 128], strides = [1, 1]} : vector<8x512xf32> to vector<8x128xf32>
    %104 = math.tanh %103 : vector<8x128xf32>
    %105 = vector.extract_strided_slice %102 {offsets = [0, 0], sizes = [8, 128], strides = [1, 1]} : vector<8x384xf32> to vector<8x128xf32>
    %106 = vector.extract_strided_slice %102 {offsets = [0, 128], sizes = [8, 128], strides = [1, 1]} : vector<8x384xf32> to vector<8x128xf32>
    %107 = vector.extract_strided_slice %102 {offsets = [0, 256], sizes = [8, 128], strides = [1, 1]} : vector<8x384xf32> to vector<8x128xf32>
    %108 = arith.mulf %106, %87 : vector<8x128xf32>
    %109 = arith.mulf %105, %104 : vector<8x128xf32>
    %110 = arith.addf %108, %109 : vector<8x128xf32>
    %111 = math.tanh %110 : vector<8x128xf32>
    %112 = arith.mulf %107, %111 : vector<8x128xf32>
    %c0_29 = arith.constant 0 : index
    %c0_30 = arith.constant 0 : index
    %113 = vector.load %arg5[%c0_29, %c0_30] : memref<128x1024xf32, #tpu.memory_space<vmem>>, vector<128x1024xf32>
    %cst_31 = arith.constant dense<0.000000e+00> : vector<8x1024xf32>
    %114 = tpu.matmul %112, %113, %cst_31 {dimension_numbers = #tpu.dot_dimension_numbers<[1], [0], [0], [1], [0, 0, 1, 1], [], []>} : vector<8x128xf32>, vector<128x1024xf32>, vector<8x1024xf32> -> vector<8x1024xf32>
    %115 = vector.extract_strided_slice %114 {offsets = [0, 0], sizes = [8, 512], strides = [1, 1]} : vector<8x1024xf32> to vector<8x512xf32>
    %116 = vector.extract_strided_slice %114 {offsets = [0, 512], sizes = [8, 512], strides = [1, 1]} : vector<8x1024xf32> to vector<8x512xf32>
    %117 = arith.select %18, %115, %116 : vector<8x512xi1>, vector<8x512xf32>
    %118 = vector.extract_strided_slice %15 {offsets = [32, 0], sizes = [8, 512], strides = [1, 1]} : vector<64x512xf32> to vector<8x512xf32>
    %119 = arith.addf %118, %117 : vector<8x512xf32>
    %120 = vector.extract_strided_slice %119 {offsets = [0, 0], sizes = [8, 384], strides = [1, 1]} : vector<8x512xf32> to vector<8x384xf32>
    %121 = arith.negf %120 : vector<8x384xf32>
    %122 = math.exp %121 : vector<8x384xf32>
    %cst_32 = arith.constant 1.000000e+00 : f32
    %123 = vector.broadcast %cst_32 : f32 to vector<8x384xf32>
    %124 = arith.addf %123, %122 : vector<8x384xf32>
    %125 = arith.divf %123, %124 : vector<8x384xf32>
    %126 = vector.extract_strided_slice %119 {offsets = [0, 384], sizes = [8, 128], strides = [1, 1]} : vector<8x512xf32> to vector<8x128xf32>
    %127 = math.tanh %126 : vector<8x128xf32>
    %128 = vector.extract_strided_slice %125 {offsets = [0, 0], sizes = [8, 128], strides = [1, 1]} : vector<8x384xf32> to vector<8x128xf32>
    %129 = vector.extract_strided_slice %125 {offsets = [0, 128], sizes = [8, 128], strides = [1, 1]} : vector<8x384xf32> to vector<8x128xf32>
    %130 = vector.extract_strided_slice %125 {offsets = [0, 256], sizes = [8, 128], strides = [1, 1]} : vector<8x384xf32> to vector<8x128xf32>
    %131 = arith.mulf %129, %110 : vector<8x128xf32>
    %132 = arith.mulf %128, %127 : vector<8x128xf32>
    %133 = arith.addf %131, %132 : vector<8x128xf32>
    %134 = math.tanh %133 : vector<8x128xf32>
    %135 = arith.mulf %130, %134 : vector<8x128xf32>
    %c0_33 = arith.constant 0 : index
    %c0_34 = arith.constant 0 : index
    %136 = vector.load %arg5[%c0_33, %c0_34] : memref<128x1024xf32, #tpu.memory_space<vmem>>, vector<128x1024xf32>
    %cst_35 = arith.constant dense<0.000000e+00> : vector<8x1024xf32>
    %137 = tpu.matmul %135, %136, %cst_35 {dimension_numbers = #tpu.dot_dimension_numbers<[1], [0], [0], [1], [0, 0, 1, 1], [], []>} : vector<8x128xf32>, vector<128x1024xf32>, vector<8x1024xf32> -> vector<8x1024xf32>
    %138 = vector.extract_strided_slice %137 {offsets = [0, 0], sizes = [8, 512], strides = [1, 1]} : vector<8x1024xf32> to vector<8x512xf32>
    %139 = vector.extract_strided_slice %137 {offsets = [0, 512], sizes = [8, 512], strides = [1, 1]} : vector<8x1024xf32> to vector<8x512xf32>
    %140 = arith.select %18, %138, %139 : vector<8x512xi1>, vector<8x512xf32>
    %141 = vector.extract_strided_slice %15 {offsets = [40, 0], sizes = [8, 512], strides = [1, 1]} : vector<64x512xf32> to vector<8x512xf32>
    %142 = arith.addf %141, %140 : vector<8x512xf32>
    %143 = vector.extract_strided_slice %142 {offsets = [0, 0], sizes = [8, 384], strides = [1, 1]} : vector<8x512xf32> to vector<8x384xf32>
    %144 = arith.negf %143 : vector<8x384xf32>
    %145 = math.exp %144 : vector<8x384xf32>
    %cst_36 = arith.constant 1.000000e+00 : f32
    %146 = vector.broadcast %cst_36 : f32 to vector<8x384xf32>
    %147 = arith.addf %146, %145 : vector<8x384xf32>
    %148 = arith.divf %146, %147 : vector<8x384xf32>
    %149 = vector.extract_strided_slice %142 {offsets = [0, 384], sizes = [8, 128], strides = [1, 1]} : vector<8x512xf32> to vector<8x128xf32>
    %150 = math.tanh %149 : vector<8x128xf32>
    %151 = vector.extract_strided_slice %148 {offsets = [0, 0], sizes = [8, 128], strides = [1, 1]} : vector<8x384xf32> to vector<8x128xf32>
    %152 = vector.extract_strided_slice %148 {offsets = [0, 128], sizes = [8, 128], strides = [1, 1]} : vector<8x384xf32> to vector<8x128xf32>
    %153 = vector.extract_strided_slice %148 {offsets = [0, 256], sizes = [8, 128], strides = [1, 1]} : vector<8x384xf32> to vector<8x128xf32>
    %154 = arith.mulf %152, %133 : vector<8x128xf32>
    %155 = arith.mulf %151, %150 : vector<8x128xf32>
    %156 = arith.addf %154, %155 : vector<8x128xf32>
    %157 = math.tanh %156 : vector<8x128xf32>
    %158 = arith.mulf %153, %157 : vector<8x128xf32>
    %c0_37 = arith.constant 0 : index
    %c0_38 = arith.constant 0 : index
    %159 = vector.load %arg5[%c0_37, %c0_38] : memref<128x1024xf32, #tpu.memory_space<vmem>>, vector<128x1024xf32>
    %cst_39 = arith.constant dense<0.000000e+00> : vector<8x1024xf32>
    %160 = tpu.matmul %158, %159, %cst_39 {dimension_numbers = #tpu.dot_dimension_numbers<[1], [0], [0], [1], [0, 0, 1, 1], [], []>} : vector<8x128xf32>, vector<128x1024xf32>, vector<8x1024xf32> -> vector<8x1024xf32>
    %161 = vector.extract_strided_slice %160 {offsets = [0, 0], sizes = [8, 512], strides = [1, 1]} : vector<8x1024xf32> to vector<8x512xf32>
    %162 = vector.extract_strided_slice %160 {offsets = [0, 512], sizes = [8, 512], strides = [1, 1]} : vector<8x1024xf32> to vector<8x512xf32>
    %163 = arith.select %18, %161, %162 : vector<8x512xi1>, vector<8x512xf32>
    %164 = vector.extract_strided_slice %15 {offsets = [48, 0], sizes = [8, 512], strides = [1, 1]} : vector<64x512xf32> to vector<8x512xf32>
    %165 = arith.addf %164, %163 : vector<8x512xf32>
    %166 = vector.extract_strided_slice %165 {offsets = [0, 0], sizes = [8, 384], strides = [1, 1]} : vector<8x512xf32> to vector<8x384xf32>
    %167 = arith.negf %166 : vector<8x384xf32>
    %168 = math.exp %167 : vector<8x384xf32>
    %cst_40 = arith.constant 1.000000e+00 : f32
    %169 = vector.broadcast %cst_40 : f32 to vector<8x384xf32>
    %170 = arith.addf %169, %168 : vector<8x384xf32>
    %171 = arith.divf %169, %170 : vector<8x384xf32>
    %172 = vector.extract_strided_slice %165 {offsets = [0, 384], sizes = [8, 128], strides = [1, 1]} : vector<8x512xf32> to vector<8x128xf32>
    %173 = math.tanh %172 : vector<8x128xf32>
    %174 = vector.extract_strided_slice %171 {offsets = [0, 0], sizes = [8, 128], strides = [1, 1]} : vector<8x384xf32> to vector<8x128xf32>
    %175 = vector.extract_strided_slice %171 {offsets = [0, 128], sizes = [8, 128], strides = [1, 1]} : vector<8x384xf32> to vector<8x128xf32>
    %176 = vector.extract_strided_slice %171 {offsets = [0, 256], sizes = [8, 128], strides = [1, 1]} : vector<8x384xf32> to vector<8x128xf32>
    %177 = arith.mulf %175, %156 : vector<8x128xf32>
    %178 = arith.mulf %174, %173 : vector<8x128xf32>
    %179 = arith.addf %177, %178 : vector<8x128xf32>
    %180 = math.tanh %179 : vector<8x128xf32>
    %181 = arith.mulf %176, %180 : vector<8x128xf32>
    %c0_41 = arith.constant 0 : index
    %c0_42 = arith.constant 0 : index
    %182 = vector.load %arg5[%c0_41, %c0_42] : memref<128x1024xf32, #tpu.memory_space<vmem>>, vector<128x1024xf32>
    %cst_43 = arith.constant dense<0.000000e+00> : vector<8x1024xf32>
    %183 = tpu.matmul %181, %182, %cst_43 {dimension_numbers = #tpu.dot_dimension_numbers<[1], [0], [0], [1], [0, 0, 1, 1], [], []>} : vector<8x128xf32>, vector<128x1024xf32>, vector<8x1024xf32> -> vector<8x1024xf32>
    %184 = vector.extract_strided_slice %183 {offsets = [0, 0], sizes = [8, 512], strides = [1, 1]} : vector<8x1024xf32> to vector<8x512xf32>
    %185 = vector.extract_strided_slice %183 {offsets = [0, 512], sizes = [8, 512], strides = [1, 1]} : vector<8x1024xf32> to vector<8x512xf32>
    %186 = arith.select %18, %184, %185 : vector<8x512xi1>, vector<8x512xf32>
    %187 = vector.extract_strided_slice %15 {offsets = [56, 0], sizes = [8, 512], strides = [1, 1]} : vector<64x512xf32> to vector<8x512xf32>
    %188 = arith.addf %187, %186 : vector<8x512xf32>
    %189 = vector.extract_strided_slice %188 {offsets = [0, 0], sizes = [8, 384], strides = [1, 1]} : vector<8x512xf32> to vector<8x384xf32>
    %190 = arith.negf %189 : vector<8x384xf32>
    %191 = math.exp %190 : vector<8x384xf32>
    %cst_44 = arith.constant 1.000000e+00 : f32
    %192 = vector.broadcast %cst_44 : f32 to vector<8x384xf32>
    %193 = arith.addf %192, %191 : vector<8x384xf32>
    %194 = arith.divf %192, %193 : vector<8x384xf32>
    %195 = vector.extract_strided_slice %188 {offsets = [0, 384], sizes = [8, 128], strides = [1, 1]} : vector<8x512xf32> to vector<8x128xf32>
    %196 = math.tanh %195 : vector<8x128xf32>
    %197 = vector.extract_strided_slice %194 {offsets = [0, 0], sizes = [8, 128], strides = [1, 1]} : vector<8x384xf32> to vector<8x128xf32>
    %198 = vector.extract_strided_slice %194 {offsets = [0, 128], sizes = [8, 128], strides = [1, 1]} : vector<8x384xf32> to vector<8x128xf32>
    %199 = vector.extract_strided_slice %194 {offsets = [0, 256], sizes = [8, 128], strides = [1, 1]} : vector<8x384xf32> to vector<8x128xf32>
    %200 = arith.mulf %198, %179 : vector<8x128xf32>
    %201 = arith.mulf %197, %196 : vector<8x128xf32>
    %202 = arith.addf %200, %201 : vector<8x128xf32>
    %203 = math.tanh %202 : vector<8x128xf32>
    %204 = arith.mulf %199, %203 : vector<8x128xf32>
    %205 = vector.extract_strided_slice %204 {offsets = [0, 0], sizes = [2, 128], strides = [1, 1]} : vector<8x128xf32> to vector<2x128xf32>
    %206 = vector.extract_strided_slice %204 {offsets = [2, 0], sizes = [2, 128], strides = [1, 1]} : vector<8x128xf32> to vector<2x128xf32>
    %c0_45 = arith.constant 0 : index
    %c0_46 = arith.constant 0 : index
    %207 = vector.load %arg6[%c0_45, %c0_46] : memref<128x128xf32, #tpu.memory_space<vmem>>, vector<128x128xf32>
    %cst_47 = arith.constant dense<0.000000e+00> : vector<2x128xf32>
    %208 = tpu.matmul %7, %207, %cst_47 {dimension_numbers = #tpu.dot_dimension_numbers<[1], [0], [0], [1], [0, 0, 1, 1], [], []>} : vector<2x128xf32>, vector<128x128xf32>, vector<2x128xf32> -> vector<2x128xf32>
    %c0_48 = arith.constant 0 : index
    %c0_49 = arith.constant 0 : index
    %209 = vector.load %arg7[%c0_48, %c0_49] : memref<128x128xf32, #tpu.memory_space<vmem>>, vector<128x128xf32>
    %cst_50 = arith.constant dense<0.000000e+00> : vector<2x128xf32>
    %210 = tpu.matmul %205, %209, %cst_50 {dimension_numbers = #tpu.dot_dimension_numbers<[1], [0], [0], [1], [0, 0, 1, 1], [], []>} : vector<2x128xf32>, vector<128x128xf32>, vector<2x128xf32> -> vector<2x128xf32>
    %211 = arith.addf %208, %210 : vector<2x128xf32>
    %c0_51 = arith.constant 0 : index
    %c0_52 = arith.constant 0 : index
    %212 = vector.load %arg8[%c0_51, %c0_52] : memref<128x128xf32, #tpu.memory_space<vmem>>, vector<128x128xf32>
    %cst_53 = arith.constant dense<0.000000e+00> : vector<2x128xf32>
    %213 = tpu.matmul %206, %212, %cst_53 {dimension_numbers = #tpu.dot_dimension_numbers<[1], [0], [0], [1], [0, 0, 1, 1], [], []>} : vector<2x128xf32>, vector<128x128xf32>, vector<2x128xf32> -> vector<2x128xf32>
    %214 = arith.addf %211, %213 : vector<2x128xf32>
    %c0_54 = arith.constant 0 : index
    %c0_55 = arith.constant 0 : index
    %215 = vector.load %arg9[%c0_54, %c0_55] : memref<1x128xf32, #tpu.memory_space<vmem>>, vector<1x128xf32>
    %216 = vector.broadcast %215 : vector<1x128xf32> to vector<2x128xf32>
    %217 = arith.addf %214, %216 : vector<2x128xf32>
    %cst_56 = arith.constant 0.000000e+00 : f32
    %218 = vector.broadcast %cst_56 : f32 to vector<2x128xf32>
    %219 = arith.maximumf %217, %218 : vector<2x128xf32>
    %c0_57 = arith.constant 0 : index
    %c0_58 = arith.constant 0 : index
    %220 = vector.load %arg10[%c0_57, %c0_58] : memref<128x128xf32, #tpu.memory_space<vmem>>, vector<128x128xf32>
    %cst_59 = arith.constant dense<0.000000e+00> : vector<2x128xf32>
    %221 = tpu.matmul %219, %220, %cst_59 {dimension_numbers = #tpu.dot_dimension_numbers<[1], [0], [0], [1], [0, 0, 1, 1], [], []>} : vector<2x128xf32>, vector<128x128xf32>, vector<2x128xf32> -> vector<2x128xf32>
    %c0_60 = arith.constant 0 : index
    %c0_61 = arith.constant 0 : index
    %222 = vector.load %arg11[%c0_60, %c0_61] : memref<1x128xf32, #tpu.memory_space<vmem>>, vector<1x128xf32>
    %223 = vector.broadcast %222 : vector<1x128xf32> to vector<2x128xf32>
    %224 = arith.addf %221, %223 : vector<2x128xf32>
    %c0_62 = arith.constant 0 : index
    %c0_63 = arith.constant 0 : index
    %225 = vector.load %arg12[%c0_62, %c0_63] : memref<2x128xf32, #tpu.memory_space<vmem>>, vector<2x128xf32>
    tpu.vector_store %arg12[%c0_62, %c0_63], %224 {strides = array<i32>} : memref<2x128xf32, #tpu.memory_space<vmem>>, vector<2x128xf32>,
    return
  }
}

</mosaic_0001>

<llo_original>
// kernel: tpu_custom_call.1
$region0: #{tpu_custom_call.1}
  #allocation0 [shape = 'u32[]', space=smem, size = 0x4, offset = 0x4, fixed_abs, tag = 'smem constant byte address 0x4 - core index']
  #allocation1 [shape = 'u32[144,128]{1,0:T(1,128)}', space=vmem, size = 0x12000, scoped, tag = 'internal scratch']
  %s0 = inlined_call_operand.vmem [shape: s32[64,1], index: 0, kind: input, shape index: {}]
  %s1 = inlined_call_operand.hbm [shape: f32[2,16], index: 1, kind: input, shape index: {}]
  %s2 = inlined_call_operand.vmem [shape: f32[16,128], index: 2, kind: input, shape index: {}]
  %s3 = inlined_call_operand.hbm [shape: f32[1,128], index: 3, kind: input, shape index: {}]
  %s4 = inlined_call_operand.vmem [shape: f32[10,512], index: 4, kind: input, shape index: {}]
  %s5 = inlined_call_operand.hbm [shape: f32[128,1024], index: 5, kind: input, shape index: {}]
  %s6 = inlined_call_operand.hbm [shape: f32[128,128], index: 6, kind: input, shape index: {}]
  %s7 = inlined_call_operand.hbm [shape: f32[128,128], index: 7, kind: input, shape index: {}]
  %s8 = inlined_call_operand.hbm [shape: f32[128,128], index: 8, kind: input, shape index: {}]
  %s9 = inlined_call_operand.vmem [shape: f32[1,128], index: 9, kind: input, shape index: {}]
  %s10 = inlined_call_operand.hbm [shape: f32[128,128], index: 10, kind: input, shape index: {}]
  %s11 = inlined_call_operand.vmem [shape: f32[1,128], index: 11, kind: input, shape index: {}]
  %s12 = inlined_call_operand.hbm [shape: f32[2,128], index: 12, kind: output, shape index: {}]
  %s13 = sld [smem:[#allocation0]]
  $region86: #{tpu_custom_call.1} parent=0
    _
  %s15 = ssub.s32 1, %s13
  %s16 = scalar_select 0, %s15, %s13
  $region1: #{tpu_custom_call.1} parent=0
    #allocation2 [shape = 'u8[1024]{0}', space=vmem, size = 0x400, scoped, tag = 'input window, operand 1, single buffered']
    #allocation3 [shape = 's32[1]{0}', space=sflag, size = 0x4, scoped, tag = 'scoped memory for tpu_custom_call.1']
    #allocation4 [shape = 's32[1]{0}', space=sflag, size = 0x4, scoped, tag = 'scoped memory for tpu_custom_call.1']
    #allocation5 [shape = 'u8[512]{0}', space=vmem, size = 0x400, scoped, tag = 'input window, operand 3, single buffered']
    #allocation6 [shape = 's32[1]{0}', space=sflag, size = 0x4, scoped, tag = 'scoped memory for tpu_custom_call.1']
    #allocation7 [shape = 'u8[524288]{0}', space=vmem, size = 0x80000, scoped, tag = 'input window, operand 5, single buffered']
    #allocation8 [shape = 'u8[65536]{0}', space=vmem, size = 0x10000, scoped, tag = 'input window, operand 6, single buffered']
    #allocation9 [shape = 's32[1]{0}', space=sflag, size = 0x4, scoped, tag = 'scoped memory for tpu_custom_call.1']
    #allocation10 [shape = 'u8[65536]{0}', space=vmem, size = 0x10000, scoped, tag = 'input window, operand 7, single buffered']
    #allocation11 [shape = 'u8[65536]{0}', space=vmem, size = 0x10000, scoped, tag = 'input window, operand 8, single buffered']
    #allocation12 [shape = 's32[1]{0}', space=sflag, size = 0x4, scoped, tag = 'scoped memory for tpu_custom_call.1']
    #allocation13 [shape = 'u8[65536]{0}', space=vmem, size = 0x10000, scoped, tag = 'input window, operand 10, single buffered']
    #allocation14 [shape = 'u8[1024]{0}', space=vmem, size = 0x400, scoped, tag = 'output window, operand 0, single buffered']
    %17 = vsyncpa [#allocation3], 0
    %18 = vsyncpa [#allocation6], 0
    %19 = vsyncpa [#allocation9], 0
    %20 = vsyncpa [#allocation12], 0
    %21 = vsyncpa [#allocation4], 0
    // Predicated region
    $region2: #{tpu_custom_call.1} parent=1 // pred_check
      _
    $region3: #{tpu_custom_call.1} parent=1 // pred_check_branch
      %23 = sbr.rel (0) target = $region5
    $region4: #{tpu_custom_call.1} parent=1 // pred_region
      _
    $region5: #{tpu_custom_call.1} parent=1 // pred_fallthru
      _
    // Predicated region
    $region6: #{tpu_custom_call.1} parent=1 // pred_check
      _
    $region7: #{tpu_custom_call.1} parent=1 // pred_check_branch
      %25 = sbr.rel (0) target = $region9
    $region8: #{tpu_custom_call.1} parent=1 // pred_region
      %s27 = ssub.s32 32, 32
      %28 = vsyncadd [#allocation3], %s27
      %s30 = sshll.u32 [#allocation2], 4
      %s31 = int_to_ptr.vmem [resolvable:$true] %s30
      %33 = dma.hbm_to_vmem [thread:$0]  %s1, 32, %s31, [#allocation3]
    $region9: #{tpu_custom_call.1} parent=1 // pred_fallthru
      _
    // Predicated region
    $region10: #{tpu_custom_call.1} parent=1 // pred_check
      _
    $region11: #{tpu_custom_call.1} parent=1 // pred_check_branch
      %35 = sbr.rel (0) target = $region13
    $region12: #{tpu_custom_call.1} parent=1 // pred_region
      _
    $region13: #{tpu_custom_call.1} parent=1 // pred_fallthru
      _
    // Predicated region
    $region14: #{tpu_custom_call.1} parent=1 // pred_check
      _
    $region15: #{tpu_custom_call.1} parent=1 // pred_check_branch
      %37 = sbr.rel (0) target = $region17
    $region16: #{tpu_custom_call.1} parent=1 // pred_region
      %s39 = ssub.s32 16, 16
      %40 = vsyncadd [#allocation6], %s39
      %s42 = sshll.u32 [#allocation5], 4
      %s43 = int_to_ptr.vmem [resolvable:$true] %s42
      %45 = dma.hbm_to_vmem [thread:$0]  %s3, 16, %s43, [#allocation6]
    $region17: #{tpu_custom_call.1} parent=1 // pred_fallthru
      _
    // Predicated region
    $region18: #{tpu_custom_call.1} parent=1 // pred_check
      _
    $region19: #{tpu_custom_call.1} parent=1 // pred_check_branch
      %47 = sbr.rel (0) target = $region21
    $region20: #{tpu_custom_call.1} parent=1 // pred_region
      _
    $region21: #{tpu_custom_call.1} parent=1 // pred_fallthru
      _
    // Predicated region
    $region22: #{tpu_custom_call.1} parent=1 // pred_check
      _
    $region23: #{tpu_custom_call.1} parent=1 // pred_check_branch
      %49 = sbr.rel (0) target = $region25
    $region24: #{tpu_custom_call.1} parent=1 // pred_region
      %s51 = ssub.s32 16384, 16384
      %52 = vsyncadd [#allocation6], %s51
      %s53 = sshll.u32 [#allocation7], 4
      %s54 = int_to_ptr.vmem [resolvable:$true] %s53
      %59 = dma.hbm_to_vmem [thread:$0]  %s5, 16384, %s54, [#allocation6], 1024, 1024, 64
    $region25: #{tpu_custom_call.1} parent=1 // pred_fallthru
      _
    // Predicated region
    $region26: #{tpu_custom_call.1} parent=1 // pred_check
      _
    $region27: #{tpu_custom_call.1} parent=1 // pred_check_branch
      %61 = sbr.rel (0) target = $region29
    $region28: #{tpu_custom_call.1} parent=1 // pred_region
      %s63 = ssub.s32 2048, 2048
      %64 = vsyncadd [#allocation9], %s63
      %s65 = sshll.u32 [#allocation8], 4
      %s66 = int_to_ptr.vmem [resolvable:$true] %s65
      %71 = dma.hbm_to_vmem [thread:$0]  %s6, 2048, %s66, [#allocation9], 128, 128, 8
    $region29: #{tpu_custom_call.1} parent=1 // pred_fallthru
      _
    // Predicated region
    $region30: #{tpu_custom_call.1} parent=1 // pred_check
      _
    $region31: #{tpu_custom_call.1} parent=1 // pred_check_branch
      %73 = sbr.rel (0) target = $region33
    $region32: #{tpu_custom_call.1} parent=1 // pred_region
      %s75 = ssub.s32 2048, 2048
      %76 = vsyncadd [#allocation9], %s75
      %s77 = sshll.u32 [#allocation10], 4
      %s78 = int_to_ptr.vmem [resolvable:$true] %s77
      %83 = dma.hbm_to_vmem [thread:$0]  %s7, 2048, %s78, [#allocation9], 128, 128, 8
    $region33: #{tpu_custom_call.1} parent=1 // pred_fallthru
      _
    // Predicated region
    $region34: #{tpu_custom_call.1} parent=1 // pred_check
      _
    $region35: #{tpu_custom_call.1} parent=1 // pred_check_branch
      %85 = sbr.rel (0) target = $region37
    $region36: #{tpu_custom_call.1} parent=1 // pred_region
      %s87 = ssub.s32 2048, 2048
      %88 = vsyncadd [#allocation12], %s87
      %s89 = sshll.u32 [#allocation11], 4
      %s90 = int_to_ptr.vmem [resolvable:$true] %s89
      %95 = dma.hbm_to_vmem [thread:$0]  %s8, 2048, %s90, [#allocation12], 128, 128, 8
    $region37: #{tpu_custom_call.1} parent=1 // pred_fallthru
      _
    // Predicated region
    $region38: #{tpu_custom_call.1} parent=1 // pred_check
      _
    $region39: #{tpu_custom_call.1} parent=1 // pred_check_branch
      %97 = sbr.rel (0) target = $region41
    $region40: #{tpu_custom_call.1} parent=1 // pred_region
      _
    $region41: #{tpu_custom_call.1} parent=1 // pred_fallthru
      _
    // Predicated region
    $region42: #{tpu_custom_call.1} parent=1 // pred_check
      _
    $region43: #{tpu_custom_call.1} parent=1 // pred_check_branch
      %99 = sbr.rel (0) target = $region45
    $region44: #{tpu_custom_call.1} parent=1 // pred_region
      %s101 = ssub.s32 2048, 2048
      %102 = vsyncadd [#allocation12], %s101
      %s103 = sshll.u32 [#allocation13], 4
      %s104 = int_to_ptr.vmem [resolvable:$true] %s103
      %109 = dma.hbm_to_vmem [thread:$0]  %s10, 2048, %s104, [#allocation12], 128, 128, 8
    $region45: #{tpu_custom_call.1} parent=1 // pred_fallthru
      _
    // Predicated region
    $region46: #{tpu_custom_call.1} parent=1 // pred_check
      _
    $region47: #{tpu_custom_call.1} parent=1 // pred_check_branch
      %111 = sbr.rel (0) target = $region49
    $region48: #{tpu_custom_call.1} parent=1 // pred_region
      _
    $region49: #{tpu_custom_call.1} parent=1 // pred_fallthru
      _
    // Predicated region
    $region50: #{tpu_custom_call.1} parent=1 // pred_check
      _
    $region51: #{tpu_custom_call.1} parent=1 // pred_check_branch
      %113 = sbr.rel (0) target = $region53
    $region52: #{tpu_custom_call.1} parent=1 // pred_region
      %114 = dma.done [#allocation3], 32
    $region53: #{tpu_custom_call.1} parent=1 // pred_fallthru
      _
    // Predicated region
    $region54: #{tpu_custom_call.1} parent=1 // pred_check
      _
    $region55: #{tpu_custom_call.1} parent=1 // pred_check_branch
      %116 = sbr.rel (0) target = $region57
    $region56: #{tpu_custom_call.1} parent=1 // pred_region
      %117 = dma.done [#allocation6], 16
    $region57: #{tpu_custom_call.1} parent=1 // pred_fallthru
      _
    // Predicated region
    $region58: #{tpu_custom_call.1} parent=1 // pred_check
      _
    $region59: #{tpu_custom_call.1} parent=1 // pred_check_branch
      %119 = sbr.rel (0) target = $region61
    $region60: #{tpu_custom_call.1} parent=1 // pred_region
      %120 = dma.done [#allocation6], 16384
    $region61: #{tpu_custom_call.1} parent=1 // pred_fallthru
      _
    // Predicated region
    $region62: #{tpu_custom_call.1} parent=1 // pred_check
      _
    $region63: #{tpu_custom_call.1} parent=1 // pred_check_branch
      %122 = sbr.rel (0) target = $region65
    $region64: #{tpu_custom_call.1} parent=1 // pred_region
      %123 = dma.done [#allocation9], 2048
    $region65: #{tpu_custom_call.1} parent=1 // pred_fallthru
      _
    // Predicated region
    $region66: #{tpu_custom_call.1} parent=1 // pred_check
      _
    $region67: #{tpu_custom_call.1} parent=1 // pred_check_branch
      %125 = sbr.rel (0) target = $region69
    $region68: #{tpu_custom_call.1} parent=1 // pred_region
      %126 = dma.done [#allocation9], 2048
    $region69: #{tpu_custom_call.1} parent=1 // pred_fallthru
      _
    // Predicated region
    $region70: #{tpu_custom_call.1} parent=1 // pred_check
      _
    $region71: #{tpu_custom_call.1} parent=1 // pred_check_branch
      %128 = sbr.rel (0) target = $region73
    $region72: #{tpu_custom_call.1} parent=1 // pred_region
      %129 = dma.done [#allocation12], 2048
    $region73: #{tpu_custom_call.1} parent=1 // pred_fallthru
      _
    // Predicated region
    $region74: #{tpu_custom_call.1} parent=1 // pred_check
      _
    $region75: #{tpu_custom_call.1} parent=1 // pred_check_branch
      %131 = sbr.rel (0) target = $region77
    $region76: #{tpu_custom_call.1} parent=1 // pred_region
      %132 = dma.done [#allocation12], 2048
    $region77: #{tpu_custom_call.1} parent=1 // pred_fallthru
      _
    %v133 = vld [vmem:[#allocation2] sm:$0x3]
    %v134 = vld [vmem:[%s2] sm:$0xff]
    %v135 = vld [vmem:[%s2 + $0x8] sm:$0xff]
    %v136 = vld [vmem:[#allocation5] sm:$0x1]
    %v138 = vlaneseq
    %v139 = vshrl.u32 %v138, 7
    %v140 = vsub.s32 0, %v139
    %v141 = vrot.slane %v136, %v140
    %vm143 = vcmask 130048
    %v145 = vsel %vm143, %v133, 0
    %147 = vmatprep.subr.mxu0 0.0
    %148 = vmatpush1.msra.mxu0 %v134
    %149 = vmatprep.subr.mxu0 0.0
    %150 = vmatpush1.msra.mxu0 %v135
    %151 = vmatprep.subr.mxu0 0.0
    %152 = vmatpush1.msra.mxu0 0.0
    %153 = vmatprep.subr.mxu0 0.0
    %154 = vmatpush1.msra.mxu0 0.0
    %155 = vmatprep.subr.mxu0 0.0
    %156 = vmatpush1.msra.mxu0 0.0
    %157 = vmatprep.subr.mxu0 0.0
    %158 = vmatpush1.msra.mxu0 0.0
    %159 = vmatprep.subr.mxu0 0.0
    %160 = vmatpush1.msra.mxu0 0.0
    %161 = vmatprep.subr.mxu0 0.0
    %162 = vmatpush1.msra.mxu0 0.0
    %163 = vmatprep.subr.mxu0 0.0
    %164 = vmatpush1.msra.mxu0 0.0
    %165 = vmatprep.subr.mxu0 0.0
    %166 = vmatpush1.msra.mxu0 0.0
    %167 = vmatprep.subr.mxu0 0.0
    %168 = vmatpush1.msra.mxu0 0.0
    %169 = vmatprep.subr.mxu0 0.0
    %170 = vmatpush1.msra.mxu0 0.0
    %171 = vmatprep.subr.mxu0 0.0
    %172 = vmatpush1.msra.mxu0 0.0
    %173 = vmatprep.subr.mxu0 0.0
    %174 = vmatpush1.msra.mxu0 0.0
    %175 = vmatprep.subr.mxu0 0.0
    %176 = vmatpush1.msra.mxu0 0.0
    %177 = vmatprep.subr.mxu0 0.0
    %178 = vmatpush1.msra.mxu0 0.0
    %179 = vmatprep.subr.mxu0 0.0
    %180 = vmatpush1.msra.mxu0 0.0
    %181 = vmatprep.subr.mxu0 0.0
    %182 = vmatpush1.msra.mxu0 0.0
    %183 = vmatprep.subr.mxu0 0.0
    %184 = vmatpush1.msra.mxu0 0.0
    %185 = vmatprep.subr.mxu0 0.0
    %186 = vmatpush1.msra.mxu0 0.0
    %187 = vmatprep.subr.mxu0 0.0
    %188 = vmatpush1.msra.mxu0 0.0
    %189 = vmatprep.subr.mxu0 0.0
    %190 = vmatpush1.msra.mxu0 0.0
    %191 = vmatprep.subr.mxu0 0.0
    %192 = vmatpush1.msra.mxu0 0.0
    %193 = vmatprep.subr.mxu0 0.0
    %194 = vmatpush1.msra.mxu0 0.0
    %195 = vmatprep.subr.mxu0 0.0
    %196 = vmatpush1.msra.mxu0 0.0
    %197 = vmatprep.subr.mxu0 0.0
    %198 = vmatpush1.msra.mxu0 0.0
    %199 = vmatprep.subr.mxu0 0.0
    %200 = vmatpush1.msra.mxu0 0.0
    %201 = vmatprep.subr.mxu0 0.0
    %202 = vmatpush1.msra.mxu0 0.0
    %203 = vmatprep.subr.mxu0 0.0
    %204 = vmatpush1.msra.mxu0 0.0
    %205 = vmatprep.subr.mxu0 0.0
    %206 = vmatpush1.msra.mxu0 0.0
    %207 = vmatprep.subr.mxu0 0.0
    %208 = vmatpush1.msra.mxu0 0.0
    %209 = vmatprep.subr.mxu0 0.0
    %210 = vmatpush1.msra.mxu0 0.0
    %211 = vmatprep.mubr.f32.mxu0 0.0
    %212 = vmatmul.mubr.f32.gmra.mrb[0].mxu0 %v145
    %v213 = vpop.f32.mrb[0].mxu0
    %v214 = vadd.f32 %v141, %v213
    %v215 = vpop.f32.mrb[0].mxu0
    %216 = vdwg.mxu0
    %v217 = vmax.f32 %v214, 0.0
    %v218 = vlaneseq
    %v219 = vand.u32 %v218, 127
    %v220 = vld [vmem:[%s0] sm:$0xff]
    %v221 = vld [vmem:[%s0 + $0x8] sm:$0xff]
    %v222 = vld [vmem:[%s0 + $0x10] sm:$0xff]
    %v223 = vld [vmem:[%s0 + $0x18] sm:$0xff]
    %v224 = vld [vmem:[%s0 + $0x20] sm:$0xff]
    %v225 = vld [vmem:[%s0 + $0x28] sm:$0xff]
    %v226 = vld [vmem:[%s0 + $0x30] sm:$0xff]
    %v227 = vld [vmem:[%s0 + $0x38] sm:$0xff]
    %228 = vset.pattern.permute.xlu0 0
    %229 = vperm.xlu0 %228, %v220
    %v230 = vpop.permute.xlu0 %229
    %231 = vset.pattern.permute.xlu0 0
    %232 = vperm.xlu0 %231, %v221
    %v233 = vpop.permute.xlu0 %232
    %234 = vset.pattern.permute.xlu0 0
    %235 = vperm.xlu0 %234, %v222
    %v236 = vpop.permute.xlu0 %235
    %237 = vset.pattern.permute.xlu0 0
    %238 = vperm.xlu0 %237, %v223
    %v239 = vpop.permute.xlu0 %238
    %240 = vset.pattern.permute.xlu0 0
    %241 = vperm.xlu0 %240, %v224
    %v242 = vpop.permute.xlu0 %241
    %243 = vset.pattern.permute.xlu0 0
    %244 = vperm.xlu0 %243, %v225
    %v245 = vpop.permute.xlu0 %244
    %246 = vset.pattern.permute.xlu0 0
    %247 = vperm.xlu0 %246, %v226
    %v248 = vpop.permute.xlu0 %247
    %249 = vset.pattern.permute.xlu0 0
    %250 = vperm.xlu0 %249, %v227
    %v251 = vpop.permute.xlu0 %250
    %vm252 = vcmp.eq.s32.totalorder %v230, %v219
    %vm253 = vcmp.eq.s32.totalorder %v233, %v219
    %vm254 = vcmp.eq.s32.totalorder %v236, %v219
    %vm255 = vcmp.eq.s32.totalorder %v239, %v219
    %vm256 = vcmp.eq.s32.totalorder %v242, %v219
    %vm257 = vcmp.eq.s32.totalorder %v245, %v219
    %vm258 = vcmp.eq.s32.totalorder %v248, %v219
    %vm259 = vcmp.eq.s32.totalorder %v251, %v219
    %v260 = vsel %vm252, 1, 0
    %v261 = vsel %vm253, 1, 0
    %v262 = vsel %vm254, 1, 0
    %v263 = vsel %vm255, 1, 0
    %v264 = vsel %vm256, 1, 0
    %v265 = vsel %vm257, 1, 0
    %v266 = vsel %vm258, 1, 0
    %v267 = vsel %vm259, 1, 0
    %v268 = vcvt.s32.f32 %v260
    %v269 = vcvt.s32.f32 %v261
    %v270 = vcvt.s32.f32 %v262
    %v271 = vcvt.s32.f32 %v263
    %v272 = vcvt.s32.f32 %v264
    %v273 = vcvt.s32.f32 %v265
    %v274 = vcvt.s32.f32 %v266
    %v275 = vcvt.s32.f32 %v267
    %v276 = vld [vmem:[%s4] sm:$0xff]
    %v277 = vld [vmem:[%s4 + $0x8] sm:$0xff]
    %v278 = vld [vmem:[%s4 + $0x10] sm:$0xff]
    %v279 = vld [vmem:[%s4 + $0x18] sm:$0xff]
    %v280 = vld [vmem:[%s4 + $0x20] sm:$0x3]
    %v281 = vld [vmem:[%s4 + $0x28] sm:$0x3]
    %v282 = vld [vmem:[%s4 + $0x30] sm:$0x3]
    %v283 = vld [vmem:[%s4 + $0x38] sm:$0x3]
    %vm284 = vcmask 80896
    %v286 = vsel %vm284, %v268, 0
    %v289 = vsel %vm284, %v269, 0
    %v292 = vsel %vm284, %v270, 0
    %v295 = vsel %vm284, %v271, 0
    %v298 = vsel %vm284, %v272, 0
    %v301 = vsel %vm284, %v273, 0
    %v304 = vsel %vm284, %v274, 0
    %v307 = vsel %vm284, %v275, 0
    %vm309 = vcmask 1041408
    %v311 = vsel %vm309, %v280, 0
    %v314 = vsel %vm309, %v281, 0
    %v317 = vsel %vm309, %v282, 0
    %v320 = vsel %vm309, %v283, 0
    %322 = vmatprep.subr.mxu0 %v277
    %323 = vmatpush1.msra.mxu0 %v276
    %324 = vmatprep.subr.mxu0 %v314
    %325 = vmatpush1.msra.mxu0 %v311
    %326 = vmatprep.subr.mxu0 0.0
    %327 = vmatpush1.msra.mxu0 0.0
    %328 = vmatprep.subr.mxu0 0.0
    %329 = vmatpush1.msra.mxu0 0.0
    %330 = vmatprep.subr.mxu0 0.0
    %331 = vmatpush1.msra.mxu0 0.0
    %332 = vmatprep.subr.mxu0 0.0
    %333 = vmatpush1.msra.mxu0 0.0
    %334 = vmatprep.subr.mxu0 0.0
    %335 = vmatpush1.msra.mxu0 0.0
    %336 = vmatprep.subr.mxu0 0.0
    %337 = vmatpush1.msra.mxu0 0.0
    %338 = vmatprep.subr.mxu0 0.0
    %339 = vmatpush1.msra.mxu0 0.0
    %340 = vmatprep.subr.mxu0 0.0
    %341 = vmatpush1.msra.mxu0 0.0
    %342 = vmatprep.subr.mxu0 0.0
    %343 = vmatpush1.msra.mxu0 0.0
    %344 = vmatprep.subr.mxu0 0.0
    %345 = vmatpush1.msra.mxu0 0.0
    %346 = vmatprep.subr.mxu0 0.0
    %347 = vmatpush1.msra.mxu0 0.0
    %348 = vmatprep.subr.mxu0 0.0
    %349 = vmatpush1.msra.mxu0 0.0
    %350 = vmatprep.subr.mxu0 0.0
    %351 = vmatpush1.msra.mxu0 0.0
    %352 = vmatprep.subr.mxu0 0.0
    %353 = vmatpush1.msra.mxu0 0.0
    %354 = vmatprep.subr.mxu0 0.0
    %355 = vmatpush1.msra.mxu0 0.0
    %356 = vmatprep.subr.mxu0 0.0
    %357 = vmatpush1.msra.mxu0 0.0
    %358 = vmatprep.subr.mxu0 0.0
    %359 = vmatpush1.msra.mxu0 0.0
    %360 = vmatprep.subr.mxu0 0.0
    %361 = vmatpush1.msra.mxu0 0.0
    %362 = vmatprep.subr.mxu0 0.0
    %363 = vmatpush1.msra.mxu0 0.0
    %364 = vmatprep.subr.mxu0 0.0
    %365 = vmatpush1.msra.mxu0 0.0
    %366 = vmatprep.subr.mxu0 0.0
    %367 = vmatpush1.msra.mxu0 0.0
    %368 = vmatprep.subr.mxu0 0.0
    %369 = vmatpush1.msra.mxu0 0.0
    %370 = vmatprep.subr.mxu0 0.0
    %371 = vmatpush1.msra.mxu0 0.0
    %372 = vmatprep.subr.mxu0 0.0
    %373 = vmatpush1.msra.mxu0 0.0
    %374 = vmatprep.subr.mxu0 0.0
    %375 = vmatpush1.msra.mxu0 0.0
    %376 = vmatprep.subr.mxu0 0.0
    %377 = vmatpush1.msra.mxu0 0.0
    %378 = vmatprep.subr.mxu0 0.0
    %379 = vmatpush1.msra.mxu0 0.0
    %380 = vmatprep.subr.mxu0 0.0
    %381 = vmatpush1.msra.mxu0 0.0
    %382 = vmatprep.subr.mxu0 0.0
    %383 = vmatpush1.msra.mxu0 0.0
    %384 = vmatprep.subr.mxu0 0.0
    %385 = vmatpush1.msra.mxu0 0.0
    %386 = vmatprep.mubr.f32.mxu0 0.0
    %387 = vmatmul.mubr.f32.gmra.mrb[0].mxu0 %v286
    %v388 = vpop.f32.mrb[0].mxu0
    %v389 = vadd.f32 0.0, %v388
    %v390 = vpop.f32.mrb[0].mxu0
    %v391 = vadd.f32 0.0, %v390
    %392 = vmatprep.mubr.f32.mxu0 0.0
    %393 = vmatmul.mubr.f32.gmra.mrb[0].mxu0 %v289
    %v394 = vpop.f32.mrb[0].mxu0
    %v395 = vadd.f32 0.0, %v394
    %v396 = vpop.f32.mrb[0].mxu0
    %v397 = vadd.f32 0.0, %v396
    %398 = vmatprep.mubr.f32.mxu0 0.0
    %399 = vmatmul.mubr.f32.gmra.mrb[0].mxu0 %v292
    %v400 = vpop.f32.mrb[0].mxu0
    %v401 = vadd.f32 0.0, %v400
    %v402 = vpop.f32.mrb[0].mxu0
    %v403 = vadd.f32 0.0, %v402
    %404 = vmatprep.mubr.f32.mxu0 0.0
    %405 = vmatmul.mubr.f32.gmra.mrb[0].mxu0 %v295
    %v406 = vpop.f32.mrb[0].mxu0
    %v407 = vadd.f32 0.0, %v406
    %v408 = vpop.f32.mrb[0].mxu0
    %v409 = vadd.f32 0.0, %v408
    %410 = vmatprep.mubr.f32.mxu0 0.0
    %411 = vmatmul.mubr.f32.gmra.mrb[0].mxu0 %v298
    %v412 = vpop.f32.mrb[0].mxu0
    %v413 = vadd.f32 0.0, %v412
    %v414 = vpop.f32.mrb[0].mxu0
    %v415 = vadd.f32 0.0, %v414
    %416 = vmatprep.mubr.f32.mxu0 0.0
    %417 = vmatmul.mubr.f32.gmra.mrb[0].mxu0 %v301
    %v418 = vpop.f32.mrb[0].mxu0
    %v419 = vadd.f32 0.0, %v418
    %v420 = vpop.f32.mrb[0].mxu0
    %v421 = vadd.f32 0.0, %v420
    %422 = vmatprep.mubr.f32.mxu0 0.0
    %423 = vmatmul.mubr.f32.gmra.mrb[0].mxu0 %v304
    %v424 = vpop.f32.mrb[0].mxu0
    %v425 = vadd.f32 0.0, %v424
    %v426 = vpop.f32.mrb[0].mxu0
    %v427 = vadd.f32 0.0, %v426
    %428 = vmatprep.mubr.f32.mxu0 0.0
    %429 = vmatmul.mubr.f32.gmra.mrb[0].mxu0 %v307
    %v430 = vpop.f32.mrb[0].mxu0
    %v431 = vadd.f32 0.0, %v430
    %v432 = vpop.f32.mrb[0].mxu0
    %v433 = vadd.f32 0.0, %v432
    %434 = vdwg.mxu0
    %435 = vmatprep.subr.mxu0 %v279
    %436 = vmatpush1.msra.mxu0 %v278
    %437 = vmatprep.subr.mxu0 %v320
    %438 = vmatpush1.msra.mxu0 %v317
    %439 = vmatprep.subr.mxu0 0.0
    %440 = vmatpush1.msra.mxu0 0.0
    %441 = vmatprep.subr.mxu0 0.0
    %442 = vmatpush1.msra.mxu0 0.0
    %443 = vmatprep.subr.mxu0 0.0
    %444 = vmatpush1.msra.mxu0 0.0
    %445 = vmatprep.subr.mxu0 0.0
    %446 = vmatpush1.msra.mxu0 0.0
    %447 = vmatprep.subr.mxu0 0.0
    %448 = vmatpush1.msra.mxu0 0.0
    %449 = vmatprep.subr.mxu0 0.0
    %450 = vmatpush1.msra.mxu0 0.0
    %451 = vmatprep.subr.mxu0 0.0
    %452 = vmatpush1.msra.mxu0 0.0
    %453 = vmatprep.subr.mxu0 0.0
    %454 = vmatpush1.msra.mxu0 0.0
    %455 = vmatprep.subr.mxu0 0.0
    %456 = vmatpush1.msra.mxu0 0.0
    %457 = vmatprep.subr.mxu0 0.0
    %458 = vmatpush1.msra.mxu0 0.0
    %459 = vmatprep.subr.mxu0 0.0
    %460 = vmatpush1.msra.mxu0 0.0
    %461 = vmatprep.subr.mxu0 0.0
    %462 = vmatpush1.msra.mxu0 0.0
    %463 = vmatprep.subr.mxu0 0.0
    %464 = vmatpush1.msra.mxu0 0.0
    %465 = vmatprep.subr.mxu0 0.0
    %466 = vmatpush1.msra.mxu0 0.0
    %467 = vmatprep.subr.mxu0 0.0
    %468 = vmatpush1.msra.mxu0 0.0
    %469 = vmatprep.subr.mxu0 0.0
    %470 = vmatpush1.msra.mxu0 0.0
    %471 = vmatprep.subr.mxu0 0.0
    %472 = vmatpush1.msra.mxu0 0.0
    %473 = vmatprep.subr.mxu0 0.0
    %474 = vmatpush1.msra.mxu0 0.0
    %475 = vmatprep.subr.mxu0 0.0
    %476 = vmatpush1.msra.mxu0 0.0
    %477 = vmatprep.subr.mxu0 0.0
    %478 = vmatpush1.msra.mxu0 0.0
    %479 = vmatprep.subr.mxu0 0.0
    %480 = vmatpush1.msra.mxu0 0.0
    %481 = vmatprep.subr.mxu0 0.0
    %482 = vmatpush1.msra.mxu0 0.0
    %483 = vmatprep.subr.mxu0 0.0
    %484 = vmatpush1.msra.mxu0 0.0
    %485 = vmatprep.subr.mxu0 0.0
    %486 = vmatpush1.msra.mxu0 0.0
    %487 = vmatprep.subr.mxu0 0.0
    %488 = vmatpush1.msra.mxu0 0.0
    %489 = vmatprep.subr.mxu0 0.0
    %490 = vmatpush1.msra.mxu0 0.0
    %491 = vmatprep.subr.mxu0 0.0
    %492 = vmatpush1.msra.mxu0 0.0
    %493 = vmatprep.subr.mxu0 0.0
    %494 = vmatpush1.msra.mxu0 0.0
    %495 = vmatprep.subr.mxu0 0.0
    %496 = vmatpush1.msra.mxu0 0.0
    %497 = vmatprep.subr.mxu0 0.0
    %498 = vmatpush1.msra.mxu0 0.0
    %499 = vmatprep.mubr.f32.mxu0 0.0
    %500 = vmatmul.mubr.f32.gmra.mrb[0].mxu0 %v286
    %v501 = vpop.f32.mrb[0].mxu0
    %v502 = vadd.f32 0.0, %v501
    %v503 = vpop.f32.mrb[0].mxu0
    %v504 = vadd.f32 0.0, %v503
    %505 = vmatprep.mubr.f32.mxu0 0.0
    %506 = vmatmul.mubr.f32.gmra.mrb[0].mxu0 %v289
    %v507 = vpop.f32.mrb[0].mxu0
    %v508 = vadd.f32 0.0, %v507
    %v509 = vpop.f32.mrb[0].mxu0
    %v510 = vadd.f32 0.0, %v509
    %511 = vmatprep.mubr.f32.mxu0 0.0
    %512 = vmatmul.mubr.f32.gmra.mrb[0].mxu0 %v292
    %v513 = vpop.f32.mrb[0].mxu0
    %v514 = vadd.f32 0.0, %v513
    %v515 = vpop.f32.mrb[0].mxu0
    %v516 = vadd.f32 0.0, %v515
    %517 = vmatprep.mubr.f32.mxu0 0.0
    %518 = vmatmul.mubr.f32.gmra.mrb[0].mxu0 %v295
    %v519 = vpop.f32.mrb[0].mxu0
    %v520 = vadd.f32 0.0, %v519
    %v521 = vpop.f32.mrb[0].mxu0
    %v522 = vadd.f32 0.0, %v521
    %523 = vmatprep.mubr.f32.mxu0 0.0
    %524 = vmatmul.mubr.f32.gmra.mrb[0].mxu0 %v298
    %v525 = vpop.f32.mrb[0].mxu0
    %v526 = vadd.f32 0.0, %v525
    %v527 = vpop.f32.mrb[0].mxu0
    %v528 = vadd.f32 0.0, %v527
    %529 = vmatprep.mubr.f32.mxu0 0.0
    %530 = vmatmul.mubr.f32.gmra.mrb[0].mxu0 %v301
    %v531 = vpop.f32.mrb[0].mxu0
    %v532 = vadd.f32 0.0, %v531
    %v533 = vpop.f32.mrb[0].mxu0
    %v534 = vadd.f32 0.0, %v533
    %535 = vmatprep.mubr.f32.mxu0 0.0
    %536 = vmatmul.mubr.f32.gmra.mrb[0].mxu0 %v304
    %v537 = vpop.f32.mrb[0].mxu0
    %v538 = vadd.f32 0.0, %v537
    %v539 = vpop.f32.mrb[0].mxu0
    %v540 = vadd.f32 0.0, %v539
    %541 = vmatprep.mubr.f32.mxu0 0.0
    %542 = vmatmul.mubr.f32.gmra.mrb[0].mxu0 %v307
    %v543 = vpop.f32.mrb[0].mxu0
    %v544 = vadd.f32 0.0, %v543
    %v545 = vpop.f32.mrb[0].mxu0
    %v546 = vadd.f32 0.0, %v545
    %547 = vdwg.mxu0
    %v548 = vlaneseq
    %v549 = vshrl.u32 %v548, 7
    %vm550 = vcmp.lt.s32.totalorder %v549, 2
    %v551 = vld [vmem:[#allocation7] sm:$0xff]
    %v552 = vld [vmem:[#allocation7 + $0x8] sm:$0xff]
    %v553 = vld [vmem:[#allocation7 + $0x10] sm:$0xff]
    %v554 = vld [vmem:[#allocation7 + $0x18] sm:$0xff]
    %v555 = vld [vmem:[#allocation7 + $0x20] sm:$0xff]
    %v556 = vld [vmem:[#allocation7 + $0x28] sm:$0xff]
    %v557 = vld [vmem:[#allocation7 + $0x30] sm:$0xff]
    %v558 = vld [vmem:[#allocation7 + $0x38] sm:$0xff]
    %v559 = vld [vmem:[#allocation7 + $0x40] sm:$0xff]
    %v560 = vld [vmem:[#allocation7 + $0x48] sm:$0xff]
    %v561 = vld [vmem:[#allocation7 + $0x50] sm:$0xff]
    %v562 = vld [vmem:[#allocation7 + $0x58] sm:$0xff]
    %v563 = vld [vmem:[#allocation7 + $0x60] sm:$0xff]
    %v564 = vld [vmem:[#allocation7 + $0x68] sm:$0xff]
    %v565 = vld [vmem:[#allocation7 + $0x70] sm:$0xff]
    %v566 = vld [vmem:[#allocation7 + $0x78] sm:$0xff]
    %v567 = vld [vmem:[#allocation7 + $0x80] sm:$0xff]
    %v568 = vld [vmem:[#allocation7 + $0x88] sm:$0xff]
    %v569 = vld [vmem:[#allocation7 + $0x90] sm:$0xff]
    %v570 = vld [vmem:[#allocation7 + $0x98] sm:$0xff]
    %v571 = vld [vmem:[#allocation7 + $0xa0] sm:$0xff]
    %v572 = vld [vmem:[#allocation7 + $0xa8] sm:$0xff]
    %v573 = vld [vmem:[#allocation7 + $0xb0] sm:$0xff]
    %v574 = vld [vmem:[#allocation7 + $0xb8] sm:$0xff]
    %v575 = vld [vmem:[#allocation7 + $0xc0] sm:$0xff]
    %v576 = vld [vmem:[#allocation7 + $0xc8] sm:$0xff]
    %v577 = vld [vmem:[#allocation7 + $0xd0] sm:$0xff]
    %v578 = vld [vmem:[#allocation7 + $0xd8] sm:$0xff]
    %v579 = vld [vmem:[#allocation7 + $0xe0] sm:$0xff]
    %v580 = vld [vmem:[#allocation7 + $0xe8] sm:$0xff]
    %v581 = vld [vmem:[#allocation7 + $0xf0] sm:$0xff]
    %v582 = vld [vmem:[#allocation7 + $0xf8] sm:$0xff]
    %v583 = vld [vmem:[#allocation7 + $0x100] sm:$0xff]
    %v584 = vld [vmem:[#allocation7 + $0x108] sm:$0xff]
    %v585 = vld [vmem:[#allocation7 + $0x110] sm:$0xff]
    %v586 = vld [vmem:[#allocation7 + $0x118] sm:$0xff]
    %v587 = vld [vmem:[#allocation7 + $0x120] sm:$0xff]
    %v588 = vld [vmem:[#allocation7 + $0x128] sm:$0xff]
    %v589 = vld [vmem:[#allocation7 + $0x130] sm:$0xff]
    %v590 = vld [vmem:[#allocation7 + $0x138] sm:$0xff]
    %v591 = vld [vmem:[#allocation7 + $0x140] sm:$0xff]
    %v592 = vld [vmem:[#allocation7 + $0x148] sm:$0xff]
    %v593 = vld [vmem:[#allocation7 + $0x150] sm:$0xff]
    %v594 = vld [vmem:[#allocation7 + $0x158] sm:$0xff]
    %v595 = vld [vmem:[#allocation7 + $0x160] sm:$0xff]
    %v596 = vld [vmem:[#allocation7 + $0x168] sm:$0xff]
    %v597 = vld [vmem:[#allocation7 + $0x170] sm:$0xff]
    %v598 = vld [vmem:[#allocation7 + $0x178] sm:$0xff]
    %v599 = vld [vmem:[#allocation7 + $0x180] sm:$0xff]
    %v600 = vld [vmem:[#allocation7 + $0x188] sm:$0xff]
    %v601 = vld [vmem:[#allocation7 + $0x190] sm:$0xff]
    %v602 = vld [vmem:[#allocation7 + $0x198] sm:$0xff]
    %v603 = vld [vmem:[#allocation7 + $0x1a0] sm:$0xff]
    %v604 = vld [vmem:[#allocation7 + $0x1a8] sm:$0xff]
    %v605 = vld [vmem:[#allocation7 + $0x1b0] sm:$0xff]
    %v606 = vld [vmem:[#allocation7 + $0x1b8] sm:$0xff]
    %v607 = vld [vmem:[#allocation7 + $0x1c0] sm:$0xff]
    %v608 = vld [vmem:[#allocation7 + $0x1c8] sm:$0xff]
    %v609 = vld [vmem:[#allocation7 + $0x1d0] sm:$0xff]
    %v610 = vld [vmem:[#allocation7 + $0x1d8] sm:$0xff]
    %v611 = vld [vmem:[#allocation7 + $0x1e0] sm:$0xff]
    %v612 = vld [vmem:[#allocation7 + $0x1e8] sm:$0xff]
    %v613 = vld [vmem:[#allocation7 + $0x1f0] sm:$0xff]
    %v614 = vld [vmem:[#allocation7 + $0x1f8] sm:$0xff]
    %v615 = vld [vmem:[#allocation7 + $0x200] sm:$0xff]
    %v616 = vld [vmem:[#allocation7 + $0x208] sm:$0xff]
    %v617 = vld [vmem:[#allocation7 + $0x210] sm:$0xff]
    %v618 = vld [vmem:[#allocation7 + $0x218] sm:$0xff]
    %v619 = vld [vmem:[#allocation7 + $0x220] sm:$0xff]
    %v620 = vld [vmem:[#allocation7 + $0x228] sm:$0xff]
    %v621 = vld [vmem:[#allocation7 + $0x230] sm:$0xff]
    %v622 = vld [vmem:[#allocation7 + $0x238] sm:$0xff]
    %v623 = vld [vmem:[#allocation7 + $0x240] sm:$0xff]
    %v624 = vld [vmem:[#allocation7 + $0x248] sm:$0xff]
    %v625 = vld [vmem:[#allocation7 + $0x250] sm:$0xff]
    %v626 = vld [vmem:[#allocation7 + $0x258] sm:$0xff]
    %v627 = vld [vmem:[#allocation7 + $0x260] sm:$0xff]
    %v628 = vld [vmem:[#allocation7 + $0x268] sm:$0xff]
    %v629 = vld [vmem:[#allocation7 + $0x270] sm:$0xff]
    %v630 = vld [vmem:[#allocation7 + $0x278] sm:$0xff]
    %v631 = vld [vmem:[#allocation7 + $0x280] sm:$0xff]
    %v632 = vld [vmem:[#allocation7 + $0x288] sm:$0xff]
    %v633 = vld [vmem:[#allocation7 + $0x290] sm:$0xff]
    %v634 = vld [vmem:[#allocation7 + $0x298] sm:$0xff]
    %v635 = vld [vmem:[#allocation7 + $0x2a0] sm:$0xff]
    %v636 = vld [vmem:[#allocation7 + $0x2a8] sm:$0xff]
    %v637 = vld [vmem:[#allocation7 + $0x2b0] sm:$0xff]
    %v638 = vld [vmem:[#allocation7 + $0x2b8] sm:$0xff]
    %v639 = vld [vmem:[#allocation7 + $0x2c0] sm:$0xff]
    %v640 = vld [vmem:[#allocation7 + $0x2c8] sm:$0xff]
    %v641 = vld [vmem:[#allocation7 + $0x2d0] sm:$0xff]
    %v642 = vld [vmem:[#allocation7 + $0x2d8] sm:$0xff]
    %v643 = vld [vmem:[#allocation7 + $0x2e0] sm:$0xff]
    %v644 = vld [vmem:[#allocation7 + $0x2e8] sm:$0xff]
    %v645 = vld [vmem:[#allocation7 + $0x2f0] sm:$0xff]
    %v646 = vld [vmem:[#allocation7 + $0x2f8] sm:$0xff]
    %v647 = vld [vmem:[#allocation7 + $0x300] sm:$0xff]
    %v648 = vld [vmem:[#allocation7 + $0x308] sm:$0xff]
    %v649 = vld [vmem:[#allocation7 + $0x310] sm:$0xff]
    %v650 = vld [vmem:[#allocation7 + $0x318] sm:$0xff]
    %v651 = vld [vmem:[#allocation7 + $0x320] sm:$0xff]
    %v652 = vld [vmem:[#allocation7 + $0x328] sm:$0xff]
    %v653 = vld [vmem:[#allocation7 + $0x330] sm:$0xff]
    %v654 = vld [vmem:[#allocation7 + $0x338] sm:$0xff]
    %v655 = vld [vmem:[#allocation7 + $0x340] sm:$0xff]
    %v656 = vld [vmem:[#allocation7 + $0x348] sm:$0xff]
    %v657 = vld [vmem:[#allocation7 + $0x350] sm:$0xff]
    %v658 = vld [vmem:[#allocation7 + $0x358] sm:$0xff]
    %v659 = vld [vmem:[#allocation7 + $0x360] sm:$0xff]
    %v660 = vld [vmem:[#allocation7 + $0x368] sm:$0xff]
    %v661 = vld [vmem:[#allocation7 + $0x370] sm:$0xff]
    %v662 = vld [vmem:[#allocation7 + $0x378] sm:$0xff]
    %v663 = vld [vmem:[#allocation7 + $0x380] sm:$0xff]
    %v664 = vld [vmem:[#allocation7 + $0x388] sm:$0xff]
    %v665 = vld [vmem:[#allocation7 + $0x390] sm:$0xff]
    %v666 = vld [vmem:[#allocation7 + $0x398] sm:$0xff]
    %v667 = vld [vmem:[#allocation7 + $0x3a0] sm:$0xff]
    %v668 = vld [vmem:[#allocation7 + $0x3a8] sm:$0xff]
    %v669 = vld [vmem:[#allocation7 + $0x3b0] sm:$0xff]
    %v670 = vld [vmem:[#allocation7 + $0x3b8] sm:$0xff]
    %v671 = vld [vmem:[#allocation7 + $0x3c0] sm:$0xff]
    %v672 = vld [vmem:[#allocation7 + $0x3c8] sm:$0xff]
    %v673 = vld [vmem:[#allocation7 + $0x3d0] sm:$0xff]
    %v674 = vld [vmem:[#allocation7 + $0x3d8] sm:$0xff]
    %v675 = vld [vmem:[#allocation7 + $0x3e0] sm:$0xff]
    %v676 = vld [vmem:[#allocation7 + $0x3e8] sm:$0xff]
    %v677 = vld [vmem:[#allocation7 + $0x3f0] sm:$0xff]
    %v678 = vld [vmem:[#allocation7 + $0x3f8] sm:$0xff]
    %679 = vmatprep.subr.mxu0 %v552
    %680 = vmatpush1.msra.mxu0 %v551
    %681 = vmatprep.subr.mxu0 %v560
    %682 = vmatpush1.msra.mxu0 %v559
    %683 = vmatprep.subr.mxu0 %v568
    %684 = vmatpush1.msra.mxu0 %v567
    %685 = vmatprep.subr.mxu0 %v576
    %686 = vmatpush1.msra.mxu0 %v575
    %687 = vmatprep.subr.mxu0 %v584
    %688 = vmatpush1.msra.mxu0 %v583
    %689 = vmatprep.subr.mxu0 %v592
    %690 = vmatpush1.msra.mxu0 %v591
    %691 = vmatprep.subr.mxu0 %v600
    %692 = vmatpush1.msra.mxu0 %v599
    %693 = vmatprep.subr.mxu0 %v608
    %694 = vmatpush1.msra.mxu0 %v607
    %695 = vmatprep.subr.mxu0 %v616
    %696 = vmatpush1.msra.mxu0 %v615
    %697 = vmatprep.subr.mxu0 %v624
    %698 = vmatpush1.msra.mxu0 %v623
    %699 = vmatprep.subr.mxu0 %v632
    %700 = vmatpush1.msra.mxu0 %v631
    %701 = vmatprep.subr.mxu0 %v640
    %702 = vmatpush1.msra.mxu0 %v639
    %703 = vmatprep.subr.mxu0 %v648
    %704 = vmatpush1.msra.mxu0 %v647
    %705 = vmatprep.subr.mxu0 %v656
    %706 = vmatpush1.msra.mxu0 %v655
    %707 = vmatprep.subr.mxu0 %v664
    %708 = vmatpush1.msra.mxu0 %v663
    %709 = vmatprep.subr.mxu0 %v672
    %710 = vmatpush1.msra.mxu0 %v671
    %711 = vmatprep.subr.mxu0 0.0
    %712 = vmatpush1.msra.mxu0 0.0
    %713 = vmatprep.subr.mxu0 0.0
    %714 = vmatpush1.msra.mxu0 0.0
    %715 = vmatprep.subr.mxu0 0.0
    %716 = vmatpush1.msra.mxu0 0.0
    %717 = vmatprep.subr.mxu0 0.0
    %718 = vmatpush1.msra.mxu0 0.0
    %719 = vmatprep.subr.mxu0 0.0
    %720 = vmatpush1.msra.mxu0 0.0
    %721 = vmatprep.subr.mxu0 0.0
    %722 = vmatpush1.msra.mxu0 0.0
    %723 = vmatprep.subr.mxu0 0.0
    %724 = vmatpush1.msra.mxu0 0.0
    %725 = vmatprep.subr.mxu0 0.0
    %726 = vmatpush1.msra.mxu0 0.0
    %727 = vmatprep.subr.mxu0 0.0
    %728 = vmatpush1.msra.mxu0 0.0
    %729 = vmatprep.subr.mxu0 0.0
    %730 = vmatpush1.msra.mxu0 0.0
    %731 = vmatprep.subr.mxu0 0.0
    %732 = vmatpush1.msra.mxu0 0.0
    %733 = vmatprep.subr.mxu0 0.0
    %734 = vmatpush1.msra.mxu0 0.0
    %735 = vmatprep.subr.mxu0 0.0
    %736 = vmatpush1.msra.mxu0 0.0
    %737 = vmatprep.subr.mxu0 0.0
    %738 = vmatpush1.msra.mxu0 0.0
    %739 = vmatprep.subr.mxu0 0.0
    %740 = vmatpush1.msra.mxu0 0.0
    %741 = vmatprep.subr.mxu0 0.0
    %742 = vmatpush1.msra.mxu0 0.0
    %743 = vmatprep.mubr.f32.mxu0 0.0
    %744 = vmatmul.mubr.f32.gmra.mrb[0].mxu0 0.0
    %v745 = vpop.f32.mrb[0].mxu0
    %v746 = vadd.f32 0.0, %v745
    %v747 = vpop.f32.mrb[0].mxu0
    %v748 = vadd.f32 0.0, %v747
    %749 = vdwg.mxu0
    %750 = vmatprep.subr.mxu0 %v554
    %751 = vmatpush1.msra.mxu0 %v553
    %752 = vmatprep.subr.mxu0 %v562
    %753 = vmatpush1.msra.mxu0 %v561
    %754 = vmatprep.subr.mxu0 %v570
    %755 = vmatpush1.msra.mxu0 %v569
    %756 = vmatprep.subr.mxu0 %v578
    %757 = vmatpush1.msra.mxu0 %v577
    %758 = vmatprep.subr.mxu0 %v586
    %759 = vmatpush1.msra.mxu0 %v585
    %760 = vmatprep.subr.mxu0 %v594
    %761 = vmatpush1.msra.mxu0 %v593
    %762 = vmatprep.subr.mxu0 %v602
    %763 = vmatpush1.msra.mxu0 %v601
    %764 = vmatprep.subr.mxu0 %v610
    %765 = vmatpush1.msra.mxu0 %v609
    %766 = vmatprep.subr.mxu0 %v618
    %767 = vmatpush1.msra.mxu0 %v617
    %768 = vmatprep.subr.mxu0 %v626
    %769 = vmatpush1.msra.mxu0 %v625
    %770 = vmatprep.subr.mxu0 %v634
    %771 = vmatpush1.msra.mxu0 %v633
    %772 = vmatprep.subr.mxu0 %v642
    %773 = vmatpush1.msra.mxu0 %v641
    %774 = vmatprep.subr.mxu0 %v650
    %775 = vmatpush1.msra.mxu0 %v649
    %776 = vmatprep.subr.mxu0 %v658
    %777 = vmatpush1.msra.mxu0 %v657
    %778 = vmatprep.subr.mxu0 %v666
    %779 = vmatpush1.msra.mxu0 %v665
    %780 = vmatprep.subr.mxu0 %v674
    %781 = vmatpush1.msra.mxu0 %v673
    %782 = vmatprep.subr.mxu0 0.0
    %783 = vmatpush1.msra.mxu0 0.0
    %784 = vmatprep.subr.mxu0 0.0
    %785 = vmatpush1.msra.mxu0 0.0
    %786 = vmatprep.subr.mxu0 0.0
    %787 = vmatpush1.msra.mxu0 0.0
    %788 = vmatprep.subr.mxu0 0.0
    %789 = vmatpush1.msra.mxu0 0.0
    %790 = vmatprep.subr.mxu0 0.0
    %791 = vmatpush1.msra.mxu0 0.0
    %792 = vmatprep.subr.mxu0 0.0
    %793 = vmatpush1.msra.mxu0 0.0
    %794 = vmatprep.subr.mxu0 0.0
    %795 = vmatpush1.msra.mxu0 0.0
    %796 = vmatprep.subr.mxu0 0.0
    %797 = vmatpush1.msra.mxu0 0.0
    %798 = vmatprep.subr.mxu0 0.0
    %799 = vmatpush1.msra.mxu0 0.0
    %800 = vmatprep.subr.mxu0 0.0
    %801 = vmatpush1.msra.mxu0 0.0
    %802 = vmatprep.subr.mxu0 0.0
    %803 = vmatpush1.msra.mxu0 0.0
    %804 = vmatprep.subr.mxu0 0.0
    %805 = vmatpush1.msra.mxu0 0.0
    %806 = vmatprep.subr.mxu0 0.0
    %807 = vmatpush1.msra.mxu0 0.0
    %808 = vmatprep.subr.mxu0 0.0
    %809 = vmatpush1.msra.mxu0 0.0
    %810 = vmatprep.subr.mxu0 0.0
    %811 = vmatpush1.msra.mxu0 0.0
    %812 = vmatprep.subr.mxu0 0.0
    %813 = vmatpush1.msra.mxu0 0.0
    %814 = vmatprep.mubr.f32.mxu0 0.0
    %815 = vmatmul.mubr.f32.gmra.mrb[0].mxu0 0.0
    %v816 = vpop.f32.mrb[0].mxu0
    %v817 = vadd.f32 0.0, %v816
    %v818 = vpop.f32.mrb[0].mxu0
    %v819 = vadd.f32 0.0, %v818
    %820 = vdwg.mxu0
    %821 = vmatprep.subr.mxu0 %v556
    %822 = vmatpush1.msra.mxu0 %v555
    %823 = vmatprep.subr.mxu0 %v564
    %824 = vmatpush1.msra.mxu0 %v563
    %825 = vmatprep.subr.mxu0 %v572
    %826 = vmatpush1.msra.mxu0 %v571
    %827 = vmatprep.subr.mxu0 %v580
    %828 = vmatpush1.msra.mxu0 %v579
    %829 = vmatprep.subr.mxu0 %v588
    %830 = vmatpush1.msra.mxu0 %v587
    %831 = vmatprep.subr.mxu0 %v596
    %832 = vmatpush1.msra.mxu0 %v595
    %833 = vmatprep.subr.mxu0 %v604
    %834 = vmatpush1.msra.mxu0 %v603
    %835 = vmatprep.subr.mxu0 %v612
    %836 = vmatpush1.msra.mxu0 %v611
    %837 = vmatprep.subr.mxu0 %v620
    %838 = vmatpush1.msra.mxu0 %v619
    %839 = vmatprep.subr.mxu0 %v628
    %840 = vmatpush1.msra.mxu0 %v627
    %841 = vmatprep.subr.mxu0 %v636
    %842 = vmatpush1.msra.mxu0 %v635
    %843 = vmatprep.subr.mxu0 %v644
    %844 = vmatpush1.msra.mxu0 %v643
    %845 = vmatprep.subr.mxu0 %v652
    %846 = vmatpush1.msra.mxu0 %v651
    %847 = vmatprep.subr.mxu0 %v660
    %848 = vmatpush1.msra.mxu0 %v659
    %849 = vmatprep.subr.mxu0 %v668
    %850 = vmatpush1.msra.mxu0 %v667
    %851 = vmatprep.subr.mxu0 %v676
    %852 = vmatpush1.msra.mxu0 %v675
    %853 = vmatprep.subr.mxu0 0.0
    %854 = vmatpush1.msra.mxu0 0.0
    %855 = vmatprep.subr.mxu0 0.0
    %856 = vmatpush1.msra.mxu0 0.0
    %857 = vmatprep.subr.mxu0 0.0
    %858 = vmatpush1.msra.mxu0 0.0
    %859 = vmatprep.subr.mxu0 0.0
    %860 = vmatpush1.msra.mxu0 0.0
    %861 = vmatprep.subr.mxu0 0.0
    %862 = vmatpush1.msra.mxu0 0.0
    %863 = vmatprep.subr.mxu0 0.0
    %864 = vmatpush1.msra.mxu0 0.0
    %865 = vmatprep.subr.mxu0 0.0
    %866 = vmatpush1.msra.mxu0 0.0
    %867 = vmatprep.subr.mxu0 0.0
    %868 = vmatpush1.msra.mxu0 0.0
    %869 = vmatprep.subr.mxu0 0.0
    %870 = vmatpush1.msra.mxu0 0.0
    %871 = vmatprep.subr.mxu0 0.0
    %872 = vmatpush1.msra.mxu0 0.0
    %873 = vmatprep.subr.mxu0 0.0
    %874 = vmatpush1.msra.mxu0 0.0
    %875 = vmatprep.subr.mxu0 0.0
    %876 = vmatpush1.msra.mxu0 0.0
    %877 = vmatprep.subr.mxu0 0.0
    %878 = vmatpush1.msra.mxu0 0.0
    %879 = vmatprep.subr.mxu0 0.0
    %880 = vmatpush1.msra.mxu0 0.0
    %881 = vmatprep.subr.mxu0 0.0
    %882 = vmatpush1.msra.mxu0 0.0
    %883 = vmatprep.subr.mxu0 0.0
    %884 = vmatpush1.msra.mxu0 0.0
    %885 = vmatprep.mubr.f32.mxu0 0.0
    %886 = vmatmul.mubr.f32.gmra.mrb[0].mxu0 0.0
    %v887 = vpop.f32.mrb[0].mxu0
    %v888 = vadd.f32 0.0, %v887
    %v889 = vpop.f32.mrb[0].mxu0
    %v890 = vadd.f32 0.0, %v889
    %891 = vdwg.mxu0
    %892 = vmatprep.subr.mxu0 %v558
    %893 = vmatpush1.msra.mxu0 %v557
    %894 = vmatprep.subr.mxu0 %v566
    %895 = vmatpush1.msra.mxu0 %v565
    %896 = vmatprep.subr.mxu0 %v574
    %897 = vmatpush1.msra.mxu0 %v573
    %898 = vmatprep.subr.mxu0 %v582
    %899 = vmatpush1.msra.mxu0 %v581
    %900 = vmatprep.subr.mxu0 %v590
    %901 = vmatpush1.msra.mxu0 %v589
    %902 = vmatprep.subr.mxu0 %v598
    %903 = vmatpush1.msra.mxu0 %v597
    %904 = vmatprep.subr.mxu0 %v606
    %905 = vmatpush1.msra.mxu0 %v605
    %906 = vmatprep.subr.mxu0 %v614
    %907 = vmatpush1.msra.mxu0 %v613
    %908 = vmatprep.subr.mxu0 %v622
    %909 = vmatpush1.msra.mxu0 %v621
    %910 = vmatprep.subr.mxu0 %v630
    %911 = vmatpush1.msra.mxu0 %v629
    %912 = vmatprep.subr.mxu0 %v638
    %913 = vmatpush1.msra.mxu0 %v637
    %914 = vmatprep.subr.mxu0 %v646
    %915 = vmatpush1.msra.mxu0 %v645
    %916 = vmatprep.subr.mxu0 %v654
    %917 = vmatpush1.msra.mxu0 %v653
    %918 = vmatprep.subr.mxu0 %v662
    %919 = vmatpush1.msra.mxu0 %v661
    %920 = vmatprep.subr.mxu0 %v670
    %921 = vmatpush1.msra.mxu0 %v669
    %922 = vmatprep.subr.mxu0 %v678
    %923 = vmatpush1.msra.mxu0 %v677
    %924 = vmatprep.subr.mxu0 0.0
    %925 = vmatpush1.msra.mxu0 0.0
    %926 = vmatprep.subr.mxu0 0.0
    %927 = vmatpush1.msra.mxu0 0.0
    %928 = vmatprep.subr.mxu0 0.0
    %929 = vmatpush1.msra.mxu0 0.0
    %930 = vmatprep.subr.mxu0 0.0
    %931 = vmatpush1.msra.mxu0 0.0
    %932 = vmatprep.subr.mxu0 0.0
    %933 = vmatpush1.msra.mxu0 0.0
    %934 = vmatprep.subr.mxu0 0.0
    %935 = vmatpush1.msra.mxu0 0.0
    %936 = vmatprep.subr.mxu0 0.0
    %937 = vmatpush1.msra.mxu0 0.0
    %938 = vmatprep.subr.mxu0 0.0
    %939 = vmatpush1.msra.mxu0 0.0
    %940 = vmatprep.subr.mxu0 0.0
    %941 = vmatpush1.msra.mxu0 0.0
    %942 = vmatprep.subr.mxu0 0.0
    %943 = vmatpush1.msra.mxu0 0.0
    %944 = vmatprep.subr.mxu0 0.0
    %945 = vmatpush1.msra.mxu0 0.0
    %946 = vmatprep.subr.mxu0 0.0
    %947 = vmatpush1.msra.mxu0 0.0
    %948 = vmatprep.subr.mxu0 0.0
    %949 = vmatpush1.msra.mxu0 0.0
    %950 = vmatprep.subr.mxu0 0.0
    %951 = vmatpush1.msra.mxu0 0.0
    %952 = vmatprep.subr.mxu0 0.0
    %953 = vmatpush1.msra.mxu0 0.0
    %954 = vmatprep.subr.mxu0 0.0
    %955 = vmatpush1.msra.mxu0 0.0
    %956 = vmatprep.mubr.f32.mxu0 0.0
    %957 = vmatmul.mubr.f32.gmra.mrb[0].mxu0 0.0
    %v958 = vpop.f32.mrb[0].mxu0
    %v959 = vadd.f32 0.0, %v958
    %v960 = vpop.f32.mrb[0].mxu0
    %v961 = vadd.f32 0.0, %v960
    %962 = vdwg.mxu0
    %v963 = vsel %vm550, %v746, %v888
    %v964 = vsel %vm550, %v748, %v890
    %v965 = vsel %vm550, %v817, %v959
    %v966 = vsel %vm550, %v819, %v961
    %v967 = vadd.f32 %v389, %v963
    %v968 = vadd.f32 %v391, %v964
    %v969 = vadd.f32 %v502, %v965
    %v970 = vadd.f32 %v504, %v966
    %v971 = vxor.u32 %v967, 2147483648
    %v972 = vxor.u32 %v968, 2147483648
    %v973 = vxor.u32 %v969, 2147483648
    %v974 = vmul.f32 %v971, 1.442695
    %v975 = vpow.pop %v974
    %v976 = vmul.f32 %v972, 1.442695
    %v977 = vpow.pop %v976
    %v978 = vmul.f32 %v973, 1.442695
    %v979 = vpow.pop %v978
    %v980 = vadd.f32 %v975, 1.0
    %v981 = vadd.f32 %v977, 1.0
    %v982 = vadd.f32 %v979, 1.0
    %v983 = vrcp.pop %v980
    %v984 = vmul.f32 1.0, %v983
    %v985 = vrcp.pop %v981
    %v986 = vmul.f32 1.0, %v985
    %v987 = vrcp.pop %v982
    %v988 = vmul.f32 1.0, %v987
    %v989 = vtanh.pop %v970
    %v990 = vmul.f32 %v986, 0.0
    %v991 = vmul.f32 %v984, %v989
    %v992 = vadd.f32 %v990, %v991
    %v993 = vtanh.pop %v992
    %v994 = vmul.f32 %v988, %v993
    %995 = vmatprep.subr.mxu0 %v552
    %996 = vmatpush1.msra.mxu0 %v551
    %997 = vmatprep.subr.mxu0 %v560
    %998 = vmatpush1.msra.mxu0 %v559
    %999 = vmatprep.subr.mxu0 %v568
    %1000 = vmatpush1.msra.mxu0 %v567
    %1001 = vmatprep.subr.mxu0 %v576
    %1002 = vmatpush1.msra.mxu0 %v575
    %1003 = vmatprep.subr.mxu0 %v584
    %1004 = vmatpush1.msra.mxu0 %v583
    %1005 = vmatprep.subr.mxu0 %v592
    %1006 = vmatpush1.msra.mxu0 %v591
    %1007 = vmatprep.subr.mxu0 %v600
    %1008 = vmatpush1.msra.mxu0 %v599
    %1009 = vmatprep.subr.mxu0 %v608
    %1010 = vmatpush1.msra.mxu0 %v607
    %1011 = vmatprep.subr.mxu0 %v616
    %1012 = vmatpush1.msra.mxu0 %v615
    %1013 = vmatprep.subr.mxu0 %v624
    %1014 = vmatpush1.msra.mxu0 %v623
    %1015 = vmatprep.subr.mxu0 %v632
    %1016 = vmatpush1.msra.mxu0 %v631
    %1017 = vmatprep.subr.mxu0 %v640
    %1018 = vmatpush1.msra.mxu0 %v639
    %1019 = vmatprep.subr.mxu0 %v648
    %1020 = vmatpush1.msra.mxu0 %v647
    %1021 = vmatprep.subr.mxu0 %v656
    %1022 = vmatpush1.msra.mxu0 %v655
    %1023 = vmatprep.subr.mxu0 %v664
    %1024 = vmatpush1.msra.mxu0 %v663
    %1025 = vmatprep.subr.mxu0 %v672
    %1026 = vmatpush1.msra.mxu0 %v671
    %1027 = vmatprep.subr.mxu0 0.0
    %1028 = vmatpush1.msra.mxu0 0.0
    %1029 = vmatprep.subr.mxu0 0.0
    %1030 = vmatpush1.msra.mxu0 0.0
    %1031 = vmatprep.subr.mxu0 0.0
    %1032 = vmatpush1.msra.mxu0 0.0
    %1033 = vmatprep.subr.mxu0 0.0
    %1034 = vmatpush1.msra.mxu0 0.0
    %1035 = vmatprep.subr.mxu0 0.0
    %1036 = vmatpush1.msra.mxu0 0.0
    %1037 = vmatprep.subr.mxu0 0.0
    %1038 = vmatpush1.msra.mxu0 0.0
    %1039 = vmatprep.subr.mxu0 0.0
    %1040 = vmatpush1.msra.mxu0 0.0
    %1041 = vmatprep.subr.mxu0 0.0
    %1042 = vmatpush1.msra.mxu0 0.0
    %1043 = vmatprep.subr.mxu0 0.0
    %1044 = vmatpush1.msra.mxu0 0.0
    %1045 = vmatprep.subr.mxu0 0.0
    %1046 = vmatpush1.msra.mxu0 0.0
    %1047 = vmatprep.subr.mxu0 0.0
    %1048 = vmatpush1.msra.mxu0 0.0
    %1049 = vmatprep.subr.mxu0 0.0
    %1050 = vmatpush1.msra.mxu0 0.0
    %1051 = vmatprep.subr.mxu0 0.0
    %1052 = vmatpush1.msra.mxu0 0.0
    %1053 = vmatprep.subr.mxu0 0.0
    %1054 = vmatpush1.msra.mxu0 0.0
    %1055 = vmatprep.subr.mxu0 0.0
    %1056 = vmatpush1.msra.mxu0 0.0
    %1057 = vmatprep.subr.mxu0 0.0
    %1058 = vmatpush1.msra.mxu0 0.0
    %1059 = vmatprep.mubr.f32.mxu0 0.0
    %1060 = vmatmul.mubr.f32.gmra.mrb[0].mxu0 %v994
    %v1061 = vpop.f32.mrb[0].mxu0
    %v1062 = vadd.f32 0.0, %v1061
    %v1063 = vpop.f32.mrb[0].mxu0
    %v1064 = vadd.f32 0.0, %v1063
    %1065 = vdwg.mxu0
    %1066 = vmatprep.subr.mxu0 %v554
    %1067 = vmatpush1.msra.mxu0 %v553
    %1068 = vmatprep.subr.mxu0 %v562
    %1069 = vmatpush1.msra.mxu0 %v561
    %1070 = vmatprep.subr.mxu0 %v570
    %1071 = vmatpush1.msra.mxu0 %v569
    %1072 = vmatprep.subr.mxu0 %v578
    %1073 = vmatpush1.msra.mxu0 %v577
    %1074 = vmatprep.subr.mxu0 %v586
    %1075 = vmatpush1.msra.mxu0 %v585
    %1076 = vmatprep.subr.mxu0 %v594
    %1077 = vmatpush1.msra.mxu0 %v593
    %1078 = vmatprep.subr.mxu0 %v602
    %1079 = vmatpush1.msra.mxu0 %v601
    %1080 = vmatprep.subr.mxu0 %v610
    %1081 = vmatpush1.msra.mxu0 %v609
    %1082 = vmatprep.subr.mxu0 %v618
    %1083 = vmatpush1.msra.mxu0 %v617
    %1084 = vmatprep.subr.mxu0 %v626
    %1085 = vmatpush1.msra.mxu0 %v625
    %1086 = vmatprep.subr.mxu0 %v634
    %1087 = vmatpush1.msra.mxu0 %v633
    %1088 = vmatprep.subr.mxu0 %v642
    %1089 = vmatpush1.msra.mxu0 %v641
    %1090 = vmatprep.subr.mxu0 %v650
    %1091 = vmatpush1.msra.mxu0 %v649
    %1092 = vmatprep.subr.mxu0 %v658
    %1093 = vmatpush1.msra.mxu0 %v657
    %1094 = vmatprep.subr.mxu0 %v666
    %1095 = vmatpush1.msra.mxu0 %v665
    %1096 = vmatprep.subr.mxu0 %v674
    %1097 = vmatpush1.msra.mxu0 %v673
    %1098 = vmatprep.subr.mxu0 0.0
    %1099 = vmatpush1.msra.mxu0 0.0
    %1100 = vmatprep.subr.mxu0 0.0
    %1101 = vmatpush1.msra.mxu0 0.0
    %1102 = vmatprep.subr.mxu0 0.0
    %1103 = vmatpush1.msra.mxu0 0.0
    %1104 = vmatprep.subr.mxu0 0.0
    %1105 = vmatpush1.msra.mxu0 0.0
    %1106 = vmatprep.subr.mxu0 0.0
    %1107 = vmatpush1.msra.mxu0 0.0
    %1108 = vmatprep.subr.mxu0 0.0
    %1109 = vmatpush1.msra.mxu0 0.0
    %1110 = vmatprep.subr.mxu0 0.0
    %1111 = vmatpush1.msra.mxu0 0.0
    %1112 = vmatprep.subr.mxu0 0.0
    %1113 = vmatpush1.msra.mxu0 0.0
    %1114 = vmatprep.subr.mxu0 0.0
    %1115 = vmatpush1.msra.mxu0 0.0
    %1116 = vmatprep.subr.mxu0 0.0
    %1117 = vmatpush1.msra.mxu0 0.0
    %1118 = vmatprep.subr.mxu0 0.0
    %1119 = vmatpush1.msra.mxu0 0.0
    %1120 = vmatprep.subr.mxu0 0.0
    %1121 = vmatpush1.msra.mxu0 0.0
    %1122 = vmatprep.subr.mxu0 0.0
    %1123 = vmatpush1.msra.mxu0 0.0
    %1124 = vmatprep.subr.mxu0 0.0
    %1125 = vmatpush1.msra.mxu0 0.0
    %1126 = vmatprep.subr.mxu0 0.0
    %1127 = vmatpush1.msra.mxu0 0.0
    %1128 = vmatprep.subr.mxu0 0.0
    %1129 = vmatpush1.msra.mxu0 0.0
    %1130 = vmatprep.mubr.f32.mxu0 0.0
    %1131 = vmatmul.mubr.f32.gmra.mrb[0].mxu0 %v994
    %v1132 = vpop.f32.mrb[0].mxu0
    %v1133 = vadd.f32 0.0, %v1132
    %v1134 = vpop.f32.mrb[0].mxu0
    %v1135 = vadd.f32 0.0, %v1134
    %1136 = vdwg.mxu0
    %1137 = vmatprep.subr.mxu0 %v556
    %1138 = vmatpush1.msra.mxu0 %v555
    %1139 = vmatprep.subr.mxu0 %v564
    %1140 = vmatpush1.msra.mxu0 %v563
    %1141 = vmatprep.subr.mxu0 %v572
    %1142 = vmatpush1.msra.mxu0 %v571
    %1143 = vmatprep.subr.mxu0 %v580
    %1144 = vmatpush1.msra.mxu0 %v579
    %1145 = vmatprep.subr.mxu0 %v588
    %1146 = vmatpush1.msra.mxu0 %v587
    %1147 = vmatprep.subr.mxu0 %v596
    %1148 = vmatpush1.msra.mxu0 %v595
    %1149 = vmatprep.subr.mxu0 %v604
    %1150 = vmatpush1.msra.mxu0 %v603
    %1151 = vmatprep.subr.mxu0 %v612
    %1152 = vmatpush1.msra.mxu0 %v611
    %1153 = vmatprep.subr.mxu0 %v620
    %1154 = vmatpush1.msra.mxu0 %v619
    %1155 = vmatprep.subr.mxu0 %v628
    %1156 = vmatpush1.msra.mxu0 %v627
    %1157 = vmatprep.subr.mxu0 %v636
    %1158 = vmatpush1.msra.mxu0 %v635
    %1159 = vmatprep.subr.mxu0 %v644
    %1160 = vmatpush1.msra.mxu0 %v643
    %1161 = vmatprep.subr.mxu0 %v652
    %1162 = vmatpush1.msra.mxu0 %v651
    %1163 = vmatprep.subr.mxu0 %v660
    %1164 = vmatpush1.msra.mxu0 %v659
    %1165 = vmatprep.subr.mxu0 %v668
    %1166 = vmatpush1.msra.mxu0 %v667
    %1167 = vmatprep.subr.mxu0 %v676
    %1168 = vmatpush1.msra.mxu0 %v675
    %1169 = vmatprep.subr.mxu0 0.0
    %1170 = vmatpush1.msra.mxu0 0.0
    %1171 = vmatprep.subr.mxu0 0.0
    %1172 = vmatpush1.msra.mxu0 0.0
    %1173 = vmatprep.subr.mxu0 0.0
    %1174 = vmatpush1.msra.mxu0 0.0
    %1175 = vmatprep.subr.mxu0 0.0
    %1176 = vmatpush1.msra.mxu0 0.0
    %1177 = vmatprep.subr.mxu0 0.0
    %1178 = vmatpush1.msra.mxu0 0.0
    %1179 = vmatprep.subr.mxu0 0.0
    %1180 = vmatpush1.msra.mxu0 0.0
    %1181 = vmatprep.subr.mxu0 0.0
    %1182 = vmatpush1.msra.mxu0 0.0
    %1183 = vmatprep.subr.mxu0 0.0
    %1184 = vmatpush1.msra.mxu0 0.0
    %1185 = vmatprep.subr.mxu0 0.0
    %1186 = vmatpush1.msra.mxu0 0.0
    %1187 = vmatprep.subr.mxu0 0.0
    %1188 = vmatpush1.msra.mxu0 0.0
    %1189 = vmatprep.subr.mxu0 0.0
    %1190 = vmatpush1.msra.mxu0 0.0
    %1191 = vmatprep.subr.mxu0 0.0
    %1192 = vmatpush1.msra.mxu0 0.0
    %1193 = vmatprep.subr.mxu0 0.0
    %1194 = vmatpush1.msra.mxu0 0.0
    %1195 = vmatprep.subr.mxu0 0.0
    %1196 = vmatpush1.msra.mxu0 0.0
    %1197 = vmatprep.subr.mxu0 0.0
    %1198 = vmatpush1.msra.mxu0 0.0
    %1199 = vmatprep.subr.mxu0 0.0
    %1200 = vmatpush1.msra.mxu0 0.0
    %1201 = vmatprep.mubr.f32.mxu0 0.0
    %1202 = vmatmul.mubr.f32.gmra.mrb[0].mxu0 %v994
    %v1203 = vpop.f32.mrb[0].mxu0
    %v1204 = vadd.f32 0.0, %v1203
    %v1205 = vpop.f32.mrb[0].mxu0
    %v1206 = vadd.f32 0.0, %v1205
    %1207 = vdwg.mxu0
    %1208 = vmatprep.subr.mxu0 %v558
    %1209 = vmatpush1.msra.mxu0 %v557
    %1210 = vmatprep.subr.mxu0 %v566
    %1211 = vmatpush1.msra.mxu0 %v565
    %1212 = vmatprep.subr.mxu0 %v574
    %1213 = vmatpush1.msra.mxu0 %v573
    %1214 = vmatprep.subr.mxu0 %v582
    %1215 = vmatpush1.msra.mxu0 %v581
    %1216 = vmatprep.subr.mxu0 %v590
    %1217 = vmatpush1.msra.mxu0 %v589
    %1218 = vmatprep.subr.mxu0 %v598
    %1219 = vmatpush1.msra.mxu0 %v597
    %1220 = vmatprep.subr.mxu0 %v606
    %1221 = vmatpush1.msra.mxu0 %v605
    %1222 = vmatprep.subr.mxu0 %v614
    %1223 = vmatpush1.msra.mxu0 %v613
    %1224 = vmatprep.subr.mxu0 %v622
    %1225 = vmatpush1.msra.mxu0 %v621
    %1226 = vmatprep.subr.mxu0 %v630
    %1227 = vmatpush1.msra.mxu0 %v629
    %1228 = vmatprep.subr.mxu0 %v638
    %1229 = vmatpush1.msra.mxu0 %v637
    %1230 = vmatprep.subr.mxu0 %v646
    %1231 = vmatpush1.msra.mxu0 %v645
    %1232 = vmatprep.subr.mxu0 %v654
    %1233 = vmatpush1.msra.mxu0 %v653
    %1234 = vmatprep.subr.mxu0 %v662
    %1235 = vmatpush1.msra.mxu0 %v661
    %1236 = vmatprep.subr.mxu0 %v670
    %1237 = vmatpush1.msra.mxu0 %v669
    %1238 = vmatprep.subr.mxu0 %v678
    %1239 = vmatpush1.msra.mxu0 %v677
    %1240 = vmatprep.subr.mxu0 0.0
    %1241 = vmatpush1.msra.mxu0 0.0
    %1242 = vmatprep.subr.mxu0 0.0
    %1243 = vmatpush1.msra.mxu0 0.0
    %1244 = vmatprep.subr.mxu0 0.0
    %1245 = vmatpush1.msra.mxu0 0.0
    %1246 = vmatprep.subr.mxu0 0.0
    %1247 = vmatpush1.msra.mxu0 0.0
    %1248 = vmatprep.subr.mxu0 0.0
    %1249 = vmatpush1.msra.mxu0 0.0
    %1250 = vmatprep.subr.mxu0 0.0
    %1251 = vmatpush1.msra.mxu0 0.0
    %1252 = vmatprep.subr.mxu0 0.0
    %1253 = vmatpush1.msra.mxu0 0.0
    %1254 = vmatprep.subr.mxu0 0.0
    %1255 = vmatpush1.msra.mxu0 0.0
    %1256 = vmatprep.subr.mxu0 0.0
    %1257 = vmatpush1.msra.mxu0 0.0
    %1258 = vmatprep.subr.mxu0 0.0
    %1259 = vmatpush1.msra.mxu0 0.0
    %1260 = vmatprep.subr.mxu0 0.0
    %1261 = vmatpush1.msra.mxu0 0.0
    %1262 = vmatprep.subr.mxu0 0.0
    %1263 = vmatpush1.msra.mxu0 0.0
    %1264 = vmatprep.subr.mxu0 0.0
    %1265 = vmatpush1.msra.mxu0 0.0
    %1266 = vmatprep.subr.mxu0 0.0
    %1267 = vmatpush1.msra.mxu0 0.0
    %1268 = vmatprep.subr.mxu0 0.0
    %1269 = vmatpush1.msra.mxu0 0.0
    %1270 = vmatprep.subr.mxu0 0.0
    %1271 = vmatpush1.msra.mxu0 0.0
    %1272 = vmatprep.mubr.f32.mxu0 0.0
    %1273 = vmatmul.mubr.f32.gmra.mrb[0].mxu0 %v994
    %v1274 = vpop.f32.mrb[0].mxu0
    %v1275 = vadd.f32 0.0, %v1274
    %v1276 = vpop.f32.mrb[0].mxu0
    %v1277 = vadd.f32 0.0, %v1276
    %1278 = vdwg.mxu0
    %v1279 = vsel %vm550, %v1062, %v1204
    %v1280 = vsel %vm550, %v1064, %v1206
    %v1281 = vsel %vm550, %v1133, %v1275
    %v1282 = vsel %vm550, %v1135, %v1277
    %v1283 = vadd.f32 %v395, %v1279
    %v1284 = vadd.f32 %v397, %v1280
    %v1285 = vadd.f32 %v508, %v1281
    %v1286 = vadd.f32 %v510, %v1282
    %v1287 = vxor.u32 %v1283, 2147483648
    %v1288 = vxor.u32 %v1284, 2147483648
    %v1289 = vxor.u32 %v1285, 2147483648
    %v1290 = vmul.f32 %v1287, 1.442695
    %v1291 = vpow.pop %v1290
    %v1292 = vmul.f32 %v1288, 1.442695
    %v1293 = vpow.pop %v1292
    %v1294 = vmul.f32 %v1289, 1.442695
    %v1295 = vpow.pop %v1294
    %v1296 = vadd.f32 %v1291, 1.0
    %v1297 = vadd.f32 %v1293, 1.0
    %v1298 = vadd.f32 %v1295, 1.0
    %v1299 = vrcp.pop %v1296
    %v1300 = vmul.f32 1.0, %v1299
    %v1301 = vrcp.pop %v1297
    %v1302 = vmul.f32 1.0, %v1301
    %v1303 = vrcp.pop %v1298
    %v1304 = vmul.f32 1.0, %v1303
    %v1305 = vtanh.pop %v1286
    %v1306 = vmul.f32 %v1302, %v992
    %v1307 = vmul.f32 %v1300, %v1305
    %v1308 = vadd.f32 %v1306, %v1307
    %v1309 = vtanh.pop %v1308
    %v1310 = vmul.f32 %v1304, %v1309
    %1311 = vmatprep.subr.mxu0 %v552
    %1312 = vmatpush1.msra.mxu0 %v551
    %1313 = vmatprep.subr.mxu0 %v560
    %1314 = vmatpush1.msra.mxu0 %v559
    %1315 = vmatprep.subr.mxu0 %v568
    %1316 = vmatpush1.msra.mxu0 %v567
    %1317 = vmatprep.subr.mxu0 %v576
    %1318 = vmatpush1.msra.mxu0 %v575
    %1319 = vmatprep.subr.mxu0 %v584
    %1320 = vmatpush1.msra.mxu0 %v583
    %1321 = vmatprep.subr.mxu0 %v592
    %1322 = vmatpush1.msra.mxu0 %v591
    %1323 = vmatprep.subr.mxu0 %v600
    %1324 = vmatpush1.msra.mxu0 %v599
    %1325 = vmatprep.subr.mxu0 %v608
    %1326 = vmatpush1.msra.mxu0 %v607
    %1327 = vmatprep.subr.mxu0 %v616
    %1328 = vmatpush1.msra.mxu0 %v615
    %1329 = vmatprep.subr.mxu0 %v624
    %1330 = vmatpush1.msra.mxu0 %v623
    %1331 = vmatprep.subr.mxu0 %v632
    %1332 = vmatpush1.msra.mxu0 %v631
    %1333 = vmatprep.subr.mxu0 %v640
    %1334 = vmatpush1.msra.mxu0 %v639
    %1335 = vmatprep.subr.mxu0 %v648
    %1336 = vmatpush1.msra.mxu0 %v647
    %1337 = vmatprep.subr.mxu0 %v656
    %1338 = vmatpush1.msra.mxu0 %v655
    %1339 = vmatprep.subr.mxu0 %v664
    %1340 = vmatpush1.msra.mxu0 %v663
    %1341 = vmatprep.subr.mxu0 %v672
    %1342 = vmatpush1.msra.mxu0 %v671
    %1343 = vmatprep.subr.mxu0 0.0
    %1344 = vmatpush1.msra.mxu0 0.0
    %1345 = vmatprep.subr.mxu0 0.0
    %1346 = vmatpush1.msra.mxu0 0.0
    %1347 = vmatprep.subr.mxu0 0.0
    %1348 = vmatpush1.msra.mxu0 0.0
    %1349 = vmatprep.subr.mxu0 0.0
    %1350 = vmatpush1.msra.mxu0 0.0
    %1351 = vmatprep.subr.mxu0 0.0
    %1352 = vmatpush1.msra.mxu0 0.0
    %1353 = vmatprep.subr.mxu0 0.0
    %1354 = vmatpush1.msra.mxu0 0.0
    %1355 = vmatprep.subr.mxu0 0.0
    %1356 = vmatpush1.msra.mxu0 0.0
    %1357 = vmatprep.subr.mxu0 0.0
    %1358 = vmatpush1.msra.mxu0 0.0
    %1359 = vmatprep.subr.mxu0 0.0
    %1360 = vmatpush1.msra.mxu0 0.0
    %1361 = vmatprep.subr.mxu0 0.0
    %1362 = vmatpush1.msra.mxu0 0.0
    %1363 = vmatprep.subr.mxu0 0.0
    %1364 = vmatpush1.msra.mxu0 0.0
    %1365 = vmatprep.subr.mxu0 0.0
    %1366 = vmatpush1.msra.mxu0 0.0
    %1367 = vmatprep.subr.mxu0 0.0
    %1368 = vmatpush1.msra.mxu0 0.0
    %1369 = vmatprep.subr.mxu0 0.0
    %1370 = vmatpush1.msra.mxu0 0.0
    %1371 = vmatprep.subr.mxu0 0.0
    %1372 = vmatpush1.msra.mxu0 0.0
    %1373 = vmatprep.subr.mxu0 0.0
    %1374 = vmatpush1.msra.mxu0 0.0
    %1375 = vmatprep.mubr.f32.mxu0 0.0
    %1376 = vmatmul.mubr.f32.gmra.mrb[0].mxu0 %v1310
    %v1377 = vpop.f32.mrb[0].mxu0
    %v1378 = vadd.f32 0.0, %v1377
    %v1379 = vpop.f32.mrb[0].mxu0
    %v1380 = vadd.f32 0.0, %v1379
    %1381 = vdwg.mxu0
    %1382 = vmatprep.subr.mxu0 %v554
    %1383 = vmatpush1.msra.mxu0 %v553
    %1384 = vmatprep.subr.mxu0 %v562
    %1385 = vmatpush1.msra.mxu0 %v561
    %1386 = vmatprep.subr.mxu0 %v570
    %1387 = vmatpush1.msra.mxu0 %v569
    %1388 = vmatprep.subr.mxu0 %v578
    %1389 = vmatpush1.msra.mxu0 %v577
    %1390 = vmatprep.subr.mxu0 %v586
    %1391 = vmatpush1.msra.mxu0 %v585
    %1392 = vmatprep.subr.mxu0 %v594
    %1393 = vmatpush1.msra.mxu0 %v593
    %1394 = vmatprep.subr.mxu0 %v602
    %1395 = vmatpush1.msra.mxu0 %v601
    %1396 = vmatprep.subr.mxu0 %v610
    %1397 = vmatpush1.msra.mxu0 %v609
    %1398 = vmatprep.subr.mxu0 %v618
    %1399 = vmatpush1.msra.mxu0 %v617
    %1400 = vmatprep.subr.mxu0 %v626
    %1401 = vmatpush1.msra.mxu0 %v625
    %1402 = vmatprep.subr.mxu0 %v634
    %1403 = vmatpush1.msra.mxu0 %v633
    %1404 = vmatprep.subr.mxu0 %v642
    %1405 = vmatpush1.msra.mxu0 %v641
    %1406 = vmatprep.subr.mxu0 %v650
    %1407 = vmatpush1.msra.mxu0 %v649
    %1408 = vmatprep.subr.mxu0 %v658
    %1409 = vmatpush1.msra.mxu0 %v657
    %1410 = vmatprep.subr.mxu0 %v666
    %1411 = vmatpush1.msra.mxu0 %v665
    %1412 = vmatprep.subr.mxu0 %v674
    %1413 = vmatpush1.msra.mxu0 %v673
    %1414 = vmatprep.subr.mxu0 0.0
    %1415 = vmatpush1.msra.mxu0 0.0
    %1416 = vmatprep.subr.mxu0 0.0
    %1417 = vmatpush1.msra.mxu0 0.0
    %1418 = vmatprep.subr.mxu0 0.0
    %1419 = vmatpush1.msra.mxu0 0.0
    %1420 = vmatprep.subr.mxu0 0.0
    %1421 = vmatpush1.msra.mxu0 0.0
    %1422 = vmatprep.subr.mxu0 0.0
    %1423 = vmatpush1.msra.mxu0 0.0
    %1424 = vmatprep.subr.mxu0 0.0
    %1425 = vmatpush1.msra.mxu0 0.0
    %1426 = vmatprep.subr.mxu0 0.0
    %1427 = vmatpush1.msra.mxu0 0.0
    %1428 = vmatprep.subr.mxu0 0.0
    %1429 = vmatpush1.msra.mxu0 0.0
    %1430 = vmatprep.subr.mxu0 0.0
    %1431 = vmatpush1.msra.mxu0 0.0
    %1432 = vmatprep.subr.mxu0 0.0
    %1433 = vmatpush1.msra.mxu0 0.0
    %1434 = vmatprep.subr.mxu0 0.0
    %1435 = vmatpush1.msra.mxu0 0.0
    %1436 = vmatprep.subr.mxu0 0.0
    %1437 = vmatpush1.msra.mxu0 0.0
    %1438 = vmatprep.subr.mxu0 0.0
    %1439 = vmatpush1.msra.mxu0 0.0
    %1440 = vmatprep.subr.mxu0 0.0
    %1441 = vmatpush1.msra.mxu0 0.0
    %1442 = vmatprep.subr.mxu0 0.0
    %1443 = vmatpush1.msra.mxu0 0.0
    %1444 = vmatprep.subr.mxu0 0.0
    %1445 = vmatpush1.msra.mxu0 0.0
    %1446 = vmatprep.mubr.f32.mxu0 0.0
    %1447 = vmatmul.mubr.f32.gmra.mrb[0].mxu0 %v1310
    %v1448 = vpop.f32.mrb[0].mxu0
    %v1449 = vadd.f32 0.0, %v1448
    %v1450 = vpop.f32.mrb[0].mxu0
    %v1451 = vadd.f32 0.0, %v1450
    %1452 = vdwg.mxu0
    %1453 = vmatprep.subr.mxu0 %v556
    %1454 = vmatpush1.msra.mxu0 %v555
    %1455 = vmatprep.subr.mxu0 %v564
    %1456 = vmatpush1.msra.mxu0 %v563
    %1457 = vmatprep.subr.mxu0 %v572
    %1458 = vmatpush1.msra.mxu0 %v571
    %1459 = vmatprep.subr.mxu0 %v580
    %1460 = vmatpush1.msra.mxu0 %v579
    %1461 = vmatprep.subr.mxu0 %v588
    %1462 = vmatpush1.msra.mxu0 %v587
    %1463 = vmatprep.subr.mxu0 %v596
    %1464 = vmatpush1.msra.mxu0 %v595
    %1465 = vmatprep.subr.mxu0 %v604
    %1466 = vmatpush1.msra.mxu0 %v603
    %1467 = vmatprep.subr.mxu0 %v612
    %1468 = vmatpush1.msra.mxu0 %v611
    %1469 = vmatprep.subr.mxu0 %v620
    %1470 = vmatpush1.msra.mxu0 %v619
    %1471 = vmatprep.subr.mxu0 %v628
    %1472 = vmatpush1.msra.mxu0 %v627
    %1473 = vmatprep.subr.mxu0 %v636
    %1474 = vmatpush1.msra.mxu0 %v635
    %1475 = vmatprep.subr.mxu0 %v644
    %1476 = vmatpush1.msra.mxu0 %v643
    %1477 = vmatprep.subr.mxu0 %v652
    %1478 = vmatpush1.msra.mxu0 %v651
    %1479 = vmatprep.subr.mxu0 %v660
    %1480 = vmatpush1.msra.mxu0 %v659
    %1481 = vmatprep.subr.mxu0 %v668
    %1482 = vmatpush1.msra.mxu0 %v667
    %1483 = vmatprep.subr.mxu0 %v676
    %1484 = vmatpush1.msra.mxu0 %v675
    %1485 = vmatprep.subr.mxu0 0.0
    %1486 = vmatpush1.msra.mxu0 0.0
    %1487 = vmatprep.subr.mxu0 0.0
    %1488 = vmatpush1.msra.mxu0 0.0
    %1489 = vmatprep.subr.mxu0 0.0
    %1490 = vmatpush1.msra.mxu0 0.0
    %1491 = vmatprep.subr.mxu0 0.0
    %1492 = vmatpush1.msra.mxu0 0.0
    %1493 = vmatprep.subr.mxu0 0.0
    %1494 = vmatpush1.msra.mxu0 0.0
    %1495 = vmatprep.subr.mxu0 0.0
    %1496 = vmatpush1.msra.mxu0 0.0
    %1497 = vmatprep.subr.mxu0 0.0
    %1498 = vmatpush1.msra.mxu0 0.0
    %1499 = vmatprep.subr.mxu0 0.0
    %1500 = vmatpush1.msra.mxu0 0.0
    %1501 = vmatprep.subr.mxu0 0.0
    %1502 = vmatpush1.msra.mxu0 0.0
    %1503 = vmatprep.subr.mxu0 0.0
    %1504 = vmatpush1.msra.mxu0 0.0
    %1505 = vmatprep.subr.mxu0 0.0
    %1506 = vmatpush1.msra.mxu0 0.0
    %1507 = vmatprep.subr.mxu0 0.0
    %1508 = vmatpush1.msra.mxu0 0.0
    %1509 = vmatprep.subr.mxu0 0.0
    %1510 = vmatpush1.msra.mxu0 0.0
    %1511 = vmatprep.subr.mxu0 0.0
    %1512 = vmatpush1.msra.mxu0 0.0
    %1513 = vmatprep.subr.mxu0 0.0
    %1514 = vmatpush1.msra.mxu0 0.0
    %1515 = vmatprep.subr.mxu0 0.0
    %1516 = vmatpush1.msra.mxu0 0.0
    %1517 = vmatprep.mubr.f32.mxu0 0.0
    %1518 = vmatmul.mubr.f32.gmra.mrb[0].mxu0 %v1310
    %v1519 = vpop.f32.mrb[0].mxu0
    %v1520 = vadd.f32 0.0, %v1519
    %v1521 = vpop.f32.mrb[0].mxu0
    %v1522 = vadd.f32 0.0, %v1521
    %1523 = vdwg.mxu0
    %1524 = vmatprep.subr.mxu0 %v558
    %1525 = vmatpush1.msra.mxu0 %v557
    %1526 = vmatprep.subr.mxu0 %v566
    %1527 = vmatpush1.msra.mxu0 %v565
    %1528 = vmatprep.subr.mxu0 %v574
    %1529 = vmatpush1.msra.mxu0 %v573
    %1530 = vmatprep.subr.mxu0 %v582
    %1531 = vmatpush1.msra.mxu0 %v581
    %1532 = vmatprep.subr.mxu0 %v590
    %1533 = vmatpush1.msra.mxu0 %v589
    %1534 = vmatprep.subr.mxu0 %v598
    %1535 = vmatpush1.msra.mxu0 %v597
    %1536 = vmatprep.subr.mxu0 %v606
    %1537 = vmatpush1.msra.mxu0 %v605
    %1538 = vmatprep.subr.mxu0 %v614
    %1539 = vmatpush1.msra.mxu0 %v613
    %1540 = vmatprep.subr.mxu0 %v622
    %1541 = vmatpush1.msra.mxu0 %v621
    %1542 = vmatprep.subr.mxu0 %v630
    %1543 = vmatpush1.msra.mxu0 %v629
    %1544 = vmatprep.subr.mxu0 %v638
    %1545 = vmatpush1.msra.mxu0 %v637
    %1546 = vmatprep.subr.mxu0 %v646
    %1547 = vmatpush1.msra.mxu0 %v645
    %1548 = vmatprep.subr.mxu0 %v654
    %1549 = vmatpush1.msra.mxu0 %v653
    %1550 = vmatprep.subr.mxu0 %v662
    %1551 = vmatpush1.msra.mxu0 %v661
    %1552 = vmatprep.subr.mxu0 %v670
    %1553 = vmatpush1.msra.mxu0 %v669
    %1554 = vmatprep.subr.mxu0 %v678
    %1555 = vmatpush1.msra.mxu0 %v677
    %1556 = vmatprep.subr.mxu0 0.0
    %1557 = vmatpush1.msra.mxu0 0.0
    %1558 = vmatprep.subr.mxu0 0.0
    %1559 = vmatpush1.msra.mxu0 0.0
    %1560 = vmatprep.subr.mxu0 0.0
    %1561 = vmatpush1.msra.mxu0 0.0
    %1562 = vmatprep.subr.mxu0 0.0
    %1563 = vmatpush1.msra.mxu0 0.0
    %1564 = vmatprep.subr.mxu0 0.0
    %1565 = vmatpush1.msra.mxu0 0.0
    %1566 = vmatprep.subr.mxu0 0.0
    %1567 = vmatpush1.msra.mxu0 0.0
    %1568 = vmatprep.subr.mxu0 0.0
    %1569 = vmatpush1.msra.mxu0 0.0
    %1570 = vmatprep.subr.mxu0 0.0
    %1571 = vmatpush1.msra.mxu0 0.0
    %1572 = vmatprep.subr.mxu0 0.0
    %1573 = vmatpush1.msra.mxu0 0.0
    %1574 = vmatprep.subr.mxu0 0.0
    %1575 = vmatpush1.msra.mxu0 0.0
    %1576 = vmatprep.subr.mxu0 0.0
    %1577 = vmatpush1.msra.mxu0 0.0
    %1578 = vmatprep.subr.mxu0 0.0
    %1579 = vmatpush1.msra.mxu0 0.0
    %1580 = vmatprep.subr.mxu0 0.0
    %1581 = vmatpush1.msra.mxu0 0.0
    %1582 = vmatprep.subr.mxu0 0.0
    %1583 = vmatpush1.msra.mxu0 0.0
    %1584 = vmatprep.subr.mxu0 0.0
    %1585 = vmatpush1.msra.mxu0 0.0
    %1586 = vmatprep.subr.mxu0 0.0
    %1587 = vmatpush1.msra.mxu0 0.0
    %1588 = vmatprep.mubr.f32.mxu0 0.0
    %1589 = vmatmul.mubr.f32.gmra.mrb[0].mxu0 %v1310
    %v1590 = vpop.f32.mrb[0].mxu0
    %v1591 = vadd.f32 0.0, %v1590
    %v1592 = vpop.f32.mrb[0].mxu0
    %v1593 = vadd.f32 0.0, %v1592
    %1594 = vdwg.mxu0
    %v1595 = vsel %vm550, %v1378, %v1520
    %v1596 = vsel %vm550, %v1380, %v1522
    %v1597 = vsel %vm550, %v1449, %v1591
    %v1598 = vsel %vm550, %v1451, %v1593
    %v1599 = vadd.f32 %v401, %v1595
    %v1600 = vadd.f32 %v403, %v1596
    %v1601 = vadd.f32 %v514, %v1597
    %v1602 = vadd.f32 %v516, %v1598
    %v1603 = vxor.u32 %v1599, 2147483648
    %v1604 = vxor.u32 %v1600, 2147483648
    %v1605 = vxor.u32 %v1601, 2147483648
    %v1606 = vmul.f32 %v1603, 1.442695
    %v1607 = vpow.pop %v1606
    %v1608 = vmul.f32 %v1604, 1.442695
    %v1609 = vpow.pop %v1608
    %v1610 = vmul.f32 %v1605, 1.442695
    %v1611 = vpow.pop %v1610
    %v1612 = vadd.f32 %v1607, 1.0
    %v1613 = vadd.f32 %v1609, 1.0
    %v1614 = vadd.f32 %v1611, 1.0
    %v1615 = vrcp.pop %v1612
    %v1616 = vmul.f32 1.0, %v1615
    %v1617 = vrcp.pop %v1613
    %v1618 = vmul.f32 1.0, %v1617
    %v1619 = vrcp.pop %v1614
    %v1620 = vmul.f32 1.0, %v1619
    %v1621 = vtanh.pop %v1602
    %v1622 = vmul.f32 %v1618, %v1308
    %v1623 = vmul.f32 %v1616, %v1621
    %v1624 = vadd.f32 %v1622, %v1623
    %v1625 = vtanh.pop %v1624
    %v1626 = vmul.f32 %v1620, %v1625
    %1627 = vmatprep.subr.mxu0 %v552
    %1628 = vmatpush1.msra.mxu0 %v551
    %1629 = vmatprep.subr.mxu0 %v560
    %1630 = vmatpush1.msra.mxu0 %v559
    %1631 = vmatprep.subr.mxu0 %v568
    %1632 = vmatpush1.msra.mxu0 %v567
    %1633 = vmatprep.subr.mxu0 %v576
    %1634 = vmatpush1.msra.mxu0 %v575
    %1635 = vmatprep.subr.mxu0 %v584
    %1636 = vmatpush1.msra.mxu0 %v583
    %1637 = vmatprep.subr.mxu0 %v592
    %1638 = vmatpush1.msra.mxu0 %v591
    %1639 = vmatprep.subr.mxu0 %v600
    %1640 = vmatpush1.msra.mxu0 %v599
    %1641 = vmatprep.subr.mxu0 %v608
    %1642 = vmatpush1.msra.mxu0 %v607
    %1643 = vmatprep.subr.mxu0 %v616
    %1644 = vmatpush1.msra.mxu0 %v615
    %1645 = vmatprep.subr.mxu0 %v624
    %1646 = vmatpush1.msra.mxu0 %v623
    %1647 = vmatprep.subr.mxu0 %v632
    %1648 = vmatpush1.msra.mxu0 %v631
    %1649 = vmatprep.subr.mxu0 %v640
    %1650 = vmatpush1.msra.mxu0 %v639
    %1651 = vmatprep.subr.mxu0 %v648
    %1652 = vmatpush1.msra.mxu0 %v647
    %1653 = vmatprep.subr.mxu0 %v656
    %1654 = vmatpush1.msra.mxu0 %v655
    %1655 = vmatprep.subr.mxu0 %v664
    %1656 = vmatpush1.msra.mxu0 %v663
    %1657 = vmatprep.subr.mxu0 %v672
    %1658 = vmatpush1.msra.mxu0 %v671
    %1659 = vmatprep.subr.mxu0 0.0
    %1660 = vmatpush1.msra.mxu0 0.0
    %1661 = vmatprep.subr.mxu0 0.0
    %1662 = vmatpush1.msra.mxu0 0.0
    %1663 = vmatprep.subr.mxu0 0.0
    %1664 = vmatpush1.msra.mxu0 0.0
    %1665 = vmatprep.subr.mxu0 0.0
    %1666 = vmatpush1.msra.mxu0 0.0
    %1667 = vmatprep.subr.mxu0 0.0
    %1668 = vmatpush1.msra.mxu0 0.0
    %1669 = vmatprep.subr.mxu0 0.0
    %1670 = vmatpush1.msra.mxu0 0.0
    %1671 = vmatprep.subr.mxu0 0.0
    %1672 = vmatpush1.msra.mxu0 0.0
    %1673 = vmatprep.subr.mxu0 0.0
    %1674 = vmatpush1.msra.mxu0 0.0
    %1675 = vmatprep.subr.mxu0 0.0
    %1676 = vmatpush1.msra.mxu0 0.0
    %1677 = vmatprep.subr.mxu0 0.0
    %1678 = vmatpush1.msra.mxu0 0.0
    %1679 = vmatprep.subr.mxu0 0.0
    %1680 = vmatpush1.msra.mxu0 0.0
    %1681 = vmatprep.subr.mxu0 0.0
    %1682 = vmatpush1.msra.mxu0 0.0
    %1683 = vmatprep.subr.mxu0 0.0
    %1684 = vmatpush1.msra.mxu0 0.0
    %1685 = vmatprep.subr.mxu0 0.0
    %1686 = vmatpush1.msra.mxu0 0.0
    %1687 = vmatprep.subr.mxu0 0.0
    %1688 = vmatpush1.msra.mxu0 0.0
    %1689 = vmatprep.subr.mxu0 0.0
    %1690 = vmatpush1.msra.mxu0 0.0
    %1691 = vmatprep.mubr.f32.mxu0 0.0
    %1692 = vmatmul.mubr.f32.gmra.mrb[0].mxu0 %v1626
    %v1693 = vpop.f32.mrb[0].mxu0
    %v1694 = vadd.f32 0.0, %v1693
    %v1695 = vpop.f32.mrb[0].mxu0
    %v1696 = vadd.f32 0.0, %v1695
    %1697 = vdwg.mxu0
    %1698 = vmatprep.subr.mxu0 %v554
    %1699 = vmatpush1.msra.mxu0 %v553
    %1700 = vmatprep.subr.mxu0 %v562
    %1701 = vmatpush1.msra.mxu0 %v561
    %1702 = vmatprep.subr.mxu0 %v570
    %1703 = vmatpush1.msra.mxu0 %v569
    %1704 = vmatprep.subr.mxu0 %v578
    %1705 = vmatpush1.msra.mxu0 %v577
    %1706 = vmatprep.subr.mxu0 %v586
    %1707 = vmatpush1.msra.mxu0 %v585
    %1708 = vmatprep.subr.mxu0 %v594
    %1709 = vmatpush1.msra.mxu0 %v593
    %1710 = vmatprep.subr.mxu0 %v602
    %1711 = vmatpush1.msra.mxu0 %v601
    %1712 = vmatprep.subr.mxu0 %v610
    %1713 = vmatpush1.msra.mxu0 %v609
    %1714 = vmatprep.subr.mxu0 %v618
    %1715 = vmatpush1.msra.mxu0 %v617
    %1716 = vmatprep.subr.mxu0 %v626
    %1717 = vmatpush1.msra.mxu0 %v625
    %1718 = vmatprep.subr.mxu0 %v634
    %1719 = vmatpush1.msra.mxu0 %v633
    %1720 = vmatprep.subr.mxu0 %v642
    %1721 = vmatpush1.msra.mxu0 %v641
    %1722 = vmatprep.subr.mxu0 %v650
    %1723 = vmatpush1.msra.mxu0 %v649
    %1724 = vmatprep.subr.mxu0 %v658
    %1725 = vmatpush1.msra.mxu0 %v657
    %1726 = vmatprep.subr.mxu0 %v666
    %1727 = vmatpush1.msra.mxu0 %v665
    %1728 = vmatprep.subr.mxu0 %v674
    %1729 = vmatpush1.msra.mxu0 %v673
    %1730 = vmatprep.subr.mxu0 0.0
    %1731 = vmatpush1.msra.mxu0 0.0
    %1732 = vmatprep.subr.mxu0 0.0
    %1733 = vmatpush1.msra.mxu0 0.0
    %1734 = vmatprep.subr.mxu0 0.0
    %1735 = vmatpush1.msra.mxu0 0.0
    %1736 = vmatprep.subr.mxu0 0.0
    %1737 = vmatpush1.msra.mxu0 0.0
    %1738 = vmatprep.subr.mxu0 0.0
    %1739 = vmatpush1.msra.mxu0 0.0
    %1740 = vmatprep.subr.mxu0 0.0
    %1741 = vmatpush1.msra.mxu0 0.0
    %1742 = vmatprep.subr.mxu0 0.0
    %1743 = vmatpush1.msra.mxu0 0.0
    %1744 = vmatprep.subr.mxu0 0.0
    %1745 = vmatpush1.msra.mxu0 0.0
    %1746 = vmatprep.subr.mxu0 0.0
    %1747 = vmatpush1.msra.mxu0 0.0
    %1748 = vmatprep.subr.mxu0 0.0
    %1749 = vmatpush1.msra.mxu0 0.0
    %1750 = vmatprep.subr.mxu0 0.0
    %1751 = vmatpush1.msra.mxu0 0.0
    %1752 = vmatprep.subr.mxu0 0.0
    %1753 = vmatpush1.msra.mxu0 0.0
    %1754 = vmatprep.subr.mxu0 0.0
    %1755 = vmatpush1.msra.mxu0 0.0
    %1756 = vmatprep.subr.mxu0 0.0
    %1757 = vmatpush1.msra.mxu0 0.0
    %1758 = vmatprep.subr.mxu0 0.0
    %1759 = vmatpush1.msra.mxu0 0.0
    %1760 = vmatprep.subr.mxu0 0.0
    %1761 = vmatpush1.msra.mxu0 0.0
    %1762 = vmatprep.mubr.f32.mxu0 0.0
    %1763 = vmatmul.mubr.f32.gmra.mrb[0].mxu0 %v1626
    %v1764 = vpop.f32.mrb[0].mxu0
    %v1765 = vadd.f32 0.0, %v1764
    %v1766 = vpop.f32.mrb[0].mxu0
    %v1767 = vadd.f32 0.0, %v1766
    %1768 = vdwg.mxu0
    %1769 = vmatprep.subr.mxu0 %v556
    %1770 = vmatpush1.msra.mxu0 %v555
    %1771 = vmatprep.subr.mxu0 %v564
    %1772 = vmatpush1.msra.mxu0 %v563
    %1773 = vmatprep.subr.mxu0 %v572
    %1774 = vmatpush1.msra.mxu0 %v571
    %1775 = vmatprep.subr.mxu0 %v580
    %1776 = vmatpush1.msra.mxu0 %v579
    %1777 = vmatprep.subr.mxu0 %v588
    %1778 = vmatpush1.msra.mxu0 %v587
    %1779 = vmatprep.subr.mxu0 %v596
    %1780 = vmatpush1.msra.mxu0 %v595
    %1781 = vmatprep.subr.mxu0 %v604
    %1782 = vmatpush1.msra.mxu0 %v603
    %1783 = vmatprep.subr.mxu0 %v612
    %1784 = vmatpush1.msra.mxu0 %v611
    %1785 = vmatprep.subr.mxu0 %v620
    %1786 = vmatpush1.msra.mxu0 %v619
    %1787 = vmatprep.subr.mxu0 %v628
    %1788 = vmatpush1.msra.mxu0 %v627
    %1789 = vmatprep.subr.mxu0 %v636
    %1790 = vmatpush1.msra.mxu0 %v635
    %1791 = vmatprep.subr.mxu0 %v644
    %1792 = vmatpush1.msra.mxu0 %v643
    %1793 = vmatprep.subr.mxu0 %v652
    %1794 = vmatpush1.msra.mxu0 %v651
    %1795 = vmatprep.subr.mxu0 %v660
    %1796 = vmatpush1.msra.mxu0 %v659
    %1797 = vmatprep.subr.mxu0 %v668
    %1798 = vmatpush1.msra.mxu0 %v667
    %1799 = vmatprep.subr.mxu0 %v676
    %1800 = vmatpush1.msra.mxu0 %v675
    %1801 = vmatprep.subr.mxu0 0.0
    %1802 = vmatpush1.msra.mxu0 0.0
    %1803 = vmatprep.subr.mxu0 0.0
    %1804 = vmatpush1.msra.mxu0 0.0
    %1805 = vmatprep.subr.mxu0 0.0
    %1806 = vmatpush1.msra.mxu0 0.0
    %1807 = vmatprep.subr.mxu0 0.0
    %1808 = vmatpush1.msra.mxu0 0.0
    %1809 = vmatprep.subr.mxu0 0.0
    %1810 = vmatpush1.msra.mxu0 0.0
    %1811 = vmatprep.subr.mxu0 0.0
    %1812 = vmatpush1.msra.mxu0 0.0
    %1813 = vmatprep.subr.mxu0 0.0
    %1814 = vmatpush1.msra.mxu0 0.0
    %1815 = vmatprep.subr.mxu0 0.0
    %1816 = vmatpush1.msra.mxu0 0.0
    %1817 = vmatprep.subr.mxu0 0.0
    %1818 = vmatpush1.msra.mxu0 0.0
    %1819 = vmatprep.subr.mxu0 0.0
    %1820 = vmatpush1.msra.mxu0 0.0
    %1821 = vmatprep.subr.mxu0 0.0
    %1822 = vmatpush1.msra.mxu0 0.0
    %1823 = vmatprep.subr.mxu0 0.0
    %1824 = vmatpush1.msra.mxu0 0.0
    %1825 = vmatprep.subr.mxu0 0.0
    %1826 = vmatpush1.msra.mxu0 0.0
    %1827 = vmatprep.subr.mxu0 0.0
    %1828 = vmatpush1.msra.mxu0 0.0
    %1829 = vmatprep.subr.mxu0 0.0
    %1830 = vmatpush1.msra.mxu0 0.0
    %1831 = vmatprep.subr.mxu0 0.0
    %1832 = vmatpush1.msra.mxu0 0.0
    %1833 = vmatprep.mubr.f32.mxu0 0.0
    %1834 = vmatmul.mubr.f32.gmra.mrb[0].mxu0 %v1626
    %v1835 = vpop.f32.mrb[0].mxu0
    %v1836 = vadd.f32 0.0, %v1835
    %v1837 = vpop.f32.mrb[0].mxu0
    %v1838 = vadd.f32 0.0, %v1837
    %1839 = vdwg.mxu0
    %1840 = vmatprep.subr.mxu0 %v558
    %1841 = vmatpush1.msra.mxu0 %v557
    %1842 = vmatprep.subr.mxu0 %v566
    %1843 = vmatpush1.msra.mxu0 %v565
    %1844 = vmatprep.subr.mxu0 %v574
    %1845 = vmatpush1.msra.mxu0 %v573
    %1846 = vmatprep.subr.mxu0 %v582
    %1847 = vmatpush1.msra.mxu0 %v581
    %1848 = vmatprep.subr.mxu0 %v590
    %1849 = vmatpush1.msra.mxu0 %v589
    %1850 = vmatprep.subr.mxu0 %v598
    %1851 = vmatpush1.msra.mxu0 %v597
    %1852 = vmatprep.subr.mxu0 %v606
    %1853 = vmatpush1.msra.mxu0 %v605
    %1854 = vmatprep.subr.mxu0 %v614
    %1855 = vmatpush1.msra.mxu0 %v613
    %1856 = vmatprep.subr.mxu0 %v622
    %1857 = vmatpush1.msra.mxu0 %v621
    %1858 = vmatprep.subr.mxu0 %v630
    %1859 = vmatpush1.msra.mxu0 %v629
    %1860 = vmatprep.subr.mxu0 %v638
    %1861 = vmatpush1.msra.mxu0 %v637
    %1862 = vmatprep.subr.mxu0 %v646
    %1863 = vmatpush1.msra.mxu0 %v645
    %1864 = vmatprep.subr.mxu0 %v654
    %1865 = vmatpush1.msra.mxu0 %v653
    %1866 = vmatprep.subr.mxu0 %v662
    %1867 = vmatpush1.msra.mxu0 %v661
    %1868 = vmatprep.subr.mxu0 %v670
    %1869 = vmatpush1.msra.mxu0 %v669
    %1870 = vmatprep.subr.mxu0 %v678
    %1871 = vmatpush1.msra.mxu0 %v677
    %1872 = vmatprep.subr.mxu0 0.0
    %1873 = vmatpush1.msra.mxu0 0.0
    %1874 = vmatprep.subr.mxu0 0.0
    %1875 = vmatpush1.msra.mxu0 0.0
    %1876 = vmatprep.subr.mxu0 0.0
    %1877 = vmatpush1.msra.mxu0 0.0
    %1878 = vmatprep.subr.mxu0 0.0
    %1879 = vmatpush1.msra.mxu0 0.0
    %1880 = vmatprep.subr.mxu0 0.0
    %1881 = vmatpush1.msra.mxu0 0.0
    %1882 = vmatprep.subr.mxu0 0.0
    %1883 = vmatpush1.msra.mxu0 0.0
    %1884 = vmatprep.subr.mxu0 0.0
    %1885 = vmatpush1.msra.mxu0 0.0
    %1886 = vmatprep.subr.mxu0 0.0
    %1887 = vmatpush1.msra.mxu0 0.0
    %1888 = vmatprep.subr.mxu0 0.0
    %1889 = vmatpush1.msra.mxu0 0.0
    %1890 = vmatprep.subr.mxu0 0.0
    %1891 = vmatpush1.msra.mxu0 0.0
    %1892 = vmatprep.subr.mxu0 0.0
    %1893 = vmatpush1.msra.mxu0 0.0
    %1894 = vmatprep.subr.mxu0 0.0
    %1895 = vmatpush1.msra.mxu0 0.0
    %1896 = vmatprep.subr.mxu0 0.0
    %1897 = vmatpush1.msra.mxu0 0.0
    %1898 = vmatprep.subr.mxu0 0.0
    %1899 = vmatpush1.msra.mxu0 0.0
    %1900 = vmatprep.subr.mxu0 0.0
    %1901 = vmatpush1.msra.mxu0 0.0
    %1902 = vmatprep.subr.mxu0 0.0
    %1903 = vmatpush1.msra.mxu0 0.0
    %1904 = vmatprep.mubr.f32.mxu0 0.0
    %1905 = vmatmul.mubr.f32.gmra.mrb[0].mxu0 %v1626
    %v1906 = vpop.f32.mrb[0].mxu0
    %v1907 = vadd.f32 0.0, %v1906
    %v1908 = vpop.f32.mrb[0].mxu0
    %v1909 = vadd.f32 0.0, %v1908
    %1910 = vdwg.mxu0
    %v1911 = vsel %vm550, %v1694, %v1836
    %v1912 = vsel %vm550, %v1696, %v1838
    %v1913 = vsel %vm550, %v1765, %v1907
    %v1914 = vsel %vm550, %v1767, %v1909
    %v1915 = vadd.f32 %v407, %v1911
    %v1916 = vadd.f32 %v409, %v1912
    %v1917 = vadd.f32 %v520, %v1913
    %v1918 = vadd.f32 %v522, %v1914
    %v1919 = vxor.u32 %v1915, 2147483648
    %v1920 = vxor.u32 %v1916, 2147483648
    %v1921 = vxor.u32 %v1917, 2147483648
    %v1922 = vmul.f32 %v1919, 1.442695
    %v1923 = vpow.pop %v1922
    %v1924 = vmul.f32 %v1920, 1.442695
    %v1925 = vpow.pop %v1924
    %v1926 = vmul.f32 %v1921, 1.442695
    %v1927 = vpow.pop %v1926
    %v1928 = vadd.f32 %v1923, 1.0
    %v1929 = vadd.f32 %v1925, 1.0
    %v1930 = vadd.f32 %v1927, 1.0
    %v1931 = vrcp.pop %v1928
    %v1932 = vmul.f32 1.0, %v1931
    %v1933 = vrcp.pop %v1929
    %v1934 = vmul.f32 1.0, %v1933
    %v1935 = vrcp.pop %v1930
    %v1936 = vmul.f32 1.0, %v1935
    %v1937 = vtanh.pop %v1918
    %v1938 = vmul.f32 %v1934, %v1624
    %v1939 = vmul.f32 %v1932, %v1937
    %v1940 = vadd.f32 %v1938, %v1939
    %v1941 = vtanh.pop %v1940
    %v1942 = vmul.f32 %v1936, %v1941
    %1943 = vmatprep.subr.mxu0 %v552
    %1944 = vmatpush1.msra.mxu0 %v551
    %1945 = vmatprep.subr.mxu0 %v560
    %1946 = vmatpush1.msra.mxu0 %v559
    %1947 = vmatprep.subr.mxu0 %v568
    %1948 = vmatpush1.msra.mxu0 %v567
    %1949 = vmatprep.subr.mxu0 %v576
    %1950 = vmatpush1.msra.mxu0 %v575
    %1951 = vmatprep.subr.mxu0 %v584
    %1952 = vmatpush1.msra.mxu0 %v583
    %1953 = vmatprep.subr.mxu0 %v592
    %1954 = vmatpush1.msra.mxu0 %v591
    %1955 = vmatprep.subr.mxu0 %v600
    %1956 = vmatpush1.msra.mxu0 %v599
    %1957 = vmatprep.subr.mxu0 %v608
    %1958 = vmatpush1.msra.mxu0 %v607
    %1959 = vmatprep.subr.mxu0 %v616
    %1960 = vmatpush1.msra.mxu0 %v615
    %1961 = vmatprep.subr.mxu0 %v624
    %1962 = vmatpush1.msra.mxu0 %v623
    %1963 = vmatprep.subr.mxu0 %v632
    %1964 = vmatpush1.msra.mxu0 %v631
    %1965 = vmatprep.subr.mxu0 %v640
    %1966 = vmatpush1.msra.mxu0 %v639
    %1967 = vmatprep.subr.mxu0 %v648
    %1968 = vmatpush1.msra.mxu0 %v647
    %1969 = vmatprep.subr.mxu0 %v656
    %1970 = vmatpush1.msra.mxu0 %v655
    %1971 = vmatprep.subr.mxu0 %v664
    %1972 = vmatpush1.msra.mxu0 %v663
    %1973 = vmatprep.subr.mxu0 %v672
    %1974 = vmatpush1.msra.mxu0 %v671
    %1975 = vmatprep.subr.mxu0 0.0
    %1976 = vmatpush1.msra.mxu0 0.0
    %1977 = vmatprep.subr.mxu0 0.0
    %1978 = vmatpush1.msra.mxu0 0.0
    %1979 = vmatprep.subr.mxu0 0.0
    %1980 = vmatpush1.msra.mxu0 0.0
    %1981 = vmatprep.subr.mxu0 0.0
    %1982 = vmatpush1.msra.mxu0 0.0
    %1983 = vmatprep.subr.mxu0 0.0
    %1984 = vmatpush1.msra.mxu0 0.0
    %1985 = vmatprep.subr.mxu0 0.0
    %1986 = vmatpush1.msra.mxu0 0.0
    %1987 = vmatprep.subr.mxu0 0.0
    %1988 = vmatpush1.msra.mxu0 0.0
    %1989 = vmatprep.subr.mxu0 0.0
    %1990 = vmatpush1.msra.mxu0 0.0
    %1991 = vmatprep.subr.mxu0 0.0
    %1992 = vmatpush1.msra.mxu0 0.0
    %1993 = vmatprep.subr.mxu0 0.0
    %1994 = vmatpush1.msra.mxu0 0.0
    %1995 = vmatprep.subr.mxu0 0.0
    %1996 = vmatpush1.msra.mxu0 0.0
    %1997 = vmatprep.subr.mxu0 0.0
    %1998 = vmatpush1.msra.mxu0 0.0
    %1999 = vmatprep.subr.mxu0 0.0
    %2000 = vmatpush1.msra.mxu0 0.0
    %2001 = vmatprep.subr.mxu0 0.0
    %2002 = vmatpush1.msra.mxu0 0.0
    %2003 = vmatprep.subr.mxu0 0.0
    %2004 = vmatpush1.msra.mxu0 0.0
    %2005 = vmatprep.subr.mxu0 0.0
    %2006 = vmatpush1.msra.mxu0 0.0
    %2007 = vmatprep.mubr.f32.mxu0 0.0
    %2008 = vmatmul.mubr.f32.gmra.mrb[0].mxu0 %v1942
    %v2009 = vpop.f32.mrb[0].mxu0
    %v2010 = vadd.f32 0.0, %v2009
    %v2011 = vpop.f32.mrb[0].mxu0
    %v2012 = vadd.f32 0.0, %v2011
    %2013 = vdwg.mxu0
    %2014 = vmatprep.subr.mxu0 %v554
    %2015 = vmatpush1.msra.mxu0 %v553
    %2016 = vmatprep.subr.mxu0 %v562
    %2017 = vmatpush1.msra.mxu0 %v561
    %2018 = vmatprep.subr.mxu0 %v570
    %2019 = vmatpush1.msra.mxu0 %v569
    %2020 = vmatprep.subr.mxu0 %v578
    %2021 = vmatpush1.msra.mxu0 %v577
    %2022 = vmatprep.subr.mxu0 %v586
    %2023 = vmatpush1.msra.mxu0 %v585
    %2024 = vmatprep.subr.mxu0 %v594
    %2025 = vmatpush1.msra.mxu0 %v593
    %2026 = vmatprep.subr.mxu0 %v602
    %2027 = vmatpush1.msra.mxu0 %v601
    %2028 = vmatprep.subr.mxu0 %v610
    %2029 = vmatpush1.msra.mxu0 %v609
    %2030 = vmatprep.subr.mxu0 %v618
    %2031 = vmatpush1.msra.mxu0 %v617
    %2032 = vmatprep.subr.mxu0 %v626
    %2033 = vmatpush1.msra.mxu0 %v625
    %2034 = vmatprep.subr.mxu0 %v634
    %2035 = vmatpush1.msra.mxu0 %v633
    %2036 = vmatprep.subr.mxu0 %v642
    %2037 = vmatpush1.msra.mxu0 %v641
    %2038 = vmatprep.subr.mxu0 %v650
    %2039 = vmatpush1.msra.mxu0 %v649
    %2040 = vmatprep.subr.mxu0 %v658
    %2041 = vmatpush1.msra.mxu0 %v657
    %2042 = vmatprep.subr.mxu0 %v666
    %2043 = vmatpush1.msra.mxu0 %v665
    %2044 = vmatprep.subr.mxu0 %v674
    %2045 = vmatpush1.msra.mxu0 %v673
    %2046 = vmatprep.subr.mxu0 0.0
    %2047 = vmatpush1.msra.mxu0 0.0
    %2048 = vmatprep.subr.mxu0 0.0
    %2049 = vmatpush1.msra.mxu0 0.0
    %2050 = vmatprep.subr.mxu0 0.0
    %2051 = vmatpush1.msra.mxu0 0.0
    %2052 = vmatprep.subr.mxu0 0.0
    %2053 = vmatpush1.msra.mxu0 0.0
    %2054 = vmatprep.subr.mxu0 0.0
    %2055 = vmatpush1.msra.mxu0 0.0
    %2056 = vmatprep.subr.mxu0 0.0
    %2057 = vmatpush1.msra.mxu0 0.0
    %2058 = vmatprep.subr.mxu0 0.0
    %2059 = vmatpush1.msra.mxu0 0.0
    %2060 = vmatprep.subr.mxu0 0.0
    %2061 = vmatpush1.msra.mxu0 0.0
    %2062 = vmatprep.subr.mxu0 0.0
    %2063 = vmatpush1.msra.mxu0 0.0
    %2064 = vmatprep.subr.mxu0 0.0
    %2065 = vmatpush1.msra.mxu0 0.0
    %2066 = vmatprep.subr.mxu0 0.0
    %2067 = vmatpush1.msra.mxu0 0.0
    %2068 = vmatprep.subr.mxu0 0.0
    %2069 = vmatpush1.msra.mxu0 0.0
    %2070 = vmatprep.subr.mxu0 0.0
    %2071 = vmatpush1.msra.mxu0 0.0
    %2072 = vmatprep.subr.mxu0 0.0
    %2073 = vmatpush1.msra.mxu0 0.0
    %2074 = vmatprep.subr.mxu0 0.0
    %2075 = vmatpush1.msra.mxu0 0.0
    %2076 = vmatprep.subr.mxu0 0.0
    %2077 = vmatpush1.msra.mxu0 0.0
    %2078 = vmatprep.mubr.f32.mxu0 0.0
    %2079 = vmatmul.mubr.f32.gmra.mrb[0].mxu0 %v1942
    %v2080 = vpop.f32.mrb[0].mxu0
    %v2081 = vadd.f32 0.0, %v2080
    %v2082 = vpop.f32.mrb[0].mxu0
    %v2083 = vadd.f32 0.0, %v2082
    %2084 = vdwg.mxu0
    %2085 = vmatprep.subr.mxu0 %v556
    %2086 = vmatpush1.msra.mxu0 %v555
    %2087 = vmatprep.subr.mxu0 %v564
    %2088 = vmatpush1.msra.mxu0 %v563
    %2089 = vmatprep.subr.mxu0 %v572
    %2090 = vmatpush1.msra.mxu0 %v571
    %2091 = vmatprep.subr.mxu0 %v580
    %2092 = vmatpush1.msra.mxu0 %v579
    %2093 = vmatprep.subr.mxu0 %v588
    %2094 = vmatpush1.msra.mxu0 %v587
    %2095 = vmatprep.subr.mxu0 %v596
    %2096 = vmatpush1.msra.mxu0 %v595
    %2097 = vmatprep.subr.mxu0 %v604
    %2098 = vmatpush1.msra.mxu0 %v603
    %2099 = vmatprep.subr.mxu0 %v612
    %2100 = vmatpush1.msra.mxu0 %v611
    %2101 = vmatprep.subr.mxu0 %v620
    %2102 = vmatpush1.msra.mxu0 %v619
    %2103 = vmatprep.subr.mxu0 %v628
    %2104 = vmatpush1.msra.mxu0 %v627
    %2105 = vmatprep.subr.mxu0 %v636
    %2106 = vmatpush1.msra.mxu0 %v635
    %2107 = vmatprep.subr.mxu0 %v644
    %2108 = vmatpush1.msra.mxu0 %v643
    %2109 = vmatprep.subr.mxu0 %v652
    %2110 = vmatpush1.msra.mxu0 %v651
    %2111 = vmatprep.subr.mxu0 %v660
    %2112 = vmatpush1.msra.mxu0 %v659
    %2113 = vmatprep.subr.mxu0 %v668
    %2114 = vmatpush1.msra.mxu0 %v667
    %2115 = vmatprep.subr.mxu0 %v676
    %2116 = vmatpush1.msra.mxu0 %v675
    %2117 = vmatprep.subr.mxu0 0.0
    %2118 = vmatpush1.msra.mxu0 0.0
    %2119 = vmatprep.subr.mxu0 0.0
    %2120 = vmatpush1.msra.mxu0 0.0
    %2121 = vmatprep.subr.mxu0 0.0
    %2122 = vmatpush1.msra.mxu0 0.0
    %2123 = vmatprep.subr.mxu0 0.0
    %2124 = vmatpush1.msra.mxu0 0.0
    %2125 = vmatprep.subr.mxu0 0.0
    %2126 = vmatpush1.msra.mxu0 0.0
    %2127 = vmatprep.subr.mxu0 0.0
    %2128 = vmatpush1.msra.mxu0 0.0
    %2129 = vmatprep.subr.mxu0 0.0
    %2130 = vmatpush1.msra.mxu0 0.0
    %2131 = vmatprep.subr.mxu0 0.0
    %2132 = vmatpush1.msra.mxu0 0.0
    %2133 = vmatprep.subr.mxu0 0.0
    %2134 = vmatpush1.msra.mxu0 0.0
    %2135 = vmatprep.subr.mxu0 0.0
    %2136 = vmatpush1.msra.mxu0 0.0
    %2137 = vmatprep.subr.mxu0 0.0
    %2138 = vmatpush1.msra.mxu0 0.0
    %2139 = vmatprep.subr.mxu0 0.0
    %2140 = vmatpush1.msra.mxu0 0.0
    %2141 = vmatprep.subr.mxu0 0.0
    %2142 = vmatpush1.msra.mxu0 0.0
    %2143 = vmatprep.subr.mxu0 0.0
    %2144 = vmatpush1.msra.mxu0 0.0
    %2145 = vmatprep.subr.mxu0 0.0
    %2146 = vmatpush1.msra.mxu0 0.0
    %2147 = vmatprep.subr.mxu0 0.0
    %2148 = vmatpush1.msra.mxu0 0.0
    %2149 = vmatprep.mubr.f32.mxu0 0.0
    %2150 = vmatmul.mubr.f32.gmra.mrb[0].mxu0 %v1942
    %v2151 = vpop.f32.mrb[0].mxu0
    %v2152 = vadd.f32 0.0, %v2151
    %v2153 = vpop.f32.mrb[0].mxu0
    %v2154 = vadd.f32 0.0, %v2153
    %2155 = vdwg.mxu0
    %2156 = vmatprep.subr.mxu0 %v558
    %2157 = vmatpush1.msra.mxu0 %v557
    %2158 = vmatprep.subr.mxu0 %v566
    %2159 = vmatpush1.msra.mxu0 %v565
    %2160 = vmatprep.subr.mxu0 %v574
    %2161 = vmatpush1.msra.mxu0 %v573
    %2162 = vmatprep.subr.mxu0 %v582
    %2163 = vmatpush1.msra.mxu0 %v581
    %2164 = vmatprep.subr.mxu0 %v590
    %2165 = vmatpush1.msra.mxu0 %v589
    %2166 = vmatprep.subr.mxu0 %v598
    %2167 = vmatpush1.msra.mxu0 %v597
    %2168 = vmatprep.subr.mxu0 %v606
    %2169 = vmatpush1.msra.mxu0 %v605
    %2170 = vmatprep.subr.mxu0 %v614
    %2171 = vmatpush1.msra.mxu0 %v613
    %2172 = vmatprep.subr.mxu0 %v622
    %2173 = vmatpush1.msra.mxu0 %v621
    %2174 = vmatprep.subr.mxu0 %v630
    %2175 = vmatpush1.msra.mxu0 %v629
    %2176 = vmatprep.subr.mxu0 %v638
    %2177 = vmatpush1.msra.mxu0 %v637
    %2178 = vmatprep.subr.mxu0 %v646
    %2179 = vmatpush1.msra.mxu0 %v645
    %2180 = vmatprep.subr.mxu0 %v654
    %2181 = vmatpush1.msra.mxu0 %v653
    %2182 = vmatprep.subr.mxu0 %v662
    %2183 = vmatpush1.msra.mxu0 %v661
    %2184 = vmatprep.subr.mxu0 %v670
    %2185 = vmatpush1.msra.mxu0 %v669
    %2186 = vmatprep.subr.mxu0 %v678
    %2187 = vmatpush1.msra.mxu0 %v677
    %2188 = vmatprep.subr.mxu0 0.0
    %2189 = vmatpush1.msra.mxu0 0.0
    %2190 = vmatprep.subr.mxu0 0.0
    %2191 = vmatpush1.msra.mxu0 0.0
    %2192 = vmatprep.subr.mxu0 0.0
    %2193 = vmatpush1.msra.mxu0 0.0
    %2194 = vmatprep.subr.mxu0 0.0
    %2195 = vmatpush1.msra.mxu0 0.0
    %2196 = vmatprep.subr.mxu0 0.0
    %2197 = vmatpush1.msra.mxu0 0.0
    %2198 = vmatprep.subr.mxu0 0.0
    %2199 = vmatpush1.msra.mxu0 0.0
    %2200 = vmatprep.subr.mxu0 0.0
    %2201 = vmatpush1.msra.mxu0 0.0
    %2202 = vmatprep.subr.mxu0 0.0
    %2203 = vmatpush1.msra.mxu0 0.0
    %2204 = vmatprep.subr.mxu0 0.0
    %2205 = vmatpush1.msra.mxu0 0.0
    %2206 = vmatprep.subr.mxu0 0.0
    %2207 = vmatpush1.msra.mxu0 0.0
    %2208 = vmatprep.subr.mxu0 0.0
    %2209 = vmatpush1.msra.mxu0 0.0
    %2210 = vmatprep.subr.mxu0 0.0
    %2211 = vmatpush1.msra.mxu0 0.0
    %2212 = vmatprep.subr.mxu0 0.0
    %2213 = vmatpush1.msra.mxu0 0.0
    %2214 = vmatprep.subr.mxu0 0.0
    %2215 = vmatpush1.msra.mxu0 0.0
    %2216 = vmatprep.subr.mxu0 0.0
    %2217 = vmatpush1.msra.mxu0 0.0
    %2218 = vmatprep.subr.mxu0 0.0
    %2219 = vmatpush1.msra.mxu0 0.0
    %2220 = vmatprep.mubr.f32.mxu0 0.0
    %2221 = vmatmul.mubr.f32.gmra.mrb[0].mxu0 %v1942
    %v2222 = vpop.f32.mrb[0].mxu0
    %v2223 = vadd.f32 0.0, %v2222
    %v2224 = vpop.f32.mrb[0].mxu0
    %v2225 = vadd.f32 0.0, %v2224
    %2226 = vdwg.mxu0
    %v2227 = vsel %vm550, %v2010, %v2152
    %v2228 = vsel %vm550, %v2012, %v2154
    %v2229 = vsel %vm550, %v2081, %v2223
    %v2230 = vsel %vm550, %v2083, %v2225
    %v2231 = vadd.f32 %v413, %v2227
    %v2232 = vadd.f32 %v415, %v2228
    %v2233 = vadd.f32 %v526, %v2229
    %v2234 = vadd.f32 %v528, %v2230
    %v2235 = vxor.u32 %v2231, 2147483648
    %v2236 = vxor.u32 %v2232, 2147483648
    %v2237 = vxor.u32 %v2233, 2147483648
    %v2238 = vmul.f32 %v2235, 1.442695
    %v2239 = vpow.pop %v2238
    %v2240 = vmul.f32 %v2236, 1.442695
    %v2241 = vpow.pop %v2240
    %v2242 = vmul.f32 %v2237, 1.442695
    %v2243 = vpow.pop %v2242
    %v2244 = vadd.f32 %v2239, 1.0
    %v2245 = vadd.f32 %v2241, 1.0
    %v2246 = vadd.f32 %v2243, 1.0
    %v2247 = vrcp.pop %v2244
    %v2248 = vmul.f32 1.0, %v2247
    %v2249 = vrcp.pop %v2245
    %v2250 = vmul.f32 1.0, %v2249
    %v2251 = vrcp.pop %v2246
    %v2252 = vmul.f32 1.0, %v2251
    %v2253 = vtanh.pop %v2234
    %v2254 = vmul.f32 %v2250, %v1940
    %v2255 = vmul.f32 %v2248, %v2253
    %v2256 = vadd.f32 %v2254, %v2255
    %v2257 = vtanh.pop %v2256
    %v2258 = vmul.f32 %v2252, %v2257
    %2259 = vmatprep.subr.mxu0 %v552
    %2260 = vmatpush1.msra.mxu0 %v551
    %2261 = vmatprep.subr.mxu0 %v560
    %2262 = vmatpush1.msra.mxu0 %v559
    %2263 = vmatprep.subr.mxu0 %v568
    %2264 = vmatpush1.msra.mxu0 %v567
    %2265 = vmatprep.subr.mxu0 %v576
    %2266 = vmatpush1.msra.mxu0 %v575
    %2267 = vmatprep.subr.mxu0 %v584
    %2268 = vmatpush1.msra.mxu0 %v583
    %2269 = vmatprep.subr.mxu0 %v592
    %2270 = vmatpush1.msra.mxu0 %v591
    %2271 = vmatprep.subr.mxu0 %v600
    %2272 = vmatpush1.msra.mxu0 %v599
    %2273 = vmatprep.subr.mxu0 %v608
    %2274 = vmatpush1.msra.mxu0 %v607
    %2275 = vmatprep.subr.mxu0 %v616
    %2276 = vmatpush1.msra.mxu0 %v615
    %2277 = vmatprep.subr.mxu0 %v624
    %2278 = vmatpush1.msra.mxu0 %v623
    %2279 = vmatprep.subr.mxu0 %v632
    %2280 = vmatpush1.msra.mxu0 %v631
    %2281 = vmatprep.subr.mxu0 %v640
    %2282 = vmatpush1.msra.mxu0 %v639
    %2283 = vmatprep.subr.mxu0 %v648
    %2284 = vmatpush1.msra.mxu0 %v647
    %2285 = vmatprep.subr.mxu0 %v656
    %2286 = vmatpush1.msra.mxu0 %v655
    %2287 = vmatprep.subr.mxu0 %v664
    %2288 = vmatpush1.msra.mxu0 %v663
    %2289 = vmatprep.subr.mxu0 %v672
    %2290 = vmatpush1.msra.mxu0 %v671
    %2291 = vmatprep.subr.mxu0 0.0
    %2292 = vmatpush1.msra.mxu0 0.0
    %2293 = vmatprep.subr.mxu0 0.0
    %2294 = vmatpush1.msra.mxu0 0.0
    %2295 = vmatprep.subr.mxu0 0.0
    %2296 = vmatpush1.msra.mxu0 0.0
    %2297 = vmatprep.subr.mxu0 0.0
    %2298 = vmatpush1.msra.mxu0 0.0
    %2299 = vmatprep.subr.mxu0 0.0
    %2300 = vmatpush1.msra.mxu0 0.0
    %2301 = vmatprep.subr.mxu0 0.0
    %2302 = vmatpush1.msra.mxu0 0.0
    %2303 = vmatprep.subr.mxu0 0.0
    %2304 = vmatpush1.msra.mxu0 0.0
    %2305 = vmatprep.subr.mxu0 0.0
    %2306 = vmatpush1.msra.mxu0 0.0
    %2307 = vmatprep.subr.mxu0 0.0
    %2308 = vmatpush1.msra.mxu0 0.0
    %2309 = vmatprep.subr.mxu0 0.0
    %2310 = vmatpush1.msra.mxu0 0.0
    %2311 = vmatprep.subr.mxu0 0.0
    %2312 = vmatpush1.msra.mxu0 0.0
    %2313 = vmatprep.subr.mxu0 0.0
    %2314 = vmatpush1.msra.mxu0 0.0
    %2315 = vmatprep.subr.mxu0 0.0
    %2316 = vmatpush1.msra.mxu0 0.0
    %2317 = vmatprep.subr.mxu0 0.0
    %2318 = vmatpush1.msra.mxu0 0.0
    %2319 = vmatprep.subr.mxu0 0.0
    %2320 = vmatpush1.msra.mxu0 0.0
    %2321 = vmatprep.subr.mxu0 0.0
    %2322 = vmatpush1.msra.mxu0 0.0
    %2323 = vmatprep.mubr.f32.mxu0 0.0
    %2324 = vmatmul.mubr.f32.gmra.mrb[0].mxu0 %v2258
    %v2325 = vpop.f32.mrb[0].mxu0
    %v2326 = vadd.f32 0.0, %v2325
    %v2327 = vpop.f32.mrb[0].mxu0
    %v2328 = vadd.f32 0.0, %v2327
    %2329 = vdwg.mxu0
    %2330 = vmatprep.subr.mxu0 %v554
    %2331 = vmatpush1.msra.mxu0 %v553
    %2332 = vmatprep.subr.mxu0 %v562
    %2333 = vmatpush1.msra.mxu0 %v561
    %2334 = vmatprep.subr.mxu0 %v570
    %2335 = vmatpush1.msra.mxu0 %v569
    %2336 = vmatprep.subr.mxu0 %v578
    %2337 = vmatpush1.msra.mxu0 %v577
    %2338 = vmatprep.subr.mxu0 %v586
    %2339 = vmatpush1.msra.mxu0 %v585
    %2340 = vmatprep.subr.mxu0 %v594
    %2341 = vmatpush1.msra.mxu0 %v593
    %2342 = vmatprep.subr.mxu0 %v602
    %2343 = vmatpush1.msra.mxu0 %v601
    %2344 = vmatprep.subr.mxu0 %v610
    %2345 = vmatpush1.msra.mxu0 %v609
    %2346 = vmatprep.subr.mxu0 %v618
    %2347 = vmatpush1.msra.mxu0 %v617
    %2348 = vmatprep.subr.mxu0 %v626
    %2349 = vmatpush1.msra.mxu0 %v625
    %2350 = vmatprep.subr.mxu0 %v634
    %2351 = vmatpush1.msra.mxu0 %v633
    %2352 = vmatprep.subr.mxu0 %v642
    %2353 = vmatpush1.msra.mxu0 %v641
    %2354 = vmatprep.subr.mxu0 %v650
    %2355 = vmatpush1.msra.mxu0 %v649
    %2356 = vmatprep.subr.mxu0 %v658
    %2357 = vmatpush1.msra.mxu0 %v657
    %2358 = vmatprep.subr.mxu0 %v666
    %2359 = vmatpush1.msra.mxu0 %v665
    %2360 = vmatprep.subr.mxu0 %v674
    %2361 = vmatpush1.msra.mxu0 %v673
    %2362 = vmatprep.subr.mxu0 0.0
    %2363 = vmatpush1.msra.mxu0 0.0
    %2364 = vmatprep.subr.mxu0 0.0
    %2365 = vmatpush1.msra.mxu0 0.0
    %2366 = vmatprep.subr.mxu0 0.0
    %2367 = vmatpush1.msra.mxu0 0.0
    %2368 = vmatprep.subr.mxu0 0.0
    %2369 = vmatpush1.msra.mxu0 0.0
    %2370 = vmatprep.subr.mxu0 0.0
    %2371 = vmatpush1.msra.mxu0 0.0
    %2372 = vmatprep.subr.mxu0 0.0
    %2373 = vmatpush1.msra.mxu0 0.0
    %2374 = vmatprep.subr.mxu0 0.0
    %2375 = vmatpush1.msra.mxu0 0.0
    %2376 = vmatprep.subr.mxu0 0.0
    %2377 = vmatpush1.msra.mxu0 0.0
    %2378 = vmatprep.subr.mxu0 0.0
    %2379 = vmatpush1.msra.mxu0 0.0
    %2380 = vmatprep.subr.mxu0 0.0
    %2381 = vmatpush1.msra.mxu0 0.0
    %2382 = vmatprep.subr.mxu0 0.0
    %2383 = vmatpush1.msra.mxu0 0.0
    %2384 = vmatprep.subr.mxu0 0.0
    %2385 = vmatpush1.msra.mxu0 0.0
    %2386 = vmatprep.subr.mxu0 0.0
    %2387 = vmatpush1.msra.mxu0 0.0
    %2388 = vmatprep.subr.mxu0 0.0
    %2389 = vmatpush1.msra.mxu0 0.0
    %2390 = vmatprep.subr.mxu0 0.0
    %2391 = vmatpush1.msra.mxu0 0.0
    %2392 = vmatprep.subr.mxu0 0.0
    %2393 = vmatpush1.msra.mxu0 0.0
    %2394 = vmatprep.mubr.f32.mxu0 0.0
    %2395 = vmatmul.mubr.f32.gmra.mrb[0].mxu0 %v2258
    %v2396 = vpop.f32.mrb[0].mxu0
    %v2397 = vadd.f32 0.0, %v2396
    %v2398 = vpop.f32.mrb[0].mxu0
    %v2399 = vadd.f32 0.0, %v2398
    %2400 = vdwg.mxu0
    %2401 = vmatprep.subr.mxu0 %v556
    %2402 = vmatpush1.msra.mxu0 %v555
    %2403 = vmatprep.subr.mxu0 %v564
    %2404 = vmatpush1.msra.mxu0 %v563
    %2405 = vmatprep.subr.mxu0 %v572
    %2406 = vmatpush1.msra.mxu0 %v571
    %2407 = vmatprep.subr.mxu0 %v580
    %2408 = vmatpush1.msra.mxu0 %v579
    %2409 = vmatprep.subr.mxu0 %v588
    %2410 = vmatpush1.msra.mxu0 %v587
    %2411 = vmatprep.subr.mxu0 %v596
    %2412 = vmatpush1.msra.mxu0 %v595
    %2413 = vmatprep.subr.mxu0 %v604
    %2414 = vmatpush1.msra.mxu0 %v603
    %2415 = vmatprep.subr.mxu0 %v612
    %2416 = vmatpush1.msra.mxu0 %v611
    %2417 = vmatprep.subr.mxu0 %v620
    %2418 = vmatpush1.msra.mxu0 %v619
    %2419 = vmatprep.subr.mxu0 %v628
    %2420 = vmatpush1.msra.mxu0 %v627
    %2421 = vmatprep.subr.mxu0 %v636
    %2422 = vmatpush1.msra.mxu0 %v635
    %2423 = vmatprep.subr.mxu0 %v644
    %2424 = vmatpush1.msra.mxu0 %v643
    %2425 = vmatprep.subr.mxu0 %v652
    %2426 = vmatpush1.msra.mxu0 %v651
    %2427 = vmatprep.subr.mxu0 %v660
    %2428 = vmatpush1.msra.mxu0 %v659
    %2429 = vmatprep.subr.mxu0 %v668
    %2430 = vmatpush1.msra.mxu0 %v667
    %2431 = vmatprep.subr.mxu0 %v676
    %2432 = vmatpush1.msra.mxu0 %v675
    %2433 = vmatprep.subr.mxu0 0.0
    %2434 = vmatpush1.msra.mxu0 0.0
    %2435 = vmatprep.subr.mxu0 0.0
    %2436 = vmatpush1.msra.mxu0 0.0
    %2437 = vmatprep.subr.mxu0 0.0
    %2438 = vmatpush1.msra.mxu0 0.0
    %2439 = vmatprep.subr.mxu0 0.0
    %2440 = vmatpush1.msra.mxu0 0.0
    %2441 = vmatprep.subr.mxu0 0.0
    %2442 = vmatpush1.msra.mxu0 0.0
    %2443 = vmatprep.subr.mxu0 0.0
    %2444 = vmatpush1.msra.mxu0 0.0
    %2445 = vmatprep.subr.mxu0 0.0
    %2446 = vmatpush1.msra.mxu0 0.0
    %2447 = vmatprep.subr.mxu0 0.0
    %2448 = vmatpush1.msra.mxu0 0.0
    %2449 = vmatprep.subr.mxu0 0.0
    %2450 = vmatpush1.msra.mxu0 0.0
    %2451 = vmatprep.subr.mxu0 0.0
    %2452 = vmatpush1.msra.mxu0 0.0
    %2453 = vmatprep.subr.mxu0 0.0
    %2454 = vmatpush1.msra.mxu0 0.0
    %2455 = vmatprep.subr.mxu0 0.0
    %2456 = vmatpush1.msra.mxu0 0.0
    %2457 = vmatprep.subr.mxu0 0.0
    %2458 = vmatpush1.msra.mxu0 0.0
    %2459 = vmatprep.subr.mxu0 0.0
    %2460 = vmatpush1.msra.mxu0 0.0
    %2461 = vmatprep.subr.mxu0 0.0
    %2462 = vmatpush1.msra.mxu0 0.0
    %2463 = vmatprep.subr.mxu0 0.0
    %2464 = vmatpush1.msra.mxu0 0.0
    %2465 = vmatprep.mubr.f32.mxu0 0.0
    %2466 = vmatmul.mubr.f32.gmra.mrb[0].mxu0 %v2258
    %v2467 = vpop.f32.mrb[0].mxu0
    %v2468 = vadd.f32 0.0, %v2467
    %v2469 = vpop.f32.mrb[0].mxu0
    %v2470 = vadd.f32 0.0, %v2469
    %2471 = vdwg.mxu0
    %2472 = vmatprep.subr.mxu0 %v558
    %2473 = vmatpush1.msra.mxu0 %v557
    %2474 = vmatprep.subr.mxu0 %v566
    %2475 = vmatpush1.msra.mxu0 %v565
    %2476 = vmatprep.subr.mxu0 %v574
    %2477 = vmatpush1.msra.mxu0 %v573
    %2478 = vmatprep.subr.mxu0 %v582
    %2479 = vmatpush1.msra.mxu0 %v581
    %2480 = vmatprep.subr.mxu0 %v590
    %2481 = vmatpush1.msra.mxu0 %v589
    %2482 = vmatprep.subr.mxu0 %v598
    %2483 = vmatpush1.msra.mxu0 %v597
    %2484 = vmatprep.subr.mxu0 %v606
    %2485 = vmatpush1.msra.mxu0 %v605
    %2486 = vmatprep.subr.mxu0 %v614
    %2487 = vmatpush1.msra.mxu0 %v613
    %2488 = vmatprep.subr.mxu0 %v622
    %2489 = vmatpush1.msra.mxu0 %v621
    %2490 = vmatprep.subr.mxu0 %v630
    %2491 = vmatpush1.msra.mxu0 %v629
    %2492 = vmatprep.subr.mxu0 %v638
    %2493 = vmatpush1.msra.mxu0 %v637
    %2494 = vmatprep.subr.mxu0 %v646
    %2495 = vmatpush1.msra.mxu0 %v645
    %2496 = vmatprep.subr.mxu0 %v654
    %2497 = vmatpush1.msra.mxu0 %v653
    %2498 = vmatprep.subr.mxu0 %v662
    %2499 = vmatpush1.msra.mxu0 %v661
    %2500 = vmatprep.subr.mxu0 %v670
    %2501 = vmatpush1.msra.mxu0 %v669
    %2502 = vmatprep.subr.mxu0 %v678
    %2503 = vmatpush1.msra.mxu0 %v677
    %2504 = vmatprep.subr.mxu0 0.0
    %2505 = vmatpush1.msra.mxu0 0.0
    %2506 = vmatprep.subr.mxu0 0.0
    %2507 = vmatpush1.msra.mxu0 0.0
    %2508 = vmatprep.subr.mxu0 0.0
    %2509 = vmatpush1.msra.mxu0 0.0
    %2510 = vmatprep.subr.mxu0 0.0
    %2511 = vmatpush1.msra.mxu0 0.0
    %2512 = vmatprep.subr.mxu0 0.0
    %2513 = vmatpush1.msra.mxu0 0.0
    %2514 = vmatprep.subr.mxu0 0.0
    %2515 = vmatpush1.msra.mxu0 0.0
    %2516 = vmatprep.subr.mxu0 0.0
    %2517 = vmatpush1.msra.mxu0 0.0
    %2518 = vmatprep.subr.mxu0 0.0
    %2519 = vmatpush1.msra.mxu0 0.0
    %2520 = vmatprep.subr.mxu0 0.0
    %2521 = vmatpush1.msra.mxu0 0.0
    %2522 = vmatprep.subr.mxu0 0.0
    %2523 = vmatpush1.msra.mxu0 0.0
    %2524 = vmatprep.subr.mxu0 0.0
    %2525 = vmatpush1.msra.mxu0 0.0
    %2526 = vmatprep.subr.mxu0 0.0
    %2527 = vmatpush1.msra.mxu0 0.0
    %2528 = vmatprep.subr.mxu0 0.0
    %2529 = vmatpush1.msra.mxu0 0.0
    %2530 = vmatprep.subr.mxu0 0.0
    %2531 = vmatpush1.msra.mxu0 0.0
    %2532 = vmatprep.subr.mxu0 0.0
    %2533 = vmatpush1.msra.mxu0 0.0
    %2534 = vmatprep.subr.mxu0 0.0
    %2535 = vmatpush1.msra.mxu0 0.0
    %2536 = vmatprep.mubr.f32.mxu0 0.0
    %2537 = vmatmul.mubr.f32.gmra.mrb[0].mxu0 %v2258
    %v2538 = vpop.f32.mrb[0].mxu0
    %v2539 = vadd.f32 0.0, %v2538
    %v2540 = vpop.f32.mrb[0].mxu0
    %v2541 = vadd.f32 0.0, %v2540
    %2542 = vdwg.mxu0
    %v2543 = vsel %vm550, %v2326, %v2468
    %v2544 = vsel %vm550, %v2328, %v2470
    %v2545 = vsel %vm550, %v2397, %v2539
    %v2546 = vsel %vm550, %v2399, %v2541
    %v2547 = vadd.f32 %v419, %v2543
    %v2548 = vadd.f32 %v421, %v2544
    %v2549 = vadd.f32 %v532, %v2545
    %v2550 = vadd.f32 %v534, %v2546
    %v2551 = vxor.u32 %v2547, 2147483648
    %v2552 = vxor.u32 %v2548, 2147483648
    %v2553 = vxor.u32 %v2549, 2147483648
    %v2554 = vmul.f32 %v2551, 1.442695
    %v2555 = vpow.pop %v2554
    %v2556 = vmul.f32 %v2552, 1.442695
    %v2557 = vpow.pop %v2556
    %v2558 = vmul.f32 %v2553, 1.442695
    %v2559 = vpow.pop %v2558
    %v2560 = vadd.f32 %v2555, 1.0
    %v2561 = vadd.f32 %v2557, 1.0
    %v2562 = vadd.f32 %v2559, 1.0
    %v2563 = vrcp.pop %v2560
    %v2564 = vmul.f32 1.0, %v2563
    %v2565 = vrcp.pop %v2561
    %v2566 = vmul.f32 1.0, %v2565
    %v2567 = vrcp.pop %v2562
    %v2568 = vmul.f32 1.0, %v2567
    %v2569 = vtanh.pop %v2550
    %v2570 = vmul.f32 %v2566, %v2256
    %v2571 = vmul.f32 %v2564, %v2569
    %v2572 = vadd.f32 %v2570, %v2571
    %v2573 = vtanh.pop %v2572
    %v2574 = vmul.f32 %v2568, %v2573
    %2575 = vmatprep.subr.mxu0 %v552
    %2576 = vmatpush1.msra.mxu0 %v551
    %2577 = vmatprep.subr.mxu0 %v560
    %2578 = vmatpush1.msra.mxu0 %v559
    %2579 = vmatprep.subr.mxu0 %v568
    %2580 = vmatpush1.msra.mxu0 %v567
    %2581 = vmatprep.subr.mxu0 %v576
    %2582 = vmatpush1.msra.mxu0 %v575
    %2583 = vmatprep.subr.mxu0 %v584
    %2584 = vmatpush1.msra.mxu0 %v583
    %2585 = vmatprep.subr.mxu0 %v592
    %2586 = vmatpush1.msra.mxu0 %v591
    %2587 = vmatprep.subr.mxu0 %v600
    %2588 = vmatpush1.msra.mxu0 %v599
    %2589 = vmatprep.subr.mxu0 %v608
    %2590 = vmatpush1.msra.mxu0 %v607
    %2591 = vmatprep.subr.mxu0 %v616
    %2592 = vmatpush1.msra.mxu0 %v615
    %2593 = vmatprep.subr.mxu0 %v624
    %2594 = vmatpush1.msra.mxu0 %v623
    %2595 = vmatprep.subr.mxu0 %v632
    %2596 = vmatpush1.msra.mxu0 %v631
    %2597 = vmatprep.subr.mxu0 %v640
    %2598 = vmatpush1.msra.mxu0 %v639
    %2599 = vmatprep.subr.mxu0 %v648
    %2600 = vmatpush1.msra.mxu0 %v647
    %2601 = vmatprep.subr.mxu0 %v656
    %2602 = vmatpush1.msra.mxu0 %v655
    %2603 = vmatprep.subr.mxu0 %v664
    %2604 = vmatpush1.msra.mxu0 %v663
    %2605 = vmatprep.subr.mxu0 %v672
    %2606 = vmatpush1.msra.mxu0 %v671
    %2607 = vmatprep.subr.mxu0 0.0
    %2608 = vmatpush1.msra.mxu0 0.0
    %2609 = vmatprep.subr.mxu0 0.0
    %2610 = vmatpush1.msra.mxu0 0.0
    %2611 = vmatprep.subr.mxu0 0.0
    %2612 = vmatpush1.msra.mxu0 0.0
    %2613 = vmatprep.subr.mxu0 0.0
    %2614 = vmatpush1.msra.mxu0 0.0
    %2615 = vmatprep.subr.mxu0 0.0
    %2616 = vmatpush1.msra.mxu0 0.0
    %2617 = vmatprep.subr.mxu0 0.0
    %2618 = vmatpush1.msra.mxu0 0.0
    %2619 = vmatprep.subr.mxu0 0.0
    %2620 = vmatpush1.msra.mxu0 0.0
    %2621 = vmatprep.subr.mxu0 0.0
    %2622 = vmatpush1.msra.mxu0 0.0
    %2623 = vmatprep.subr.mxu0 0.0
    %2624 = vmatpush1.msra.mxu0 0.0
    %2625 = vmatprep.subr.mxu0 0.0
    %2626 = vmatpush1.msra.mxu0 0.0
    %2627 = vmatprep.subr.mxu0 0.0
    %2628 = vmatpush1.msra.mxu0 0.0
    %2629 = vmatprep.subr.mxu0 0.0
    %2630 = vmatpush1.msra.mxu0 0.0
    %2631 = vmatprep.subr.mxu0 0.0
    %2632 = vmatpush1.msra.mxu0 0.0
    %2633 = vmatprep.subr.mxu0 0.0
    %2634 = vmatpush1.msra.mxu0 0.0
    %2635 = vmatprep.subr.mxu0 0.0
    %2636 = vmatpush1.msra.mxu0 0.0
    %2637 = vmatprep.subr.mxu0 0.0
    %2638 = vmatpush1.msra.mxu0 0.0
    %2639 = vmatprep.mubr.f32.mxu0 0.0
    %2640 = vmatmul.mubr.f32.gmra.mrb[0].mxu0 %v2574
    %v2641 = vpop.f32.mrb[0].mxu0
    %v2642 = vadd.f32 0.0, %v2641
    %v2643 = vpop.f32.mrb[0].mxu0
    %v2644 = vadd.f32 0.0, %v2643
    %2645 = vdwg.mxu0
    %2646 = vmatprep.subr.mxu0 %v554
    %2647 = vmatpush1.msra.mxu0 %v553
    %2648 = vmatprep.subr.mxu0 %v562
    %2649 = vmatpush1.msra.mxu0 %v561
    %2650 = vmatprep.subr.mxu0 %v570
    %2651 = vmatpush1.msra.mxu0 %v569
    %2652 = vmatprep.subr.mxu0 %v578
    %2653 = vmatpush1.msra.mxu0 %v577
    %2654 = vmatprep.subr.mxu0 %v586
    %2655 = vmatpush1.msra.mxu0 %v585
    %2656 = vmatprep.subr.mxu0 %v594
    %2657 = vmatpush1.msra.mxu0 %v593
    %2658 = vmatprep.subr.mxu0 %v602
    %2659 = vmatpush1.msra.mxu0 %v601
    %2660 = vmatprep.subr.mxu0 %v610
    %2661 = vmatpush1.msra.mxu0 %v609
    %2662 = vmatprep.subr.mxu0 %v618
    %2663 = vmatpush1.msra.mxu0 %v617
    %2664 = vmatprep.subr.mxu0 %v626
    %2665 = vmatpush1.msra.mxu0 %v625
    %2666 = vmatprep.subr.mxu0 %v634
    %2667 = vmatpush1.msra.mxu0 %v633
    %2668 = vmatprep.subr.mxu0 %v642
    %2669 = vmatpush1.msra.mxu0 %v641
    %2670 = vmatprep.subr.mxu0 %v650
    %2671 = vmatpush1.msra.mxu0 %v649
    %2672 = vmatprep.subr.mxu0 %v658
    %2673 = vmatpush1.msra.mxu0 %v657
    %2674 = vmatprep.subr.mxu0 %v666
    %2675 = vmatpush1.msra.mxu0 %v665
    %2676 = vmatprep.subr.mxu0 %v674
    %2677 = vmatpush1.msra.mxu0 %v673
    %2678 = vmatprep.subr.mxu0 0.0
    %2679 = vmatpush1.msra.mxu0 0.0
    %2680 = vmatprep.subr.mxu0 0.0
    %2681 = vmatpush1.msra.mxu0 0.0
    %2682 = vmatprep.subr.mxu0 0.0
    %2683 = vmatpush1.msra.mxu0 0.0
    %2684 = vmatprep.subr.mxu0 0.0
    %2685 = vmatpush1.msra.mxu0 0.0
    %2686 = vmatprep.subr.mxu0 0.0
    %2687 = vmatpush1.msra.mxu0 0.0
    %2688 = vmatprep.subr.mxu0 0.0
    %2689 = vmatpush1.msra.mxu0 0.0
    %2690 = vmatprep.subr.mxu0 0.0
    %2691 = vmatpush1.msra.mxu0 0.0
    %2692 = vmatprep.subr.mxu0 0.0
    %2693 = vmatpush1.msra.mxu0 0.0
    %2694 = vmatprep.subr.mxu0 0.0
    %2695 = vmatpush1.msra.mxu0 0.0
    %2696 = vmatprep.subr.mxu0 0.0
    %2697 = vmatpush1.msra.mxu0 0.0
    %2698 = vmatprep.subr.mxu0 0.0
    %2699 = vmatpush1.msra.mxu0 0.0
    %2700 = vmatprep.subr.mxu0 0.0
    %2701 = vmatpush1.msra.mxu0 0.0
    %2702 = vmatprep.subr.mxu0 0.0
    %2703 = vmatpush1.msra.mxu0 0.0
    %2704 = vmatprep.subr.mxu0 0.0
    %2705 = vmatpush1.msra.mxu0 0.0
    %2706 = vmatprep.subr.mxu0 0.0
    %2707 = vmatpush1.msra.mxu0 0.0
    %2708 = vmatprep.subr.mxu0 0.0
    %2709 = vmatpush1.msra.mxu0 0.0
    %2710 = vmatprep.mubr.f32.mxu0 0.0
    %2711 = vmatmul.mubr.f32.gmra.mrb[0].mxu0 %v2574
    %v2712 = vpop.f32.mrb[0].mxu0
    %v2713 = vadd.f32 0.0, %v2712
    %v2714 = vpop.f32.mrb[0].mxu0
    %v2715 = vadd.f32 0.0, %v2714
    %2716 = vdwg.mxu0
    %2717 = vmatprep.subr.mxu0 %v556
    %2718 = vmatpush1.msra.mxu0 %v555
    %2719 = vmatprep.subr.mxu0 %v564
    %2720 = vmatpush1.msra.mxu0 %v563
    %2721 = vmatprep.subr.mxu0 %v572
    %2722 = vmatpush1.msra.mxu0 %v571
    %2723 = vmatprep.subr.mxu0 %v580
    %2724 = vmatpush1.msra.mxu0 %v579
    %2725 = vmatprep.subr.mxu0 %v588
    %2726 = vmatpush1.msra.mxu0 %v587
    %2727 = vmatprep.subr.mxu0 %v596
    %2728 = vmatpush1.msra.mxu0 %v595
    %2729 = vmatprep.subr.mxu0 %v604
    %2730 = vmatpush1.msra.mxu0 %v603
    %2731 = vmatprep.subr.mxu0 %v612
    %2732 = vmatpush1.msra.mxu0 %v611
    %2733 = vmatprep.subr.mxu0 %v620
    %2734 = vmatpush1.msra.mxu0 %v619
    %2735 = vmatprep.subr.mxu0 %v628
    %2736 = vmatpush1.msra.mxu0 %v627
    %2737 = vmatprep.subr.mxu0 %v636
    %2738 = vmatpush1.msra.mxu0 %v635
    %2739 = vmatprep.subr.mxu0 %v644
    %2740 = vmatpush1.msra.mxu0 %v643
    %2741 = vmatprep.subr.mxu0 %v652
    %2742 = vmatpush1.msra.mxu0 %v651
    %2743 = vmatprep.subr.mxu0 %v660
    %2744 = vmatpush1.msra.mxu0 %v659
    %2745 = vmatprep.subr.mxu0 %v668
    %2746 = vmatpush1.msra.mxu0 %v667
    %2747 = vmatprep.subr.mxu0 %v676
    %2748 = vmatpush1.msra.mxu0 %v675
    %2749 = vmatprep.subr.mxu0 0.0
    %2750 = vmatpush1.msra.mxu0 0.0
    %2751 = vmatprep.subr.mxu0 0.0
    %2752 = vmatpush1.msra.mxu0 0.0
    %2753 = vmatprep.subr.mxu0 0.0
    %2754 = vmatpush1.msra.mxu0 0.0
    %2755 = vmatprep.subr.mxu0 0.0
    %2756 = vmatpush1.msra.mxu0 0.0
    %2757 = vmatprep.subr.mxu0 0.0
    %2758 = vmatpush1.msra.mxu0 0.0
    %2759 = vmatprep.subr.mxu0 0.0
    %2760 = vmatpush1.msra.mxu0 0.0
    %2761 = vmatprep.subr.mxu0 0.0
    %2762 = vmatpush1.msra.mxu0 0.0
    %2763 = vmatprep.subr.mxu0 0.0
    %2764 = vmatpush1.msra.mxu0 0.0
    %2765 = vmatprep.subr.mxu0 0.0
    %2766 = vmatpush1.msra.mxu0 0.0
    %2767 = vmatprep.subr.mxu0 0.0
    %2768 = vmatpush1.msra.mxu0 0.0
    %2769 = vmatprep.subr.mxu0 0.0
    %2770 = vmatpush1.msra.mxu0 0.0
    %2771 = vmatprep.subr.mxu0 0.0
    %2772 = vmatpush1.msra.mxu0 0.0
    %2773 = vmatprep.subr.mxu0 0.0
    %2774 = vmatpush1.msra.mxu0 0.0
    %2775 = vmatprep.subr.mxu0 0.0
    %2776 = vmatpush1.msra.mxu0 0.0
    %2777 = vmatprep.subr.mxu0 0.0
    %2778 = vmatpush1.msra.mxu0 0.0
    %2779 = vmatprep.subr.mxu0 0.0
    %2780 = vmatpush1.msra.mxu0 0.0
    %2781 = vmatprep.mubr.f32.mxu0 0.0
    %2782 = vmatmul.mubr.f32.gmra.mrb[0].mxu0 %v2574
    %v2783 = vpop.f32.mrb[0].mxu0
    %v2784 = vadd.f32 0.0, %v2783
    %v2785 = vpop.f32.mrb[0].mxu0
    %v2786 = vadd.f32 0.0, %v2785
    %2787 = vdwg.mxu0
    %2788 = vmatprep.subr.mxu0 %v558
    %2789 = vmatpush1.msra.mxu0 %v557
    %2790 = vmatprep.subr.mxu0 %v566
    %2791 = vmatpush1.msra.mxu0 %v565
    %2792 = vmatprep.subr.mxu0 %v574
    %2793 = vmatpush1.msra.mxu0 %v573
    %2794 = vmatprep.subr.mxu0 %v582
    %2795 = vmatpush1.msra.mxu0 %v581
    %2796 = vmatprep.subr.mxu0 %v590
    %2797 = vmatpush1.msra.mxu0 %v589
    %2798 = vmatprep.subr.mxu0 %v598
    %2799 = vmatpush1.msra.mxu0 %v597
    %2800 = vmatprep.subr.mxu0 %v606
    %2801 = vmatpush1.msra.mxu0 %v605
    %2802 = vmatprep.subr.mxu0 %v614
    %2803 = vmatpush1.msra.mxu0 %v613
    %2804 = vmatprep.subr.mxu0 %v622
    %2805 = vmatpush1.msra.mxu0 %v621
    %2806 = vmatprep.subr.mxu0 %v630
    %2807 = vmatpush1.msra.mxu0 %v629
    %2808 = vmatprep.subr.mxu0 %v638
    %2809 = vmatpush1.msra.mxu0 %v637
    %2810 = vmatprep.subr.mxu0 %v646
    %2811 = vmatpush1.msra.mxu0 %v645
    %2812 = vmatprep.subr.mxu0 %v654
    %2813 = vmatpush1.msra.mxu0 %v653
    %2814 = vmatprep.subr.mxu0 %v662
    %2815 = vmatpush1.msra.mxu0 %v661
    %2816 = vmatprep.subr.mxu0 %v670
    %2817 = vmatpush1.msra.mxu0 %v669
    %2818 = vmatprep.subr.mxu0 %v678
    %2819 = vmatpush1.msra.mxu0 %v677
    %2820 = vmatprep.subr.mxu0 0.0
    %2821 = vmatpush1.msra.mxu0 0.0
    %2822 = vmatprep.subr.mxu0 0.0
    %2823 = vmatpush1.msra.mxu0 0.0
    %2824 = vmatprep.subr.mxu0 0.0
    %2825 = vmatpush1.msra.mxu0 0.0
    %2826 = vmatprep.subr.mxu0 0.0
    %2827 = vmatpush1.msra.mxu0 0.0
    %2828 = vmatprep.subr.mxu0 0.0
    %2829 = vmatpush1.msra.mxu0 0.0
    %2830 = vmatprep.subr.mxu0 0.0
    %2831 = vmatpush1.msra.mxu0 0.0
    %2832 = vmatprep.subr.mxu0 0.0
    %2833 = vmatpush1.msra.mxu0 0.0
    %2834 = vmatprep.subr.mxu0 0.0
    %2835 = vmatpush1.msra.mxu0 0.0
    %2836 = vmatprep.subr.mxu0 0.0
    %2837 = vmatpush1.msra.mxu0 0.0
    %2838 = vmatprep.subr.mxu0 0.0
    %2839 = vmatpush1.msra.mxu0 0.0
    %2840 = vmatprep.subr.mxu0 0.0
    %2841 = vmatpush1.msra.mxu0 0.0
    %2842 = vmatprep.subr.mxu0 0.0
    %2843 = vmatpush1.msra.mxu0 0.0
    %2844 = vmatprep.subr.mxu0 0.0
    %2845 = vmatpush1.msra.mxu0 0.0
    %2846 = vmatprep.subr.mxu0 0.0
    %2847 = vmatpush1.msra.mxu0 0.0
    %2848 = vmatprep.subr.mxu0 0.0
    %2849 = vmatpush1.msra.mxu0 0.0
    %2850 = vmatprep.subr.mxu0 0.0
    %2851 = vmatpush1.msra.mxu0 0.0
    %2852 = vmatprep.mubr.f32.mxu0 0.0
    %2853 = vmatmul.mubr.f32.gmra.mrb[0].mxu0 %v2574
    %v2854 = vpop.f32.mrb[0].mxu0
    %v2855 = vadd.f32 0.0, %v2854
    %v2856 = vpop.f32.mrb[0].mxu0
    %v2857 = vadd.f32 0.0, %v2856
    %2858 = vdwg.mxu0
    %v2859 = vsel %vm550, %v2642, %v2784
    %v2860 = vsel %vm550, %v2644, %v2786
    %v2861 = vsel %vm550, %v2713, %v2855
    %v2862 = vsel %vm550, %v2715, %v2857
    %v2863 = vadd.f32 %v425, %v2859
    %v2864 = vadd.f32 %v427, %v2860
    %v2865 = vadd.f32 %v538, %v2861
    %v2866 = vadd.f32 %v540, %v2862
    %v2867 = vxor.u32 %v2863, 2147483648
    %v2868 = vxor.u32 %v2864, 2147483648
    %v2869 = vxor.u32 %v2865, 2147483648
    %v2870 = vmul.f32 %v2867, 1.442695
    %v2871 = vpow.pop %v2870
    %v2872 = vmul.f32 %v2868, 1.442695
    %v2873 = vpow.pop %v2872
    %v2874 = vmul.f32 %v2869, 1.442695
    %v2875 = vpow.pop %v2874
    %v2876 = vadd.f32 %v2871, 1.0
    %v2877 = vadd.f32 %v2873, 1.0
    %v2878 = vadd.f32 %v2875, 1.0
    %v2879 = vrcp.pop %v2876
    %v2880 = vmul.f32 1.0, %v2879
    %v2881 = vrcp.pop %v2877
    %v2882 = vmul.f32 1.0, %v2881
    %v2883 = vrcp.pop %v2878
    %v2884 = vmul.f32 1.0, %v2883
    %v2885 = vtanh.pop %v2866
    %v2886 = vmul.f32 %v2882, %v2572
    %v2887 = vmul.f32 %v2880, %v2885
    %v2888 = vadd.f32 %v2886, %v2887
    %v2889 = vtanh.pop %v2888
    %v2890 = vmul.f32 %v2884, %v2889
    %2891 = vmatprep.subr.mxu0 %v552
    %2892 = vmatpush1.msra.mxu0 %v551
    %2893 = vmatprep.subr.mxu0 %v560
    %2894 = vmatpush1.msra.mxu0 %v559
    %2895 = vmatprep.subr.mxu0 %v568
    %2896 = vmatpush1.msra.mxu0 %v567
    %2897 = vmatprep.subr.mxu0 %v576
    %2898 = vmatpush1.msra.mxu0 %v575
    %2899 = vmatprep.subr.mxu0 %v584
    %2900 = vmatpush1.msra.mxu0 %v583
    %2901 = vmatprep.subr.mxu0 %v592
    %2902 = vmatpush1.msra.mxu0 %v591
    %2903 = vmatprep.subr.mxu0 %v600
    %2904 = vmatpush1.msra.mxu0 %v599
    %2905 = vmatprep.subr.mxu0 %v608
    %2906 = vmatpush1.msra.mxu0 %v607
    %2907 = vmatprep.subr.mxu0 %v616
    %2908 = vmatpush1.msra.mxu0 %v615
    %2909 = vmatprep.subr.mxu0 %v624
    %2910 = vmatpush1.msra.mxu0 %v623
    %2911 = vmatprep.subr.mxu0 %v632
    %2912 = vmatpush1.msra.mxu0 %v631
    %2913 = vmatprep.subr.mxu0 %v640
    %2914 = vmatpush1.msra.mxu0 %v639
    %2915 = vmatprep.subr.mxu0 %v648
    %2916 = vmatpush1.msra.mxu0 %v647
    %2917 = vmatprep.subr.mxu0 %v656
    %2918 = vmatpush1.msra.mxu0 %v655
    %2919 = vmatprep.subr.mxu0 %v664
    %2920 = vmatpush1.msra.mxu0 %v663
    %2921 = vmatprep.subr.mxu0 %v672
    %2922 = vmatpush1.msra.mxu0 %v671
    %2923 = vmatprep.subr.mxu0 0.0
    %2924 = vmatpush1.msra.mxu0 0.0
    %2925 = vmatprep.subr.mxu0 0.0
    %2926 = vmatpush1.msra.mxu0 0.0
    %2927 = vmatprep.subr.mxu0 0.0
    %2928 = vmatpush1.msra.mxu0 0.0
    %2929 = vmatprep.subr.mxu0 0.0
    %2930 = vmatpush1.msra.mxu0 0.0
    %2931 = vmatprep.subr.mxu0 0.0
    %2932 = vmatpush1.msra.mxu0 0.0
    %2933 = vmatprep.subr.mxu0 0.0
    %2934 = vmatpush1.msra.mxu0 0.0
    %2935 = vmatprep.subr.mxu0 0.0
    %2936 = vmatpush1.msra.mxu0 0.0
    %2937 = vmatprep.subr.mxu0 0.0
    %2938 = vmatpush1.msra.mxu0 0.0
    %2939 = vmatprep.subr.mxu0 0.0
    %2940 = vmatpush1.msra.mxu0 0.0
    %2941 = vmatprep.subr.mxu0 0.0
    %2942 = vmatpush1.msra.mxu0 0.0
    %2943 = vmatprep.subr.mxu0 0.0
    %2944 = vmatpush1.msra.mxu0 0.0
    %2945 = vmatprep.subr.mxu0 0.0
    %2946 = vmatpush1.msra.mxu0 0.0
    %2947 = vmatprep.subr.mxu0 0.0
    %2948 = vmatpush1.msra.mxu0 0.0
    %2949 = vmatprep.subr.mxu0 0.0
    %2950 = vmatpush1.msra.mxu0 0.0
    %2951 = vmatprep.subr.mxu0 0.0
    %2952 = vmatpush1.msra.mxu0 0.0
    %2953 = vmatprep.subr.mxu0 0.0
    %2954 = vmatpush1.msra.mxu0 0.0
    %2955 = vmatprep.mubr.f32.mxu0 0.0
    %2956 = vmatmul.mubr.f32.gmra.mrb[0].mxu0 %v2890
    %v2957 = vpop.f32.mrb[0].mxu0
    %v2958 = vadd.f32 0.0, %v2957
    %v2959 = vpop.f32.mrb[0].mxu0
    %v2960 = vadd.f32 0.0, %v2959
    %2961 = vdwg.mxu0
    %2962 = vmatprep.subr.mxu0 %v554
    %2963 = vmatpush1.msra.mxu0 %v553
    %2964 = vmatprep.subr.mxu0 %v562
    %2965 = vmatpush1.msra.mxu0 %v561
    %2966 = vmatprep.subr.mxu0 %v570
    %2967 = vmatpush1.msra.mxu0 %v569
    %2968 = vmatprep.subr.mxu0 %v578
    %2969 = vmatpush1.msra.mxu0 %v577
    %2970 = vmatprep.subr.mxu0 %v586
    %2971 = vmatpush1.msra.mxu0 %v585
    %2972 = vmatprep.subr.mxu0 %v594
    %2973 = vmatpush1.msra.mxu0 %v593
    %2974 = vmatprep.subr.mxu0 %v602
    %2975 = vmatpush1.msra.mxu0 %v601
    %2976 = vmatprep.subr.mxu0 %v610
    %2977 = vmatpush1.msra.mxu0 %v609
    %2978 = vmatprep.subr.mxu0 %v618
    %2979 = vmatpush1.msra.mxu0 %v617
    %2980 = vmatprep.subr.mxu0 %v626
    %2981 = vmatpush1.msra.mxu0 %v625
    %2982 = vmatprep.subr.mxu0 %v634
    %2983 = vmatpush1.msra.mxu0 %v633
    %2984 = vmatprep.subr.mxu0 %v642
    %2985 = vmatpush1.msra.mxu0 %v641
    %2986 = vmatprep.subr.mxu0 %v650
    %2987 = vmatpush1.msra.mxu0 %v649
    %2988 = vmatprep.subr.mxu0 %v658
    %2989 = vmatpush1.msra.mxu0 %v657
    %2990 = vmatprep.subr.mxu0 %v666
    %2991 = vmatpush1.msra.mxu0 %v665
    %2992 = vmatprep.subr.mxu0 %v674
    %2993 = vmatpush1.msra.mxu0 %v673
    %2994 = vmatprep.subr.mxu0 0.0
    %2995 = vmatpush1.msra.mxu0 0.0
    %2996 = vmatprep.subr.mxu0 0.0
    %2997 = vmatpush1.msra.mxu0 0.0
    %2998 = vmatprep.subr.mxu0 0.0
    %2999 = vmatpush1.msra.mxu0 0.0
    %3000 = vmatprep.subr.mxu0 0.0
    %3001 = vmatpush1.msra.mxu0 0.0
    %3002 = vmatprep.subr.mxu0 0.0
    %3003 = vmatpush1.msra.mxu0 0.0
    %3004 = vmatprep.subr.mxu0 0.0
    %3005 = vmatpush1.msra.mxu0 0.0
    %3006 = vmatprep.subr.mxu0 0.0
    %3007 = vmatpush1.msra.mxu0 0.0
    %3008 = vmatprep.subr.mxu0 0.0
    %3009 = vmatpush1.msra.mxu0 0.0
    %3010 = vmatprep.subr.mxu0 0.0
    %3011 = vmatpush1.msra.mxu0 0.0
    %3012 = vmatprep.subr.mxu0 0.0
    %3013 = vmatpush1.msra.mxu0 0.0
    %3014 = vmatprep.subr.mxu0 0.0
    %3015 = vmatpush1.msra.mxu0 0.0
    %3016 = vmatprep.subr.mxu0 0.0
    %3017 = vmatpush1.msra.mxu0 0.0
    %3018 = vmatprep.subr.mxu0 0.0
    %3019 = vmatpush1.msra.mxu0 0.0
    %3020 = vmatprep.subr.mxu0 0.0
    %3021 = vmatpush1.msra.mxu0 0.0
    %3022 = vmatprep.subr.mxu0 0.0
    %3023 = vmatpush1.msra.mxu0 0.0
    %3024 = vmatprep.subr.mxu0 0.0
    %3025 = vmatpush1.msra.mxu0 0.0
    %3026 = vmatprep.mubr.f32.mxu0 0.0
    %3027 = vmatmul.mubr.f32.gmra.mrb[0].mxu0 %v2890
    %v3028 = vpop.f32.mrb[0].mxu0
    %v3029 = vadd.f32 0.0, %v3028
    %v3030 = vpop.f32.mrb[0].mxu0
    %v3031 = vadd.f32 0.0, %v3030
    %3032 = vdwg.mxu0
    %3033 = vmatprep.subr.mxu0 %v556
    %3034 = vmatpush1.msra.mxu0 %v555
    %3035 = vmatprep.subr.mxu0 %v564
    %3036 = vmatpush1.msra.mxu0 %v563
    %3037 = vmatprep.subr.mxu0 %v572
    %3038 = vmatpush1.msra.mxu0 %v571
    %3039 = vmatprep.subr.mxu0 %v580
    %3040 = vmatpush1.msra.mxu0 %v579
    %3041 = vmatprep.subr.mxu0 %v588
    %3042 = vmatpush1.msra.mxu0 %v587
    %3043 = vmatprep.subr.mxu0 %v596
    %3044 = vmatpush1.msra.mxu0 %v595
    %3045 = vmatprep.subr.mxu0 %v604
    %3046 = vmatpush1.msra.mxu0 %v603
    %3047 = vmatprep.subr.mxu0 %v612
    %3048 = vmatpush1.msra.mxu0 %v611
    %3049 = vmatprep.subr.mxu0 %v620
    %3050 = vmatpush1.msra.mxu0 %v619
    %3051 = vmatprep.subr.mxu0 %v628
    %3052 = vmatpush1.msra.mxu0 %v627
    %3053 = vmatprep.subr.mxu0 %v636
    %3054 = vmatpush1.msra.mxu0 %v635
    %3055 = vmatprep.subr.mxu0 %v644
    %3056 = vmatpush1.msra.mxu0 %v643
    %3057 = vmatprep.subr.mxu0 %v652
    %3058 = vmatpush1.msra.mxu0 %v651
    %3059 = vmatprep.subr.mxu0 %v660
    %3060 = vmatpush1.msra.mxu0 %v659
    %3061 = vmatprep.subr.mxu0 %v668
    %3062 = vmatpush1.msra.mxu0 %v667
    %3063 = vmatprep.subr.mxu0 %v676
    %3064 = vmatpush1.msra.mxu0 %v675
    %3065 = vmatprep.subr.mxu0 0.0
    %3066 = vmatpush1.msra.mxu0 0.0
    %3067 = vmatprep.subr.mxu0 0.0
    %3068 = vmatpush1.msra.mxu0 0.0
    %3069 = vmatprep.subr.mxu0 0.0
    %3070 = vmatpush1.msra.mxu0 0.0
    %3071 = vmatprep.subr.mxu0 0.0
    %3072 = vmatpush1.msra.mxu0 0.0
    %3073 = vmatprep.subr.mxu0 0.0
    %3074 = vmatpush1.msra.mxu0 0.0
    %3075 = vmatprep.subr.mxu0 0.0
    %3076 = vmatpush1.msra.mxu0 0.0
    %3077 = vmatprep.subr.mxu0 0.0
    %3078 = vmatpush1.msra.mxu0 0.0
    %3079 = vmatprep.subr.mxu0 0.0
    %3080 = vmatpush1.msra.mxu0 0.0
    %3081 = vmatprep.subr.mxu0 0.0
    %3082 = vmatpush1.msra.mxu0 0.0
    %3083 = vmatprep.subr.mxu0 0.0
    %3084 = vmatpush1.msra.mxu0 0.0
    %3085 = vmatprep.subr.mxu0 0.0
    %3086 = vmatpush1.msra.mxu0 0.0
    %3087 = vmatprep.subr.mxu0 0.0
    %3088 = vmatpush1.msra.mxu0 0.0
    %3089 = vmatprep.subr.mxu0 0.0
    %3090 = vmatpush1.msra.mxu0 0.0
    %3091 = vmatprep.subr.mxu0 0.0
    %3092 = vmatpush1.msra.mxu0 0.0
    %3093 = vmatprep.subr.mxu0 0.0
    %3094 = vmatpush1.msra.mxu0 0.0
    %3095 = vmatprep.subr.mxu0 0.0
    %3096 = vmatpush1.msra.mxu0 0.0
    %3097 = vmatprep.mubr.f32.mxu0 0.0
    %3098 = vmatmul.mubr.f32.gmra.mrb[0].mxu0 %v2890
    %v3099 = vpop.f32.mrb[0].mxu0
    %v3100 = vadd.f32 0.0, %v3099
    %v3101 = vpop.f32.mrb[0].mxu0
    %v3102 = vadd.f32 0.0, %v3101
    %3103 = vdwg.mxu0
    %3104 = vmatprep.subr.mxu0 %v558
    %3105 = vmatpush1.msra.mxu0 %v557
    %3106 = vmatprep.subr.mxu0 %v566
    %3107 = vmatpush1.msra.mxu0 %v565
    %3108 = vmatprep.subr.mxu0 %v574
    %3109 = vmatpush1.msra.mxu0 %v573
    %3110 = vmatprep.subr.mxu0 %v582
    %3111 = vmatpush1.msra.mxu0 %v581
    %3112 = vmatprep.subr.mxu0 %v590
    %3113 = vmatpush1.msra.mxu0 %v589
    %3114 = vmatprep.subr.mxu0 %v598
    %3115 = vmatpush1.msra.mxu0 %v597
    %3116 = vmatprep.subr.mxu0 %v606
    %3117 = vmatpush1.msra.mxu0 %v605
    %3118 = vmatprep.subr.mxu0 %v614
    %3119 = vmatpush1.msra.mxu0 %v613
    %3120 = vmatprep.subr.mxu0 %v622
    %3121 = vmatpush1.msra.mxu0 %v621
    %3122 = vmatprep.subr.mxu0 %v630
    %3123 = vmatpush1.msra.mxu0 %v629
    %3124 = vmatprep.subr.mxu0 %v638
    %3125 = vmatpush1.msra.mxu0 %v637
    %3126 = vmatprep.subr.mxu0 %v646
    %3127 = vmatpush1.msra.mxu0 %v645
    %3128 = vmatprep.subr.mxu0 %v654
    %3129 = vmatpush1.msra.mxu0 %v653
    %3130 = vmatprep.subr.mxu0 %v662
    %3131 = vmatpush1.msra.mxu0 %v661
    %3132 = vmatprep.subr.mxu0 %v670
    %3133 = vmatpush1.msra.mxu0 %v669
    %3134 = vmatprep.subr.mxu0 %v678
    %3135 = vmatpush1.msra.mxu0 %v677
    %3136 = vmatprep.subr.mxu0 0.0
    %3137 = vmatpush1.msra.mxu0 0.0
    %3138 = vmatprep.subr.mxu0 0.0
    %3139 = vmatpush1.msra.mxu0 0.0
    %3140 = vmatprep.subr.mxu0 0.0
    %3141 = vmatpush1.msra.mxu0 0.0
    %3142 = vmatprep.subr.mxu0 0.0
    %3143 = vmatpush1.msra.mxu0 0.0
    %3144 = vmatprep.subr.mxu0 0.0
    %3145 = vmatpush1.msra.mxu0 0.0
    %3146 = vmatprep.subr.mxu0 0.0
    %3147 = vmatpush1.msra.mxu0 0.0
    %3148 = vmatprep.subr.mxu0 0.0
    %3149 = vmatpush1.msra.mxu0 0.0
    %3150 = vmatprep.subr.mxu0 0.0
    %3151 = vmatpush1.msra.mxu0 0.0
    %3152 = vmatprep.subr.mxu0 0.0
    %3153 = vmatpush1.msra.mxu0 0.0
    %3154 = vmatprep.subr.mxu0 0.0
    %3155 = vmatpush1.msra.mxu0 0.0
    %3156 = vmatprep.subr.mxu0 0.0
    %3157 = vmatpush1.msra.mxu0 0.0
    %3158 = vmatprep.subr.mxu0 0.0
    %3159 = vmatpush1.msra.mxu0 0.0
    %3160 = vmatprep.subr.mxu0 0.0
    %3161 = vmatpush1.msra.mxu0 0.0
    %3162 = vmatprep.subr.mxu0 0.0
    %3163 = vmatpush1.msra.mxu0 0.0
    %3164 = vmatprep.subr.mxu0 0.0
    %3165 = vmatpush1.msra.mxu0 0.0
    %3166 = vmatprep.subr.mxu0 0.0
    %3167 = vmatpush1.msra.mxu0 0.0
    %3168 = vmatprep.mubr.f32.mxu0 0.0
    %3169 = vmatmul.mubr.f32.gmra.mrb[0].mxu0 %v2890
    %v3170 = vpop.f32.mrb[0].mxu0
    %v3171 = vadd.f32 0.0, %v3170
    %v3172 = vpop.f32.mrb[0].mxu0
    %v3173 = vadd.f32 0.0, %v3172
    %3174 = vdwg.mxu0
    %v3175 = vsel %vm550, %v2958, %v3100
    %v3176 = vsel %vm550, %v2960, %v3102
    %v3177 = vsel %vm550, %v3029, %v3171
    %v3178 = vsel %vm550, %v3031, %v3173
    %v3179 = vadd.f32 %v431, %v3175
    %v3180 = vadd.f32 %v433, %v3176
    %v3181 = vadd.f32 %v544, %v3177
    %v3182 = vadd.f32 %v546, %v3178
    %v3183 = vxor.u32 %v3179, 2147483648
    %v3184 = vxor.u32 %v3180, 2147483648
    %v3185 = vxor.u32 %v3181, 2147483648
    %v3186 = vmul.f32 %v3183, 1.442695
    %v3187 = vpow.pop %v3186
    %v3188 = vmul.f32 %v3184, 1.442695
    %v3189 = vpow.pop %v3188
    %v3190 = vmul.f32 %v3185, 1.442695
    %v3191 = vpow.pop %v3190
    %v3192 = vadd.f32 %v3187, 1.0
    %v3193 = vadd.f32 %v3189, 1.0
    %v3194 = vadd.f32 %v3191, 1.0
    %v3195 = vrcp.pop %v3192
    %v3196 = vmul.f32 1.0, %v3195
    %v3197 = vrcp.pop %v3193
    %v3198 = vmul.f32 1.0, %v3197
    %v3199 = vrcp.pop %v3194
    %v3200 = vmul.f32 1.0, %v3199
    %v3201 = vtanh.pop %v3182
    %v3202 = vmul.f32 %v3198, %v2888
    %v3203 = vmul.f32 %v3196, %v3201
    %v3204 = vadd.f32 %v3202, %v3203
    %v3205 = vtanh.pop %v3204
    %v3206 = vmul.f32 %v3200, %v3205
    %v3207 = vld [vmem:[#allocation8] sm:$0xff]
    %v3208 = vld [vmem:[#allocation8 + $0x8] sm:$0xff]
    %v3209 = vld [vmem:[#allocation8 + $0x10] sm:$0xff]
    %v3210 = vld [vmem:[#allocation8 + $0x18] sm:$0xff]
    %v3211 = vld [vmem:[#allocation8 + $0x20] sm:$0xff]
    %v3212 = vld [vmem:[#allocation8 + $0x28] sm:$0xff]
    %v3213 = vld [vmem:[#allocation8 + $0x30] sm:$0xff]
    %v3214 = vld [vmem:[#allocation8 + $0x38] sm:$0xff]
    %v3215 = vld [vmem:[#allocation8 + $0x40] sm:$0xff]
    %v3216 = vld [vmem:[#allocation8 + $0x48] sm:$0xff]
    %v3217 = vld [vmem:[#allocation8 + $0x50] sm:$0xff]
    %v3218 = vld [vmem:[#allocation8 + $0x58] sm:$0xff]
    %v3219 = vld [vmem:[#allocation8 + $0x60] sm:$0xff]
    %v3220 = vld [vmem:[#allocation8 + $0x68] sm:$0xff]
    %v3221 = vld [vmem:[#allocation8 + $0x70] sm:$0xff]
    %v3222 = vld [vmem:[#allocation8 + $0x78] sm:$0xff]
    %v3223 = vld [vmem:[#allocation10] sm:$0xff]
    %v3224 = vld [vmem:[#allocation10 + $0x8] sm:$0xff]
    %v3225 = vld [vmem:[#allocation10 + $0x10] sm:$0xff]
    %v3226 = vld [vmem:[#allocation10 + $0x18] sm:$0xff]
    %v3227 = vld [vmem:[#allocation10 + $0x20] sm:$0xff]
    %v3228 = vld [vmem:[#allocation10 + $0x28] sm:$0xff]
    %v3229 = vld [vmem:[#allocation10 + $0x30] sm:$0xff]
    %v3230 = vld [vmem:[#allocation10 + $0x38] sm:$0xff]
    %v3231 = vld [vmem:[#allocation10 + $0x40] sm:$0xff]
    %v3232 = vld [vmem:[#allocation10 + $0x48] sm:$0xff]
    %v3233 = vld [vmem:[#allocation10 + $0x50] sm:$0xff]
    %v3234 = vld [vmem:[#allocation10 + $0x58] sm:$0xff]
    %v3235 = vld [vmem:[#allocation10 + $0x60] sm:$0xff]
    %v3236 = vld [vmem:[#allocation10 + $0x68] sm:$0xff]
    %v3237 = vld [vmem:[#allocation10 + $0x70] sm:$0xff]
    %v3238 = vld [vmem:[#allocation10 + $0x78] sm:$0xff]
    %3239 = vmatprep.subr.mxu0 0.0
    %3240 = vmatpush1.msra.mxu0 %v3223
    %3241 = vmatprep.subr.mxu0 0.0
    %3242 = vmatpush1.msra.mxu0 %v3224
    %3243 = vmatprep.subr.mxu0 0.0
    %3244 = vmatpush1.msra.mxu0 %v3225
    %3245 = vmatprep.subr.mxu0 0.0
    %3246 = vmatpush1.msra.mxu0 %v3226
    %3247 = vmatprep.subr.mxu0 0.0
    %3248 = vmatpush1.msra.mxu0 %v3227
    %3249 = vmatprep.subr.mxu0 0.0
    %3250 = vmatpush1.msra.mxu0 %v3228
    %3251 = vmatprep.subr.mxu0 0.0
    %3252 = vmatpush1.msra.mxu0 %v3229
    %3253 = vmatprep.subr.mxu0 0.0
    %3254 = vmatpush1.msra.mxu0 %v3230
    %3255 = vmatprep.subr.mxu0 0.0
    %3256 = vmatpush1.msra.mxu0 %v3231
    %3257 = vmatprep.subr.mxu0 0.0
    %3258 = vmatpush1.msra.mxu0 %v3232
    %3259 = vmatprep.subr.mxu0 0.0
    %3260 = vmatpush1.msra.mxu0 %v3233
    %3261 = vmatprep.subr.mxu0 0.0
    %3262 = vmatpush1.msra.mxu0 %v3234
    %3263 = vmatprep.subr.mxu0 0.0
    %3264 = vmatpush1.msra.mxu0 %v3235
    %3265 = vmatprep.subr.mxu0 0.0
    %3266 = vmatpush1.msra.mxu0 %v3236
    %3267 = vmatprep.subr.mxu0 0.0
    %3268 = vmatpush1.msra.mxu0 %v3237
    %3269 = vmatprep.subr.mxu0 0.0
    %3270 = vmatpush1.msra.mxu0 %v3238
    %3271 = vmatprep.subr.mxu0 0.0
    %3272 = vmatpush1.msra.mxu0 0.0
    %3273 = vmatprep.subr.mxu0 0.0
    %3274 = vmatpush1.msra.mxu0 0.0
    %3275 = vmatprep.subr.mxu0 0.0
    %3276 = vmatpush1.msra.mxu0 0.0
    %3277 = vmatprep.subr.mxu0 0.0
    %3278 = vmatpush1.msra.mxu0 0.0
    %3279 = vmatprep.subr.mxu0 0.0
    %3280 = vmatpush1.msra.mxu0 0.0
    %3281 = vmatprep.subr.mxu0 0.0
    %3282 = vmatpush1.msra.mxu0 0.0
    %3283 = vmatprep.subr.mxu0 0.0
    %3284 = vmatpush1.msra.mxu0 0.0
    %3285 = vmatprep.subr.mxu0 0.0
    %3286 = vmatpush1.msra.mxu0 0.0
    %3287 = vmatprep.subr.mxu0 0.0
    %3288 = vmatpush1.msra.mxu0 0.0
    %3289 = vmatprep.subr.mxu0 0.0
    %3290 = vmatpush1.msra.mxu0 0.0
    %3291 = vmatprep.subr.mxu0 0.0
    %3292 = vmatpush1.msra.mxu0 0.0
    %3293 = vmatprep.subr.mxu0 0.0
    %3294 = vmatpush1.msra.mxu0 0.0
    %3295 = vmatprep.subr.mxu0 0.0
    %3296 = vmatpush1.msra.mxu0 0.0
    %3297 = vmatprep.subr.mxu0 0.0
    %3298 = vmatpush1.msra.mxu0 0.0
    %3299 = vmatprep.subr.mxu0 0.0
    %3300 = vmatpush1.msra.mxu0 0.0
    %3301 = vmatprep.subr.mxu0 0.0
    %3302 = vmatpush1.msra.mxu0 0.0
    %3303 = vmatprep.mubr.f32.mxu0 0.0
    %3304 = vmatmul.mubr.f32.gmra.mrb[0].mxu0 %v3206
    %v3305 = vpop.f32.mrb[0].mxu0
    %v3306 = vadd.f32 0.0, %v3305
    %v3307 = vpop.f32.mrb[0].mxu0
    %3308 = vdwg.mxu0
    %3309 = vmatprep.subr.mxu0 0.0
    %3310 = vmatpush1.msra.mxu0 %v3207
    %3311 = vmatprep.subr.mxu0 0.0
    %3312 = vmatpush1.msra.mxu0 %v3208
    %3313 = vmatprep.subr.mxu0 0.0
    %3314 = vmatpush1.msra.mxu0 %v3209
    %3315 = vmatprep.subr.mxu0 0.0
    %3316 = vmatpush1.msra.mxu0 %v3210
    %3317 = vmatprep.subr.mxu0 0.0
    %3318 = vmatpush1.msra.mxu0 %v3211
    %3319 = vmatprep.subr.mxu0 0.0
    %3320 = vmatpush1.msra.mxu0 %v3212
    %3321 = vmatprep.subr.mxu0 0.0
    %3322 = vmatpush1.msra.mxu0 %v3213
    %3323 = vmatprep.subr.mxu0 0.0
    %3324 = vmatpush1.msra.mxu0 %v3214
    %3325 = vmatprep.subr.mxu0 0.0
    %3326 = vmatpush1.msra.mxu0 %v3215
    %3327 = vmatprep.subr.mxu0 0.0
    %3328 = vmatpush1.msra.mxu0 %v3216
    %3329 = vmatprep.subr.mxu0 0.0
    %3330 = vmatpush1.msra.mxu0 %v3217
    %3331 = vmatprep.subr.mxu0 0.0
    %3332 = vmatpush1.msra.mxu0 %v3218
    %3333 = vmatprep.subr.mxu0 0.0
    %3334 = vmatpush1.msra.mxu0 %v3219
    %3335 = vmatprep.subr.mxu0 0.0
    %3336 = vmatpush1.msra.mxu0 %v3220
    %3337 = vmatprep.subr.mxu0 0.0
    %3338 = vmatpush1.msra.mxu0 %v3221
    %3339 = vmatprep.subr.mxu0 0.0
    %3340 = vmatpush1.msra.mxu0 %v3222
    %3341 = vmatprep.subr.mxu0 0.0
    %3342 = vmatpush1.msra.mxu0 0.0
    %3343 = vmatprep.subr.mxu0 0.0
    %3344 = vmatpush1.msra.mxu0 0.0
    %3345 = vmatprep.subr.mxu0 0.0
    %3346 = vmatpush1.msra.mxu0 0.0
    %3347 = vmatprep.subr.mxu0 0.0
    %3348 = vmatpush1.msra.mxu0 0.0
    %3349 = vmatprep.subr.mxu0 0.0
    %3350 = vmatpush1.msra.mxu0 0.0
    %3351 = vmatprep.subr.mxu0 0.0
    %3352 = vmatpush1.msra.mxu0 0.0
    %3353 = vmatprep.subr.mxu0 0.0
    %3354 = vmatpush1.msra.mxu0 0.0
    %3355 = vmatprep.subr.mxu0 0.0
    %3356 = vmatpush1.msra.mxu0 0.0
    %3357 = vmatprep.subr.mxu0 0.0
    %3358 = vmatpush1.msra.mxu0 0.0
    %3359 = vmatprep.subr.mxu0 0.0
    %3360 = vmatpush1.msra.mxu0 0.0
    %3361 = vmatprep.subr.mxu0 0.0
    %3362 = vmatpush1.msra.mxu0 0.0
    %3363 = vmatprep.subr.mxu0 0.0
    %3364 = vmatpush1.msra.mxu0 0.0
    %3365 = vmatprep.subr.mxu0 0.0
    %3366 = vmatpush1.msra.mxu0 0.0
    %3367 = vmatprep.subr.mxu0 0.0
    %3368 = vmatpush1.msra.mxu0 0.0
    %3369 = vmatprep.subr.mxu0 0.0
    %3370 = vmatpush1.msra.mxu0 0.0
    %3371 = vmatprep.subr.mxu0 0.0
    %3372 = vmatpush1.msra.mxu0 0.0
    %3373 = vmatprep.mubr.f32.mxu0 0.0
    %3374 = vmatmul.mubr.f32.gmra.mrb[0].mxu0 %v217
    %v3375 = vpop.f32.mrb[0].mxu0
    %v3376 = vadd.f32 %v3306, %v3375
    %v3377 = vpop.f32.mrb[0].mxu0
    %3378 = vdwg.mxu0
    %v3379 = vld [vmem:[#allocation11] sm:$0xff]
    %v3380 = vld [vmem:[#allocation11 + $0x8] sm:$0xff]
    %v3381 = vld [vmem:[#allocation11 + $0x10] sm:$0xff]
    %v3382 = vld [vmem:[#allocation11 + $0x18] sm:$0xff]
    %v3383 = vld [vmem:[#allocation11 + $0x20] sm:$0xff]
    %v3384 = vld [vmem:[#allocation11 + $0x28] sm:$0xff]
    %v3385 = vld [vmem:[#allocation11 + $0x30] sm:$0xff]
    %v3386 = vld [vmem:[#allocation11 + $0x38] sm:$0xff]
    %v3387 = vld [vmem:[#allocation11 + $0x40] sm:$0xff]
    %v3388 = vld [vmem:[#allocation11 + $0x48] sm:$0xff]
    %v3389 = vld [vmem:[#allocation11 + $0x50] sm:$0xff]
    %v3390 = vld [vmem:[#allocation11 + $0x58] sm:$0xff]
    %v3391 = vld [vmem:[#allocation11 + $0x60] sm:$0xff]
    %v3392 = vld [vmem:[#allocation11 + $0x68] sm:$0xff]
    %v3393 = vld [vmem:[#allocation11 + $0x70] sm:$0xff]
    %v3394 = vld [vmem:[#allocation11 + $0x78] sm:$0xff]
    %v3396 = vrot.slane %v3206, 2
    %3398 = vmatprep.subr.mxu0 0.0
    %3399 = vmatpush1.msra.mxu0 %v3379
    %3400 = vmatprep.subr.mxu0 0.0
    %3401 = vmatpush1.msra.mxu0 %v3380
    %3402 = vmatprep.subr.mxu0 0.0
    %3403 = vmatpush1.msra.mxu0 %v3381
    %3404 = vmatprep.subr.mxu0 0.0
    %3405 = vmatpush1.msra.mxu0 %v3382
    %3406 = vmatprep.subr.mxu0 0.0
    %3407 = vmatpush1.msra.mxu0 %v3383
    %3408 = vmatprep.subr.mxu0 0.0
    %3409 = vmatpush1.msra.mxu0 %v3384
    %3410 = vmatprep.subr.mxu0 0.0
    %3411 = vmatpush1.msra.mxu0 %v3385
    %3412 = vmatprep.subr.mxu0 0.0
    %3413 = vmatpush1.msra.mxu0 %v3386
    %3414 = vmatprep.subr.mxu0 0.0
    %3415 = vmatpush1.msra.mxu0 %v3387
    %3416 = vmatprep.subr.mxu0 0.0
    %3417 = vmatpush1.msra.mxu0 %v3388
    %3418 = vmatprep.subr.mxu0 0.0
    %3419 = vmatpush1.msra.mxu0 %v3389
    %3420 = vmatprep.subr.mxu0 0.0
    %3421 = vmatpush1.msra.mxu0 %v3390
    %3422 = vmatprep.subr.mxu0 0.0
    %3423 = vmatpush1.msra.mxu0 %v3391
    %3424 = vmatprep.subr.mxu0 0.0
    %3425 = vmatpush1.msra.mxu0 %v3392
    %3426 = vmatprep.subr.mxu0 0.0
    %3427 = vmatpush1.msra.mxu0 %v3393
    %3428 = vmatprep.subr.mxu0 0.0
    %3429 = vmatpush1.msra.mxu0 %v3394
    %3430 = vmatprep.subr.mxu0 0.0
    %3431 = vmatpush1.msra.mxu0 0.0
    %3432 = vmatprep.subr.mxu0 0.0
    %3433 = vmatpush1.msra.mxu0 0.0
    %3434 = vmatprep.subr.mxu0 0.0
    %3435 = vmatpush1.msra.mxu0 0.0
    %3436 = vmatprep.subr.mxu0 0.0
    %3437 = vmatpush1.msra.mxu0 0.0
    %3438 = vmatprep.subr.mxu0 0.0
    %3439 = vmatpush1.msra.mxu0 0.0
    %3440 = vmatprep.subr.mxu0 0.0
    %3441 = vmatpush1.msra.mxu0 0.0
    %3442 = vmatprep.subr.mxu0 0.0
    %3443 = vmatpush1.msra.mxu0 0.0
    %3444 = vmatprep.subr.mxu0 0.0
    %3445 = vmatpush1.msra.mxu0 0.0
    %3446 = vmatprep.subr.mxu0 0.0
    %3447 = vmatpush1.msra.mxu0 0.0
    %3448 = vmatprep.subr.mxu0 0.0
    %3449 = vmatpush1.msra.mxu0 0.0
    %3450 = vmatprep.subr.mxu0 0.0
    %3451 = vmatpush1.msra.mxu0 0.0
    %3452 = vmatprep.subr.mxu0 0.0
    %3453 = vmatpush1.msra.mxu0 0.0
    %3454 = vmatprep.subr.mxu0 0.0
    %3455 = vmatpush1.msra.mxu0 0.0
    %3456 = vmatprep.subr.mxu0 0.0
    %3457 = vmatpush1.msra.mxu0 0.0
    %3458 = vmatprep.subr.mxu0 0.0
    %3459 = vmatpush1.msra.mxu0 0.0
    %3460 = vmatprep.subr.mxu0 0.0
    %3461 = vmatpush1.msra.mxu0 0.0
    %3462 = vmatprep.mubr.f32.mxu0 0.0
    %3463 = vmatmul.mubr.f32.gmra.mrb[0].mxu0 %v3396
    %v3464 = vpop.f32.mrb[0].mxu0
    %v3465 = vadd.f32 0.0, %v3464
    %v3466 = vpop.f32.mrb[0].mxu0
    %3467 = vdwg.mxu0
    %v3468 = vadd.f32 %v3376, %v3465
    %v3469 = vld [vmem:[%s9] sm:$0x1]
    %v3471 = vlaneseq
    %v3472 = vshrl.u32 %v3471, 7
    %v3473 = vsub.s32 0, %v3472
    %v3474 = vrot.slane %v3469, %v3473
    %v3476 = vadd.f32 %v3468, %v3474
    %v3477 = vmax.f32 %v3476, 0.0
    %v3478 = vld [vmem:[#allocation13] sm:$0xff]
    %v3479 = vld [vmem:[#allocation13 + $0x8] sm:$0xff]
    %v3480 = vld [vmem:[#allocation13 + $0x10] sm:$0xff]
    %v3481 = vld [vmem:[#allocation13 + $0x18] sm:$0xff]
    %v3482 = vld [vmem:[#allocation13 + $0x20] sm:$0xff]
    %v3483 = vld [vmem:[#allocation13 + $0x28] sm:$0xff]
    %v3484 = vld [vmem:[#allocation13 + $0x30] sm:$0xff]
    %v3485 = vld [vmem:[#allocation13 + $0x38] sm:$0xff]
    %v3486 = vld [vmem:[#allocation13 + $0x40] sm:$0xff]
    %v3487 = vld [vmem:[#allocation13 + $0x48] sm:$0xff]
    %v3488 = vld [vmem:[#allocation13 + $0x50] sm:$0xff]
    %v3489 = vld [vmem:[#allocation13 + $0x58] sm:$0xff]
    %v3490 = vld [vmem:[#allocation13 + $0x60] sm:$0xff]
    %v3491 = vld [vmem:[#allocation13 + $0x68] sm:$0xff]
    %v3492 = vld [vmem:[#allocation13 + $0x70] sm:$0xff]
    %v3493 = vld [vmem:[#allocation13 + $0x78] sm:$0xff]
    %v3494 = vld [vmem:[%s11] sm:$0x1]
    %v3496 = vlaneseq
    %v3497 = vshrl.u32 %v3496, 7
    %v3498 = vsub.s32 0, %v3497
    %v3499 = vrot.slane %v3494, %v3498
    %3501 = vmatprep.subr.mxu0 0.0
    %3502 = vmatpush1.msra.mxu0 %v3478
    %3503 = vmatprep.subr.mxu0 0.0
    %3504 = vmatpush1.msra.mxu0 %v3479
    %3505 = vmatprep.subr.mxu0 0.0
    %3506 = vmatpush1.msra.mxu0 %v3480
    %3507 = vmatprep.subr.mxu0 0.0
    %3508 = vmatpush1.msra.mxu0 %v3481
    %3509 = vmatprep.subr.mxu0 0.0
    %3510 = vmatpush1.msra.mxu0 %v3482
    %3511 = vmatprep.subr.mxu0 0.0
    %3512 = vmatpush1.msra.mxu0 %v3483
    %3513 = vmatprep.subr.mxu0 0.0
    %3514 = vmatpush1.msra.mxu0 %v3484
    %3515 = vmatprep.subr.mxu0 0.0
    %3516 = vmatpush1.msra.mxu0 %v3485
    %3517 = vmatprep.subr.mxu0 0.0
    %3518 = vmatpush1.msra.mxu0 %v3486
    %3519 = vmatprep.subr.mxu0 0.0
    %3520 = vmatpush1.msra.mxu0 %v3487
    %3521 = vmatprep.subr.mxu0 0.0
    %3522 = vmatpush1.msra.mxu0 %v3488
    %3523 = vmatprep.subr.mxu0 0.0
    %3524 = vmatpush1.msra.mxu0 %v3489
    %3525 = vmatprep.subr.mxu0 0.0
    %3526 = vmatpush1.msra.mxu0 %v3490
    %3527 = vmatprep.subr.mxu0 0.0
    %3528 = vmatpush1.msra.mxu0 %v3491
    %3529 = vmatprep.subr.mxu0 0.0
    %3530 = vmatpush1.msra.mxu0 %v3492
    %3531 = vmatprep.subr.mxu0 0.0
    %3532 = vmatpush1.msra.mxu0 %v3493
    %3533 = vmatprep.subr.mxu0 0.0
    %3534 = vmatpush1.msra.mxu0 0.0
    %3535 = vmatprep.subr.mxu0 0.0
    %3536 = vmatpush1.msra.mxu0 0.0
    %3537 = vmatprep.subr.mxu0 0.0
    %3538 = vmatpush1.msra.mxu0 0.0
    %3539 = vmatprep.subr.mxu0 0.0
    %3540 = vmatpush1.msra.mxu0 0.0
    %3541 = vmatprep.subr.mxu0 0.0
    %3542 = vmatpush1.msra.mxu0 0.0
    %3543 = vmatprep.subr.mxu0 0.0
    %3544 = vmatpush1.msra.mxu0 0.0
    %3545 = vmatprep.subr.mxu0 0.0
    %3546 = vmatpush1.msra.mxu0 0.0
    %3547 = vmatprep.subr.mxu0 0.0
    %3548 = vmatpush1.msra.mxu0 0.0
    %3549 = vmatprep.subr.mxu0 0.0
    %3550 = vmatpush1.msra.mxu0 0.0
    %3551 = vmatprep.subr.mxu0 0.0
    %3552 = vmatpush1.msra.mxu0 0.0
    %3553 = vmatprep.subr.mxu0 0.0
    %3554 = vmatpush1.msra.mxu0 0.0
    %3555 = vmatprep.subr.mxu0 0.0
    %3556 = vmatpush1.msra.mxu0 0.0
    %3557 = vmatprep.subr.mxu0 0.0
    %3558 = vmatpush1.msra.mxu0 0.0
    %3559 = vmatprep.subr.mxu0 0.0
    %3560 = vmatpush1.msra.mxu0 0.0
    %3561 = vmatprep.subr.mxu0 0.0
    %3562 = vmatpush1.msra.mxu0 0.0
    %3563 = vmatprep.subr.mxu0 0.0
    %3564 = vmatpush1.msra.mxu0 0.0
    %3565 = vmatprep.mubr.f32.mxu0 0.0
    %3566 = vmatmul.mubr.f32.gmra.mrb[0].mxu0 %v3477
    %v3567 = vpop.f32.mrb[0].mxu0
    %v3568 = vadd.f32 %v3499, %v3567
    %v3569 = vpop.f32.mrb[0].mxu0
    %3570 = vdwg.mxu0
    %3571 = vst [vmem:[#allocation14] sm:$0x3] %v3568
    // Predicated region
    $region78: #{tpu_custom_call.1} parent=1 // pred_check
      _
    $region79: #{tpu_custom_call.1} parent=1 // pred_check_branch
      %3573 = sbr.rel (0) target = $region81
    $region80: #{tpu_custom_call.1} parent=1 // pred_region
      %s3575 = ssub.s32 32, 32
      %3576 = vsyncadd [#allocation4], %s3575
      %s3578 = sshll.u32 [#allocation14], 4
      %s3579 = int_to_ptr.vmem [resolvable:$true] %s3578
      %3581 = dma.vmem_to_hbm [thread:$0]  %s3579, 32, %s12, [#allocation4]
    $region81: #{tpu_custom_call.1} parent=1 // pred_fallthru
      _
    // Predicated region
    $region82: #{tpu_custom_call.1} parent=1 // pred_check
      _
    $region83: #{tpu_custom_call.1} parent=1 // pred_check_branch
      %3583 = sbr.rel (0) target = $region85
    $region84: #{tpu_custom_call.1} parent=1 // pred_region
      %3584 = dma.done [#allocation4], 32
    $region85: #{tpu_custom_call.1} parent=1 // pred_fallthru
      _
    %3585 = vsyncpa [#allocation3], 1
    %3586 = vsyncpa [#allocation6], 1
    %3587 = vsyncpa [#allocation9], 1
    %3588 = vsyncpa [#allocation12], 1
    %3589 = vsyncpa [#allocation4], 1

</llo_original>
